<compile_context>
chip_gen: v7x
topology: tpu7x:2x2x1
jax: 0.10.0
libtpu: 0.0.40
codegen_flags: <defaults>
</compile_context>

<pallas_src>
import functools

import jax
import jax.numpy as jnp
import numpy as np
from jax import lax
from jax.experimental import pallas as pl
from jax.experimental.pallas import tpu as pltpu


def _round_up(a, b):
    return ((a + b - 1) // b) * b


def _cdiv(a, b):
    return (a + b - 1) // b


# Estimated resident footprint above which we fall back to the tiled path.
# Kept well below the *default* scoped-VMEM limit of every generation
# (16 MiB on v5e, 32 MiB on v6e/v7x) so the fused path never needs a raised
# vmem_limit_bytes.
_FUSED_VMEM_BUDGET = 8 * 1024 * 1024


# ===========================================================================
# Fused single-launch path: everything resident in VMEM.
# ===========================================================================
def _make_fused_kernel(cmid, halo, lw, wp, dil, inv_m, eps):
    # flat-axis offsets of the 9 dilated 3x3 taps (trace-time Python ints)
    taps = [((kh - 1) * wp + (kw - 1)) * dil
            for kh in range(3) for kw in range(3)]

    def kernel(xh_ref, mh_ref, w1_ref, w2_ref, w3_ref,
               g1_ref, b1_ref, g2_ref, b2_ref, g3_ref, b3_ref, out_ref):
        xh = xh_ref[...]                        # (Cin, Ltot) halo-padded flat x
        mh = mh_ref[...]                        # (1, Ltot)   1.0 on real pixels
        m = mh[:, halo:halo + lw]               # (1, Lw)

        def bn_scale_shift(y, msk, g_ref, b_ref):
            s = jnp.sum(y * msk, axis=1, keepdims=True)          # (C, 1)
            q = jnp.sum(y * y * msk, axis=1, keepdims=True)      # (C, 1)
            mean = s * inv_m
            var = jnp.maximum(q * inv_m - mean * mean, 0.0)
            scale = g_ref[...] * lax.rsqrt(var + eps)
            shift = b_ref[...] - mean * scale
            return scale, shift

        # ---- layer1: 1x1 conv + BN1 + ReLU over the halo-extended flat grid -
        y1 = jnp.dot(w1_ref[...], xh, preferred_element_type=jnp.float32)
        sc1, sh1 = bn_scale_shift(y1, mh, g1_ref, b1_ref)
        a1 = jnp.maximum(y1 * sc1 + sh1, 0.0) * mh   # conv padding must stay 0

        # ---- layer2: dilated 3x3 conv = 9 shifted MXU dots, + BN2 + ReLU ----
        y2 = jnp.zeros((cmid, lw), jnp.float32)
        for t in range(9):                            # unrolled at trace time
            o = halo + taps[t]
            y2 = y2 + jnp.dot(w2_ref[t], a1[:, o:o + lw],
                              preferred_element_type=jnp.float32)
        sc2, sh2 = bn_scale_shift(y2, m, g2_ref, b2_ref)
        a2 = jnp.maximum(y2 * sc2 + sh2, 0.0) * m

        # ---- layer3: 1x1 conv + BN3 + ReLU -----------------------------------
        y3 = jnp.dot(w3_ref[...], a2, preferred_element_type=jnp.float32)
        sc3, sh3 = bn_scale_shift(y3, m, g3_ref, b3_ref)
        a3 = jnp.maximum(y3 * sc3 + sh3, 0.0)

        # ---- residual + final ReLU (garbage at padded positions is cropped) -
        out_ref[...] = jnp.maximum(a3 + xh[:, halo:halo + lw], 0.0)

    return kernel


def _forward_fused(xpf, mask_flat, w1m, w2t, w3m, g1, b1, g2, b2, g3, b3,
                   *, N, Cin, Cmid, H, W, Hp, Wp, d, eps):
    Lraw = N * Hp * Wp
    Lw = _round_up(Lraw, 128)
    halo = d * (Wp + 1)                       # max |flat shift| of a 3x3 tap
    Ltot = _round_up(2 * halo + Lw, 128)
    inv_m = 1.0 / float(N * H * W)            # BN divisor: real pixels only

    xh = jnp.pad(xpf, ((0, 0), (halo, Ltot - halo - Lraw)))        # (Cin, Ltot)
    mh = jnp.pad(mask_flat, ((0, 0), (halo, Ltot - halo - Lraw)))  # (1,  Ltot)

    kern = _make_fused_kernel(Cmid, halo, Lw, Wp, d, inv_m, eps)
    out_flat = pl.pallas_call(
        kern,
        out_shape=jax.ShapeDtypeStruct((Cin, Lw), jnp.float32),
    )(xh, mh, w1m, w2t, w3m,
      g1.reshape(Cmid, 1).astype(jnp.float32),
      b1.reshape(Cmid, 1).astype(jnp.float32),
      g2.reshape(Cmid, 1).astype(jnp.float32),
      b2.reshape(Cmid, 1).astype(jnp.float32),
      g3.reshape(Cin, 1).astype(jnp.float32),
      b3.reshape(Cin, 1).astype(jnp.float32))

    out = out_flat[:, :Lraw].reshape(Cin, N, Hp, Wp)[:, :, d:d + H, d:d + W]
    return jnp.transpose(out, (1, 0, 2, 3))                        # back to NCHW


# ===========================================================================
# Tiled 3-kernel fallback path (large L).
# ===========================================================================
def _conv1x1_stats_kernel(x_ref, w_ref, y_ref, sum_ref, ssq_ref):
    @pl.when(pl.program_id(1) == 0)
    def _():
        sum_ref[...] = jnp.zeros_like(sum_ref)
        ssq_ref[...] = jnp.zeros_like(ssq_ref)

    y = jnp.dot(w_ref[...], x_ref[...], preferred_element_type=jnp.float32)
    y_ref[...] = y
    # Padded / out-of-image positions of x are exactly zero (no conv bias), so
    # they contribute nothing to the BN sums.
    sum_ref[...] += jnp.sum(y, axis=1, keepdims=True)[None]
    ssq_ref[...] += jnp.sum(y * y, axis=1, keepdims=True)[None]


def _bnrelu_conv1x1_stats_kernel(y2_ref, w_ref, sc_ref, sh_ref, m_ref,
                                 y3_ref, sum_ref, ssq_ref):
    @pl.when(pl.program_id(1) == 0)
    def _():
        sum_ref[...] = jnp.zeros_like(sum_ref)
        ssq_ref[...] = jnp.zeros_like(ssq_ref)

    a2 = jnp.maximum(y2_ref[...] * sc_ref[...] + sh_ref[...], 0.0)
    y3 = jnp.dot(w_ref[...], a2, preferred_element_type=jnp.float32)
    y3_ref[...] = y3
    m = m_ref[...]                       # 1 on real (interior) pixels, else 0
    sum_ref[...] += jnp.sum(y3 * m, axis=1, keepdims=True)[None]
    ssq_ref[...] += jnp.sum(y3 * y3 * m, axis=1, keepdims=True)[None]


def _make_conv3x3_kernel(tm, win, off_max, wp, dil, n_inner, cmid):
    tap_off = [off_max + ((kh - 1) * wp + (kw - 1)) * dil
               for kh in range(3) for kw in range(3)]

    def kernel(a1_hbm, w2_ref, m_ref, y2_ref, sum_ref, ssq_ref, a_buf, sem):
        i = pl.program_id(1)
        g = pl.program_id(0) * n_inner + i          # global tile index

        def dma(gi):                                # one descriptor per (g,slot)
            slot = gi % 2
            start = pl.multiple_of(gi * tm, 128)
            return pltpu.make_async_copy(
                a1_hbm.at[:, pl.ds(start, win)], a_buf.at[slot], sem.at[slot])

        @pl.when(i == 0)
        def _():
            dma(g).start()                          # prologue fetch
            sum_ref[...] = jnp.zeros_like(sum_ref)
            ssq_ref[...] = jnp.zeros_like(ssq_ref)

        @pl.when(i + 1 < n_inner)
        def _():
            dma(g + 1).start()                      # prefetch next window

        dma(g).wait()
        window = a_buf[g % 2]                       # (Cmid, win)
        acc = jnp.zeros((cmid, tm), jnp.float32)
        for t in range(9):                          # unrolled at trace time
            o = tap_off[t]
            acc = acc + jnp.dot(w2_ref[t], window[:, o:o + tm],
                                preferred_element_type=jnp.float32)
        y2_ref[...] = acc

        m = m_ref[...]
        sum_ref[...] += jnp.sum(acc * m, axis=1, keepdims=True)[None]
        ssq_ref[...] += jnp.sum(acc * acc * m, axis=1, keepdims=True)[None]

    return kernel


def _bn_scale_shift(sum_part, ssq_part, gamma, beta, count, eps):
    s = jnp.sum(sum_part, axis=0)                  # (C, 1) reduce split partials
    q = jnp.sum(ssq_part, axis=0)                  # (C, 1)
    mean = s / count
    var = jnp.maximum(q / count - mean * mean, 0.0)
    rstd = lax.rsqrt(var + eps)
    scale = gamma.reshape(-1, 1) * rstd
    shift = beta.reshape(-1, 1) - mean * scale
    return scale, shift


def _forward_tiled(xc, xpf, mask_flat, w1m, w2t, w3m, g1, b1, g2, b2, g3, b3,
                   *, N, Cin, Cmid, H, W, Hp, Wp, d, eps, tm, n_split):
    assert tm % 128 == 0
    Lraw = N * Hp * Wp
    Mreal = float(N * H * W)

    n_tiles = _cdiv(Lraw, tm)
    # Leading "parallel" axis (v7x megacore).  Cap P so each split keeps
    # n_inner >= 2, otherwise the conv-2 double-buffer prefetch never fires.
    P = max(1, min(n_split, max(1, n_tiles // 2)))
    n_inner = _cdiv(n_tiles, P)
    L = P * n_inner * tm

    off_max = d * (Wp + 1)                 # max |flat shift| of a 3x3 tap
    EXT = _round_up(2 * off_max, 128)      # lane-aligned window extension
    WIN = tm + EXT

    xp = jnp.pad(xpf, ((0, 0), (0, L - Lraw)))                 # (Cin, L)
    mask = jnp.pad(mask_flat, ((0, 0), (0, L - Lraw)))         # (1,  L)

    grid = (P, n_inner)
    tile_map = lambda p, i: (0, p * n_inner + i)
    stat_map = lambda p, i: (p, 0, 0)
    cparams = pltpu.CompilerParams(
        dimension_semantics=("parallel", "arbitrary"))

    # ---- kernel 1: layer1 1x1 conv + BN1 partial stats -----------------------
    y1, s1, q1 = pl.pallas_call(
        _conv1x1_stats_kernel,
        grid=grid,
        in_specs=[pl.BlockSpec((Cin, tm), tile_map),
                  pl.BlockSpec((Cmid, Cin), lambda p, i: (0, 0))],
        out_specs=[pl.BlockSpec((Cmid, tm), tile_map),
                   pl.BlockSpec((1, Cmid, 1), stat_map),
                   pl.BlockSpec((1, Cmid, 1), stat_map)],
        out_shape=[jax.ShapeDtypeStruct((Cmid, L), jnp.float32),
                   jax.ShapeDtypeStruct((P, Cmid, 1), jnp.float32),
                   jax.ShapeDtypeStruct((P, Cmid, 1), jnp.float32)],
        compiler_params=cparams,
    )(xp, w1m)

    # ---- XLA glue: BN1 + ReLU, re-zero conv padding, add DMA halo ------------
    scale1, shift1 = _bn_scale_shift(s1, q1, g1, b1, Mreal, eps)
    a1 = jnp.maximum(y1 * scale1 + shift1, 0.0) * mask
    a1 = jnp.pad(a1, ((0, 0), (off_max, EXT - off_max)))       # (Cmid, L + EXT)

    # ---- kernel 2: dilated 3x3 conv + BN2 partial stats ----------------------
    conv3x3_kernel = _make_conv3x3_kernel(tm, WIN, off_max, Wp, d,
                                          n_inner, Cmid)
    y2, s2, q2 = pl.pallas_call(
        conv3x3_kernel,
        grid=grid,
        in_specs=[pl.BlockSpec(memory_space=pl.ANY),   # stays in HBM; manual DMA
                  pl.BlockSpec((9, Cmid, Cmid), lambda p, i: (0, 0, 0)),
                  pl.BlockSpec((1, tm), tile_map)],
        out_specs=[pl.BlockSpec((Cmid, tm), tile_map),
                   pl.BlockSpec((1, Cmid, 1), stat_map),
                   pl.BlockSpec((1, Cmid, 1), stat_map)],
        out_shape=[jax.ShapeDtypeStruct((Cmid, L), jnp.float32),
                   jax.ShapeDtypeStruct((P, Cmid, 1), jnp.float32),
                   jax.ShapeDtypeStruct((P, Cmid, 1), jnp.float32)],
        scratch_shapes=[pltpu.VMEM((2, Cmid, WIN), jnp.float32),
                        pltpu.SemaphoreType.DMA((2,))],
        compiler_params=cparams,
    )(a1, w2t, mask)

    # ---- kernel 3: fused BN2+ReLU -> layer3 1x1 conv + BN3 partial stats -----
    scale2, shift2 = _bn_scale_shift(s2, q2, g2, b2, Mreal, eps)
    y3, s3, q3 = pl.pallas_call(
        _bnrelu_conv1x1_stats_kernel,
        grid=grid,
        in_specs=[pl.BlockSpec((Cmid, tm), tile_map),
                  pl.BlockSpec((Cin, Cmid), lambda p, i: (0, 0)),
                  pl.BlockSpec((Cmid, 1), lambda p, i: (0, 0)),
                  pl.BlockSpec((Cmid, 1), lambda p, i: (0, 0)),
                  pl.BlockSpec((1, tm), tile_map)],
        out_specs=[pl.BlockSpec((Cin, tm), tile_map),
                   pl.BlockSpec((1, Cin, 1), stat_map),
                   pl.BlockSpec((1, Cin, 1), stat_map)],
        out_shape=[jax.ShapeDtypeStruct((Cin, L), jnp.float32),
                   jax.ShapeDtypeStruct((P, Cin, 1), jnp.float32),
                   jax.ShapeDtypeStruct((P, Cin, 1), jnp.float32)],
        compiler_params=cparams,
    )(y2, w3m, scale2, shift2, mask)

    # ---- XLA glue: BN3 + ReLU + residual + ReLU fused with NCHW extraction ---
    scale3, shift3 = _bn_scale_shift(s3, q3, g3, b3, Mreal, eps)
    y3g = y3[:, :Lraw].reshape(Cin, N, Hp, Wp)[:, :, d:d + H, d:d + W]
    a3 = jnp.maximum(y3g * scale3.reshape(Cin, 1, 1, 1)
                     + shift3.reshape(Cin, 1, 1, 1), 0.0)      # layer3 ReLU
    out = jnp.maximum(a3 + xc, 0.0)
    return jnp.transpose(out, (1, 0, 2, 3))                    # back to NCHW


# ===========================================================================
# Public entry point.
# ===========================================================================
@functools.partial(jax.jit, static_argnames=("dilation", "eps", "tm",
                                             "n_split", "force_tiled"))
def bottleneck_forward(x, w1, g1, b1, w2, g2, b2, w3, g3, b3,
                       *, dilation=1, eps=1e-5, tm=1024, n_split=1,
                       force_tiled=False):
    """Forward of bottleNeckIdentifyPSP (training-mode BatchNorm).

    x: (N, Cin, H, W); w1: (Cmid, Cin, 1, 1); w2: (Cmid, Cmid, 3, 3);
    w3: (Cin, Cmid, 1, 1); g*/b* are the per-layer BN affine params.
    n_split: set to 2 on v7x (two TensorCores) for the tiled path; 1 otherwise.
    """
    N, Cin, H, W = x.shape
    Cmid = w1.shape[0]
    d = dilation
    Hp, Wp = H + 2 * d, W + 2 * d
    Lraw = N * Hp * Wp

    # channels-first, zero-padded, flattened layout shared by both paths
    xc = jnp.transpose(x, (1, 0, 2, 3)).astype(jnp.float32)         # (Cin,N,H,W)
    xpf = jnp.pad(xc, ((0, 0), (0, 0), (d, d), (d, d))).reshape(Cin, Lraw)
    mask_flat = jnp.pad(jnp.ones((N, H, W), jnp.float32),
                        ((0, 0), (d, d), (d, d))).reshape(1, Lraw)

    w1m = w1.reshape(Cmid, Cin).astype(jnp.float32)
    w2t = jnp.transpose(w2, (2, 3, 0, 1)).reshape(9, Cmid, Cmid).astype(jnp.float32)
    w3m = w3.reshape(Cin, Cmid).astype(jnp.float32)

    # crude resident-footprint estimate for the fused path (f32 + temporaries)
    halo = d * (Wp + 1)
    Ltot = _round_up(2 * halo + _round_up(Lraw, 128), 128)
    fused_bytes = 4 * Ltot * (3 * Cin + 5 * Cmid + 4)

    common = dict(N=N, Cin=Cin, Cmid=Cmid, H=H, W=W, Hp=Hp, Wp=Wp, d=d, eps=eps)
    if (not force_tiled) and fused_bytes <= _FUSED_VMEM_BUDGET:
        return _forward_fused(xpf, mask_flat, w1m, w2t, w3m,
                              g1, b1, g2, b2, g3, b3, **common)
    return _forward_tiled(xc, xpf, mask_flat, w1m, w2t, w3m,
                          g1, b1, g2, b2, g3, b3,
                          tm=tm, n_split=n_split, **common)


# ---------------------------------------------------------------------------
# Pure-JAX reference (conv_general_dilated + training-mode BN + ReLU).
# ---------------------------------------------------------------------------
def _conv_bn_ref(x, w, gamma, beta, *, padding, dilation, relu, eps=1e-5):
    y = lax.conv_general_dilated(
        x, w, window_strides=(1, 1),
        padding=[(padding, padding), (padding, padding)],
        rhs_dilation=(dilation, dilation),
        dimension_numbers=("NCHW", "OIHW", "NCHW"))
    mean = jnp.mean(y, axis=(0, 2, 3), keepdims=True)
    var = jnp.mean((y - mean) ** 2, axis=(0, 2, 3), keepdims=True)
    y = (y - mean) * lax.rsqrt(var + eps) * gamma.reshape(1, -1, 1, 1) \
        + beta.reshape(1, -1, 1, 1)
    return jnp.maximum(y, 0.0) if relu else y


def bottleneck_reference(x, w1, g1, b1, w2, g2, b2, w3, g3, b3,
                         *, dilation, eps=1e-5):
    a1 = _conv_bn_ref(x, w1, g1, b1, padding=0, dilation=1, relu=True, eps=eps)
    a2 = _conv_bn_ref(a1, w2, g2, b2, padding=dilation, dilation=dilation,
                      relu=True, eps=eps)
    a3 = _conv_bn_ref(a2, w3, g3, b3, padding=0, dilation=1, relu=True, eps=eps)
    return jnp.maximum(a3 + x, 0.0)


if __name__ == "__main__":
    # bottleNeckIdentifyPSP(in_c=8, mid_c=4, stride=1, dilation=2)
    N, in_c, mid_c, H, W = 2, 8, 4, 16, 16
    dilation = 2

    key = jax.random.PRNGKey(0)
    ks = jax.random.split(key, 10)
    x = jax.random.normal(ks[0], (N, in_c, H, W), dtype=jnp.float32)
    w1 = jax.random.normal(ks[1], (mid_c, in_c, 1, 1), dtype=jnp.float32) * 0.3
    w2 = jax.random.normal(ks[2], (mid_c, mid_c, 3, 3), dtype=jnp.float32) * 0.2
    w3 = jax.random.normal(ks[3], (in_c, mid_c, 1, 1), dtype=jnp.float32) * 0.3
    g1 = 1.0 + 0.1 * jax.random.normal(ks[4], (mid_c,), dtype=jnp.float32)
    b1 = 0.1 * jax.random.normal(ks[5], (mid_c,), dtype=jnp.float32)
    g2 = 1.0 + 0.1 * jax.random.normal(ks[6], (mid_c,), dtype=jnp.float32)
    b2 = 0.1 * jax.random.normal(ks[7], (mid_c,), dtype=jnp.float32)
    g3 = 1.0 + 0.1 * jax.random.normal(ks[8], (in_c,), dtype=jnp.float32)
    b3 = 0.1 * jax.random.normal(ks[9], (in_c,), dtype=jnp.float32)

    ref = bottleneck_reference(x, w1, g1, b1, w2, g2, b2, w3, g3, b3,
                               dilation=dilation)
    ref = jax.block_until_ready(ref)

    # primary: fully fused VMEM-resident single-launch kernel
    out_fused = bottleneck_forward(x, w1, g1, b1, w2, g2, b2, w3, g3, b3,
                                   dilation=dilation)
    out_fused = jax.block_until_ready(out_fused)
    np.testing.assert_allclose(np.asarray(out_fused), np.asarray(ref),
                               rtol=1e-3, atol=1e-3)

    # large-L fallback: tiled 3-kernel path (forced here to validate it too)
    out_tiled = bottleneck_forward(x, w1, g1, b1, w2, g2, b2, w3, g3, b3,
                                   dilation=dilation, force_tiled=True)
    out_tiled = jax.block_until_ready(out_tiled)
    np.testing.assert_allclose(np.asarray(out_tiled), np.asarray(ref),
                               rtol=1e-3, atol=1e-3)

    print("KERNEL_OK")
</pallas_src>

<mosaic_0001>
module attributes {stable_mosaic.version = 11 : i64} {
  func.func @kernel(%arg0: memref<8x1024xf32, #tpu.memory_space<vmem>>, %arg1: memref<1x1024xf32, #tpu.memory_space<vmem>>, %arg2: memref<4x8xf32, #tpu.memory_space<vmem>>, %arg3: memref<9x4x4xf32, #tpu.memory_space<vmem>>, %arg4: memref<8x4xf32, #tpu.memory_space<vmem>>, %arg5: memref<4x1xf32, #tpu.memory_space<vmem>>, %arg6: memref<4x1xf32, #tpu.memory_space<vmem>>, %arg7: memref<4x1xf32, #tpu.memory_space<vmem>>, %arg8: memref<4x1xf32, #tpu.memory_space<vmem>>, %arg9: memref<8x1xf32, #tpu.memory_space<vmem>>, %arg10: memref<8x1xf32, #tpu.memory_space<vmem>>, %arg11: memref<8x896xf32, #tpu.memory_space<vmem>>) attributes {dimension_semantics = [], scalar_prefetch = 0 : i64, scratch_operands = 0 : i64, tpu.core_type = #tpu.core_type<tc>} {
    %c0 = arith.constant 0 : index
    %c0_0 = arith.constant 0 : index
    %0 = vector.load %arg0[%c0, %c0_0] : memref<8x1024xf32, #tpu.memory_space<vmem>>, vector<8x1024xf32>
    %c0_1 = arith.constant 0 : index
    %c0_2 = arith.constant 0 : index
    %1 = vector.load %arg1[%c0_1, %c0_2] : memref<1x1024xf32, #tpu.memory_space<vmem>>, vector<1x1024xf32>
    %2 = vector.extract_strided_slice %1 {offsets = [0, 42], sizes = [1, 896], strides = [1, 1]} : vector<1x1024xf32> to vector<1x896xf32>
    %c0_3 = arith.constant 0 : index
    %c0_4 = arith.constant 0 : index
    %3 = vector.load %arg2[%c0_3, %c0_4] : memref<4x8xf32, #tpu.memory_space<vmem>>, vector<4x8xf32>
    %cst = arith.constant dense<0.000000e+00> : vector<4x1024xf32>
    %4 = tpu.matmul %3, %0, %cst {dimension_numbers = #tpu.dot_dimension_numbers<[1], [0], [0], [1], [0, 0, 1, 1], [], []>} : vector<4x8xf32>, vector<8x1024xf32>, vector<4x1024xf32> -> vector<4x1024xf32>
    %5 = vector.broadcast %1 : vector<1x1024xf32> to vector<4x1024xf32>
    %6 = arith.mulf %4, %5 : vector<4x1024xf32>
    %cst_5 = arith.constant dense<0.000000e+00> : vector<4xf32>
    %7 = vector.multi_reduction <add>, %6, %cst_5 [1] : vector<4x1024xf32> to vector<4xf32>
    %8 = vector.shape_cast %7 : vector<4xf32> to vector<4x1xf32>
    %9 = arith.mulf %4, %4 : vector<4x1024xf32>
    %10 = vector.broadcast %1 : vector<1x1024xf32> to vector<4x1024xf32>
    %11 = arith.mulf %9, %10 : vector<4x1024xf32>
    %cst_6 = arith.constant dense<0.000000e+00> : vector<4xf32>
    %12 = vector.multi_reduction <add>, %11, %cst_6 [1] : vector<4x1024xf32> to vector<4xf32>
    %13 = vector.shape_cast %12 : vector<4xf32> to vector<4x1xf32>
    %cst_7 = arith.constant 0.001953125 : f32
    %14 = vector.broadcast %cst_7 : f32 to vector<4x1xf32>
    %15 = arith.mulf %8, %14 : vector<4x1xf32>
    %cst_8 = arith.constant 0.001953125 : f32
    %16 = vector.broadcast %cst_8 : f32 to vector<4x1xf32>
    %17 = arith.mulf %13, %16 : vector<4x1xf32>
    %18 = arith.mulf %15, %15 : vector<4x1xf32>
    %19 = arith.subf %17, %18 : vector<4x1xf32>
    %cst_9 = arith.constant 0.000000e+00 : f32
    %20 = vector.broadcast %cst_9 : f32 to vector<4x1xf32>
    %21 = arith.maximumf %19, %20 : vector<4x1xf32>
    %c0_10 = arith.constant 0 : index
    %c0_11 = arith.constant 0 : index
    %22 = vector.load %arg5[%c0_10, %c0_11] : memref<4x1xf32, #tpu.memory_space<vmem>>, vector<4x1xf32>
    %cst_12 = arith.constant 9.99999974E-6 : f32
    %23 = vector.broadcast %cst_12 : f32 to vector<4x1xf32>
    %24 = arith.addf %21, %23 : vector<4x1xf32>
    %25 = math.rsqrt %24 : vector<4x1xf32>
    %26 = arith.mulf %22, %25 : vector<4x1xf32>
    %c0_13 = arith.constant 0 : index
    %c0_14 = arith.constant 0 : index
    %27 = vector.load %arg6[%c0_13, %c0_14] : memref<4x1xf32, #tpu.memory_space<vmem>>, vector<4x1xf32>
    %28 = arith.mulf %15, %26 : vector<4x1xf32>
    %29 = arith.subf %27, %28 : vector<4x1xf32>
    %30 = vector.broadcast %26 : vector<4x1xf32> to vector<4x1024xf32>
    %31 = arith.mulf %4, %30 : vector<4x1024xf32>
    %32 = vector.broadcast %29 : vector<4x1xf32> to vector<4x1024xf32>
    %33 = arith.addf %31, %32 : vector<4x1024xf32>
    %cst_15 = arith.constant 0.000000e+00 : f32
    %34 = vector.broadcast %cst_15 : f32 to vector<4x1024xf32>
    %35 = arith.maximumf %33, %34 : vector<4x1024xf32>
    %36 = vector.broadcast %1 : vector<1x1024xf32> to vector<4x1024xf32>
    %37 = arith.mulf %35, %36 : vector<4x1024xf32>
    %cst_16 = arith.constant 0.000000e+00 : f32
    %38 = vector.broadcast %cst_16 : f32 to vector<4x896xf32>
    %c0_17 = arith.constant 0 : index
    %c0_18 = arith.constant 0 : index
    %c0_19 = arith.constant 0 : index
    %39 = vector.load %arg3[%c0_17, %c0_18, %c0_19] : memref<9x4x4xf32, #tpu.memory_space<vmem>>, vector<1x4x4xf32>
    %40 = vector.shape_cast %39 : vector<1x4x4xf32> to vector<4x4xf32>
    %41 = vector.extract_strided_slice %37 {offsets = [0, 0], sizes = [4, 896], strides = [1, 1]} : vector<4x1024xf32> to vector<4x896xf32>
    %cst_20 = arith.constant dense<0.000000e+00> : vector<4x896xf32>
    %42 = tpu.matmul %40, %41, %cst_20 {dimension_numbers = #tpu.dot_dimension_numbers<[1], [0], [0], [1], [0, 0, 1, 1], [], []>} : vector<4x4xf32>, vector<4x896xf32>, vector<4x896xf32> -> vector<4x896xf32>
    %43 = arith.addf %38, %42 : vector<4x896xf32>
    %c1 = arith.constant 1 : index
    %c0_21 = arith.constant 0 : index
    %c0_22 = arith.constant 0 : index
    %44 = vector.load %arg3[%c1, %c0_21, %c0_22] : memref<9x4x4xf32, #tpu.memory_space<vmem>>, vector<1x4x4xf32>
    %45 = vector.shape_cast %44 : vector<1x4x4xf32> to vector<4x4xf32>
    %46 = vector.extract_strided_slice %37 {offsets = [0, 2], sizes = [4, 896], strides = [1, 1]} : vector<4x1024xf32> to vector<4x896xf32>
    %cst_23 = arith.constant dense<0.000000e+00> : vector<4x896xf32>
    %47 = tpu.matmul %45, %46, %cst_23 {dimension_numbers = #tpu.dot_dimension_numbers<[1], [0], [0], [1], [0, 0, 1, 1], [], []>} : vector<4x4xf32>, vector<4x896xf32>, vector<4x896xf32> -> vector<4x896xf32>
    %48 = arith.addf %43, %47 : vector<4x896xf32>
    %c2 = arith.constant 2 : index
    %c0_24 = arith.constant 0 : index
    %c0_25 = arith.constant 0 : index
    %49 = vector.load %arg3[%c2, %c0_24, %c0_25] : memref<9x4x4xf32, #tpu.memory_space<vmem>>, vector<1x4x4xf32>
    %50 = vector.shape_cast %49 : vector<1x4x4xf32> to vector<4x4xf32>
    %51 = vector.extract_strided_slice %37 {offsets = [0, 4], sizes = [4, 896], strides = [1, 1]} : vector<4x1024xf32> to vector<4x896xf32>
    %cst_26 = arith.constant dense<0.000000e+00> : vector<4x896xf32>
    %52 = tpu.matmul %50, %51, %cst_26 {dimension_numbers = #tpu.dot_dimension_numbers<[1], [0], [0], [1], [0, 0, 1, 1], [], []>} : vector<4x4xf32>, vector<4x896xf32>, vector<4x896xf32> -> vector<4x896xf32>
    %53 = arith.addf %48, %52 : vector<4x896xf32>
    %c3 = arith.constant 3 : index
    %c0_27 = arith.constant 0 : index
    %c0_28 = arith.constant 0 : index
    %54 = vector.load %arg3[%c3, %c0_27, %c0_28] : memref<9x4x4xf32, #tpu.memory_space<vmem>>, vector<1x4x4xf32>
    %55 = vector.shape_cast %54 : vector<1x4x4xf32> to vector<4x4xf32>
    %56 = vector.extract_strided_slice %37 {offsets = [0, 40], sizes = [4, 896], strides = [1, 1]} : vector<4x1024xf32> to vector<4x896xf32>
    %cst_29 = arith.constant dense<0.000000e+00> : vector<4x896xf32>
    %57 = tpu.matmul %55, %56, %cst_29 {dimension_numbers = #tpu.dot_dimension_numbers<[1], [0], [0], [1], [0, 0, 1, 1], [], []>} : vector<4x4xf32>, vector<4x896xf32>, vector<4x896xf32> -> vector<4x896xf32>
    %58 = arith.addf %53, %57 : vector<4x896xf32>
    %c4 = arith.constant 4 : index
    %c0_30 = arith.constant 0 : index
    %c0_31 = arith.constant 0 : index
    %59 = vector.load %arg3[%c4, %c0_30, %c0_31] : memref<9x4x4xf32, #tpu.memory_space<vmem>>, vector<1x4x4xf32>
    %60 = vector.shape_cast %59 : vector<1x4x4xf32> to vector<4x4xf32>
    %61 = vector.extract_strided_slice %37 {offsets = [0, 42], sizes = [4, 896], strides = [1, 1]} : vector<4x1024xf32> to vector<4x896xf32>
    %cst_32 = arith.constant dense<0.000000e+00> : vector<4x896xf32>
    %62 = tpu.matmul %60, %61, %cst_32 {dimension_numbers = #tpu.dot_dimension_numbers<[1], [0], [0], [1], [0, 0, 1, 1], [], []>} : vector<4x4xf32>, vector<4x896xf32>, vector<4x896xf32> -> vector<4x896xf32>
    %63 = arith.addf %58, %62 : vector<4x896xf32>
    %c5 = arith.constant 5 : index
    %c0_33 = arith.constant 0 : index
    %c0_34 = arith.constant 0 : index
    %64 = vector.load %arg3[%c5, %c0_33, %c0_34] : memref<9x4x4xf32, #tpu.memory_space<vmem>>, vector<1x4x4xf32>
    %65 = vector.shape_cast %64 : vector<1x4x4xf32> to vector<4x4xf32>
    %66 = vector.extract_strided_slice %37 {offsets = [0, 44], sizes = [4, 896], strides = [1, 1]} : vector<4x1024xf32> to vector<4x896xf32>
    %cst_35 = arith.constant dense<0.000000e+00> : vector<4x896xf32>
    %67 = tpu.matmul %65, %66, %cst_35 {dimension_numbers = #tpu.dot_dimension_numbers<[1], [0], [0], [1], [0, 0, 1, 1], [], []>} : vector<4x4xf32>, vector<4x896xf32>, vector<4x896xf32> -> vector<4x896xf32>
    %68 = arith.addf %63, %67 : vector<4x896xf32>
    %c6 = arith.constant 6 : index
    %c0_36 = arith.constant 0 : index
    %c0_37 = arith.constant 0 : index
    %69 = vector.load %arg3[%c6, %c0_36, %c0_37] : memref<9x4x4xf32, #tpu.memory_space<vmem>>, vector<1x4x4xf32>
    %70 = vector.shape_cast %69 : vector<1x4x4xf32> to vector<4x4xf32>
    %71 = vector.extract_strided_slice %37 {offsets = [0, 80], sizes = [4, 896], strides = [1, 1]} : vector<4x1024xf32> to vector<4x896xf32>
    %cst_38 = arith.constant dense<0.000000e+00> : vector<4x896xf32>
    %72 = tpu.matmul %70, %71, %cst_38 {dimension_numbers = #tpu.dot_dimension_numbers<[1], [0], [0], [1], [0, 0, 1, 1], [], []>} : vector<4x4xf32>, vector<4x896xf32>, vector<4x896xf32> -> vector<4x896xf32>
    %73 = arith.addf %68, %72 : vector<4x896xf32>
    %c7 = arith.constant 7 : index
    %c0_39 = arith.constant 0 : index
    %c0_40 = arith.constant 0 : index
    %74 = vector.load %arg3[%c7, %c0_39, %c0_40] : memref<9x4x4xf32, #tpu.memory_space<vmem>>, vector<1x4x4xf32>
    %75 = vector.shape_cast %74 : vector<1x4x4xf32> to vector<4x4xf32>
    %76 = vector.extract_strided_slice %37 {offsets = [0, 82], sizes = [4, 896], strides = [1, 1]} : vector<4x1024xf32> to vector<4x896xf32>
    %cst_41 = arith.constant dense<0.000000e+00> : vector<4x896xf32>
    %77 = tpu.matmul %75, %76, %cst_41 {dimension_numbers = #tpu.dot_dimension_numbers<[1], [0], [0], [1], [0, 0, 1, 1], [], []>} : vector<4x4xf32>, vector<4x896xf32>, vector<4x896xf32> -> vector<4x896xf32>
    %78 = arith.addf %73, %77 : vector<4x896xf32>
    %c8 = arith.constant 8 : index
    %c0_42 = arith.constant 0 : index
    %c0_43 = arith.constant 0 : index
    %79 = vector.load %arg3[%c8, %c0_42, %c0_43] : memref<9x4x4xf32, #tpu.memory_space<vmem>>, vector<1x4x4xf32>
    %80 = vector.shape_cast %79 : vector<1x4x4xf32> to vector<4x4xf32>
    %81 = vector.extract_strided_slice %37 {offsets = [0, 84], sizes = [4, 896], strides = [1, 1]} : vector<4x1024xf32> to vector<4x896xf32>
    %cst_44 = arith.constant dense<0.000000e+00> : vector<4x896xf32>
    %82 = tpu.matmul %80, %81, %cst_44 {dimension_numbers = #tpu.dot_dimension_numbers<[1], [0], [0], [1], [0, 0, 1, 1], [], []>} : vector<4x4xf32>, vector<4x896xf32>, vector<4x896xf32> -> vector<4x896xf32>
    %83 = arith.addf %78, %82 : vector<4x896xf32>
    %84 = vector.broadcast %2 : vector<1x896xf32> to vector<4x896xf32>
    %85 = arith.mulf %83, %84 : vector<4x896xf32>
    %cst_45 = arith.constant dense<0.000000e+00> : vector<4xf32>
    %86 = vector.multi_reduction <add>, %85, %cst_45 [1] : vector<4x896xf32> to vector<4xf32>
    %87 = vector.shape_cast %86 : vector<4xf32> to vector<4x1xf32>
    %88 = arith.mulf %83, %83 : vector<4x896xf32>
    %89 = vector.broadcast %2 : vector<1x896xf32> to vector<4x896xf32>
    %90 = arith.mulf %88, %89 : vector<4x896xf32>
    %cst_46 = arith.constant dense<0.000000e+00> : vector<4xf32>
    %91 = vector.multi_reduction <add>, %90, %cst_46 [1] : vector<4x896xf32> to vector<4xf32>
    %92 = vector.shape_cast %91 : vector<4xf32> to vector<4x1xf32>
    %cst_47 = arith.constant 0.001953125 : f32
    %93 = vector.broadcast %cst_47 : f32 to vector<4x1xf32>
    %94 = arith.mulf %87, %93 : vector<4x1xf32>
    %cst_48 = arith.constant 0.001953125 : f32
    %95 = vector.broadcast %cst_48 : f32 to vector<4x1xf32>
    %96 = arith.mulf %92, %95 : vector<4x1xf32>
    %97 = arith.mulf %94, %94 : vector<4x1xf32>
    %98 = arith.subf %96, %97 : vector<4x1xf32>
    %cst_49 = arith.constant 0.000000e+00 : f32
    %99 = vector.broadcast %cst_49 : f32 to vector<4x1xf32>
    %100 = arith.maximumf %98, %99 : vector<4x1xf32>
    %c0_50 = arith.constant 0 : index
    %c0_51 = arith.constant 0 : index
    %101 = vector.load %arg7[%c0_50, %c0_51] : memref<4x1xf32, #tpu.memory_space<vmem>>, vector<4x1xf32>
    %cst_52 = arith.constant 9.99999974E-6 : f32
    %102 = vector.broadcast %cst_52 : f32 to vector<4x1xf32>
    %103 = arith.addf %100, %102 : vector<4x1xf32>
    %104 = math.rsqrt %103 : vector<4x1xf32>
    %105 = arith.mulf %101, %104 : vector<4x1xf32>
    %c0_53 = arith.constant 0 : index
    %c0_54 = arith.constant 0 : index
    %106 = vector.load %arg8[%c0_53, %c0_54] : memref<4x1xf32, #tpu.memory_space<vmem>>, vector<4x1xf32>
    %107 = arith.mulf %94, %105 : vector<4x1xf32>
    %108 = arith.subf %106, %107 : vector<4x1xf32>
    %109 = vector.broadcast %105 : vector<4x1xf32> to vector<4x896xf32>
    %110 = arith.mulf %83, %109 : vector<4x896xf32>
    %111 = vector.broadcast %108 : vector<4x1xf32> to vector<4x896xf32>
    %112 = arith.addf %110, %111 : vector<4x896xf32>
    %cst_55 = arith.constant 0.000000e+00 : f32
    %113 = vector.broadcast %cst_55 : f32 to vector<4x896xf32>
    %114 = arith.maximumf %112, %113 : vector<4x896xf32>
    %115 = vector.broadcast %2 : vector<1x896xf32> to vector<4x896xf32>
    %116 = arith.mulf %114, %115 : vector<4x896xf32>
    %c0_56 = arith.constant 0 : index
    %c0_57 = arith.constant 0 : index
    %117 = vector.load %arg4[%c0_56, %c0_57] : memref<8x4xf32, #tpu.memory_space<vmem>>, vector<8x4xf32>
    %cst_58 = arith.constant dense<0.000000e+00> : vector<8x896xf32>
    %118 = tpu.matmul %117, %116, %cst_58 {dimension_numbers = #tpu.dot_dimension_numbers<[1], [0], [0], [1], [0, 0, 1, 1], [], []>} : vector<8x4xf32>, vector<4x896xf32>, vector<8x896xf32> -> vector<8x896xf32>
    %119 = vector.broadcast %2 : vector<1x896xf32> to vector<8x896xf32>
    %120 = arith.mulf %118, %119 : vector<8x896xf32>
    %cst_59 = arith.constant dense<0.000000e+00> : vector<8xf32>
    %121 = vector.multi_reduction <add>, %120, %cst_59 [1] : vector<8x896xf32> to vector<8xf32>
    %122 = vector.shape_cast %121 : vector<8xf32> to vector<8x1xf32>
    %123 = arith.mulf %118, %118 : vector<8x896xf32>
    %124 = vector.broadcast %2 : vector<1x896xf32> to vector<8x896xf32>
    %125 = arith.mulf %123, %124 : vector<8x896xf32>
    %cst_60 = arith.constant dense<0.000000e+00> : vector<8xf32>
    %126 = vector.multi_reduction <add>, %125, %cst_60 [1] : vector<8x896xf32> to vector<8xf32>
    %127 = vector.shape_cast %126 : vector<8xf32> to vector<8x1xf32>
    %cst_61 = arith.constant 0.001953125 : f32
    %128 = vector.broadcast %cst_61 : f32 to vector<8x1xf32>
    %129 = arith.mulf %122, %128 : vector<8x1xf32>
    %cst_62 = arith.constant 0.001953125 : f32
    %130 = vector.broadcast %cst_62 : f32 to vector<8x1xf32>
    %131 = arith.mulf %127, %130 : vector<8x1xf32>
    %132 = arith.mulf %129, %129 : vector<8x1xf32>
    %133 = arith.subf %131, %132 : vector<8x1xf32>
    %cst_63 = arith.constant 0.000000e+00 : f32
    %134 = vector.broadcast %cst_63 : f32 to vector<8x1xf32>
    %135 = arith.maximumf %133, %134 : vector<8x1xf32>
    %c0_64 = arith.constant 0 : index
    %c0_65 = arith.constant 0 : index
    %136 = vector.load %arg9[%c0_64, %c0_65] : memref<8x1xf32, #tpu.memory_space<vmem>>, vector<8x1xf32>
    %cst_66 = arith.constant 9.99999974E-6 : f32
    %137 = vector.broadcast %cst_66 : f32 to vector<8x1xf32>
    %138 = arith.addf %135, %137 : vector<8x1xf32>
    %139 = math.rsqrt %138 : vector<8x1xf32>
    %140 = arith.mulf %136, %139 : vector<8x1xf32>
    %c0_67 = arith.constant 0 : index
    %c0_68 = arith.constant 0 : index
    %141 = vector.load %arg10[%c0_67, %c0_68] : memref<8x1xf32, #tpu.memory_space<vmem>>, vector<8x1xf32>
    %142 = arith.mulf %129, %140 : vector<8x1xf32>
    %143 = arith.subf %141, %142 : vector<8x1xf32>
    %144 = vector.broadcast %140 : vector<8x1xf32> to vector<8x896xf32>
    %145 = arith.mulf %118, %144 : vector<8x896xf32>
    %146 = vector.broadcast %143 : vector<8x1xf32> to vector<8x896xf32>
    %147 = arith.addf %145, %146 : vector<8x896xf32>
    %cst_69 = arith.constant 0.000000e+00 : f32
    %148 = vector.broadcast %cst_69 : f32 to vector<8x896xf32>
    %149 = arith.maximumf %147, %148 : vector<8x896xf32>
    %150 = vector.extract_strided_slice %0 {offsets = [0, 42], sizes = [8, 896], strides = [1, 1]} : vector<8x1024xf32> to vector<8x896xf32>
    %151 = arith.addf %149, %150 : vector<8x896xf32>
    %cst_70 = arith.constant 0.000000e+00 : f32
    %152 = vector.broadcast %cst_70 : f32 to vector<8x896xf32>
    %153 = arith.maximumf %151, %152 : vector<8x896xf32>
    %c0_71 = arith.constant 0 : index
    %c0_72 = arith.constant 0 : index
    %154 = vector.load %arg11[%c0_71, %c0_72] : memref<8x896xf32, #tpu.memory_space<vmem>>, vector<8x896xf32>
    tpu.vector_store %arg11[%c0_71, %c0_72], %153 {strides = array<i32>} : memref<8x896xf32, #tpu.memory_space<vmem>>, vector<8x896xf32>,
    return
  }
}

</mosaic_0001>

<llo_original>
// kernel: bottleneck_forward.1
$region0: #{bottleneck_forward.1}
  #allocation0 [shape = 'u32[]', space=smem, size = 0x4, offset = 0x4, fixed_abs, tag = 'smem constant byte address 0x4 - core index']
  #allocation1 [shape = 'u32[144,128]{1,0:T(1,128)}', space=vmem, size = 0x12000, scoped, tag = 'internal scratch']
  %s0 = inlined_call_operand.vmem [shape: f32[8,1024], index: 0, kind: input, shape index: {}]
  %s1 = inlined_call_operand.vmem [shape: f32[1,1024], index: 1, kind: input, shape index: {}]
  %s2 = inlined_call_operand.vmem [shape: f32[4,8], index: 2, kind: input, shape index: {}]
  %s3 = inlined_call_operand.vmem [shape: f32[9,4,4], index: 3, kind: input, shape index: {}]
  %s4 = inlined_call_operand.vmem [shape: f32[8,4], index: 4, kind: input, shape index: {}]
  %s5 = inlined_call_operand.vmem [shape: f32[4,1], index: 5, kind: input, shape index: {}]
  %s6 = inlined_call_operand.vmem [shape: f32[4,1], index: 6, kind: input, shape index: {}]
  %s7 = inlined_call_operand.vmem [shape: f32[4,1], index: 7, kind: input, shape index: {}]
  %s8 = inlined_call_operand.vmem [shape: f32[4,1], index: 8, kind: input, shape index: {}]
  %s9 = inlined_call_operand.vmem [shape: f32[8,1], index: 9, kind: input, shape index: {}]
  %s10 = inlined_call_operand.vmem [shape: f32[8,1], index: 10, kind: input, shape index: {}]
  %s11 = inlined_call_operand.vmem [shape: f32[8,896], index: 11, kind: output, shape index: {}]
  %s12 = sld [smem:[#allocation0]]
  $region54: #{bottleneck_forward.1} parent=0
    _
  %s14 = ssub.s32 1, %s12
  %s15 = scalar_select 0, %s14, %s12
  // Predicated region
  $region2: #{bottleneck_forward.1} parent=0 // pred_check
    _
  $region3: #{bottleneck_forward.1} parent=0 // pred_check_branch
    %17 = sbr.rel (0) target = $region5
  $region4: #{bottleneck_forward.1} parent=0 // pred_region
    _
  $region5: #{bottleneck_forward.1} parent=0 // pred_fallthru
    _
  // Predicated region
  $region6: #{bottleneck_forward.1} parent=0 // pred_check
    _
  $region7: #{bottleneck_forward.1} parent=0 // pred_check_branch
    %19 = sbr.rel (0) target = $region9
  $region8: #{bottleneck_forward.1} parent=0 // pred_region
    _
  $region9: #{bottleneck_forward.1} parent=0 // pred_fallthru
    _
  // Predicated region
  $region10: #{bottleneck_forward.1} parent=0 // pred_check
    _
  $region11: #{bottleneck_forward.1} parent=0 // pred_check_branch
    %21 = sbr.rel (0) target = $region13
  $region12: #{bottleneck_forward.1} parent=0 // pred_region
    _
  $region13: #{bottleneck_forward.1} parent=0 // pred_fallthru
    _
  // Predicated region
  $region14: #{bottleneck_forward.1} parent=0 // pred_check
    _
  $region15: #{bottleneck_forward.1} parent=0 // pred_check_branch
    %23 = sbr.rel (0) target = $region17
  $region16: #{bottleneck_forward.1} parent=0 // pred_region
    _
  $region17: #{bottleneck_forward.1} parent=0 // pred_fallthru
    _
  // Predicated region
  $region18: #{bottleneck_forward.1} parent=0 // pred_check
    _
  $region19: #{bottleneck_forward.1} parent=0 // pred_check_branch
    %25 = sbr.rel (0) target = $region21
  $region20: #{bottleneck_forward.1} parent=0 // pred_region
    _
  $region21: #{bottleneck_forward.1} parent=0 // pred_fallthru
    _
  // Predicated region
  $region22: #{bottleneck_forward.1} parent=0 // pred_check
    _
  $region23: #{bottleneck_forward.1} parent=0 // pred_check_branch
    %27 = sbr.rel (0) target = $region25
  $region24: #{bottleneck_forward.1} parent=0 // pred_region
    _
  $region25: #{bottleneck_forward.1} parent=0 // pred_fallthru
    _
  // Predicated region
  $region26: #{bottleneck_forward.1} parent=0 // pred_check
    _
  $region27: #{bottleneck_forward.1} parent=0 // pred_check_branch
    %29 = sbr.rel (0) target = $region29
  $region28: #{bottleneck_forward.1} parent=0 // pred_region
    _
  $region29: #{bottleneck_forward.1} parent=0 // pred_fallthru
    _
  // Predicated region
  $region30: #{bottleneck_forward.1} parent=0 // pred_check
    _
  $region31: #{bottleneck_forward.1} parent=0 // pred_check_branch
    %31 = sbr.rel (0) target = $region33
  $region32: #{bottleneck_forward.1} parent=0 // pred_region
    _
  $region33: #{bottleneck_forward.1} parent=0 // pred_fallthru
    _
  // Predicated region
  $region34: #{bottleneck_forward.1} parent=0 // pred_check
    _
  $region35: #{bottleneck_forward.1} parent=0 // pred_check_branch
    %33 = sbr.rel (0) target = $region37
  $region36: #{bottleneck_forward.1} parent=0 // pred_region
    _
  $region37: #{bottleneck_forward.1} parent=0 // pred_fallthru
    _
  // Predicated region
  $region38: #{bottleneck_forward.1} parent=0 // pred_check
    _
  $region39: #{bottleneck_forward.1} parent=0 // pred_check_branch
    %35 = sbr.rel (0) target = $region41
  $region40: #{bottleneck_forward.1} parent=0 // pred_region
    _
  $region41: #{bottleneck_forward.1} parent=0 // pred_fallthru
    _
  // Predicated region
  $region42: #{bottleneck_forward.1} parent=0 // pred_check
    _
  $region43: #{bottleneck_forward.1} parent=0 // pred_check_branch
    %37 = sbr.rel (0) target = $region45
  $region44: #{bottleneck_forward.1} parent=0 // pred_region
    _
  $region45: #{bottleneck_forward.1} parent=0 // pred_fallthru
    _
  %v38 = vld [vmem:[%s0] sm:$0xff]
  %v39 = vld [vmem:[%s0 + $0x8] sm:$0xff]
  %v40 = vld [vmem:[%s0 + $0x10] sm:$0xff]
  %v41 = vld [vmem:[%s0 + $0x18] sm:$0xff]
  %v42 = vld [vmem:[%s0 + $0x20] sm:$0xff]
  %v43 = vld [vmem:[%s0 + $0x28] sm:$0xff]
  %v44 = vld [vmem:[%s0 + $0x30] sm:$0xff]
  %v45 = vld [vmem:[%s0 + $0x38] sm:$0xff]
  %v46 = vld [vmem:[%s1] sm:$0xff]
  %v47 = vld [vmem:[%s2] sm:$0xf]
  %vm48 = vcmask 64512
  %v50 = vsel %vm48, %v47, 0
  %52 = vmatprep.subr.mxu0 %v39
  %53 = vmatpush1.msra.mxu0 %v38
  %54 = vmatprep.subr.mxu0 0.0
  %55 = vmatpush1.msra.mxu0 0.0
  %56 = vmatprep.subr.mxu0 0.0
  %57 = vmatpush1.msra.mxu0 0.0
  %58 = vmatprep.subr.mxu0 0.0
  %59 = vmatpush1.msra.mxu0 0.0
  %60 = vmatprep.subr.mxu0 0.0
  %61 = vmatpush1.msra.mxu0 0.0
  %62 = vmatprep.subr.mxu0 0.0
  %63 = vmatpush1.msra.mxu0 0.0
  %64 = vmatprep.subr.mxu0 0.0
  %65 = vmatpush1.msra.mxu0 0.0
  %66 = vmatprep.subr.mxu0 0.0
  %67 = vmatpush1.msra.mxu0 0.0
  %68 = vmatprep.subr.mxu0 0.0
  %69 = vmatpush1.msra.mxu0 0.0
  %70 = vmatprep.subr.mxu0 0.0
  %71 = vmatpush1.msra.mxu0 0.0
  %72 = vmatprep.subr.mxu0 0.0
  %73 = vmatpush1.msra.mxu0 0.0
  %74 = vmatprep.subr.mxu0 0.0
  %75 = vmatpush1.msra.mxu0 0.0
  %76 = vmatprep.subr.mxu0 0.0
  %77 = vmatpush1.msra.mxu0 0.0
  %78 = vmatprep.subr.mxu0 0.0
  %79 = vmatpush1.msra.mxu0 0.0
  %80 = vmatprep.subr.mxu0 0.0
  %81 = vmatpush1.msra.mxu0 0.0
  %82 = vmatprep.subr.mxu0 0.0
  %83 = vmatpush1.msra.mxu0 0.0
  %84 = vmatprep.subr.mxu0 0.0
  %85 = vmatpush1.msra.mxu0 0.0
  %86 = vmatprep.subr.mxu0 0.0
  %87 = vmatpush1.msra.mxu0 0.0
  %88 = vmatprep.subr.mxu0 0.0
  %89 = vmatpush1.msra.mxu0 0.0
  %90 = vmatprep.subr.mxu0 0.0
  %91 = vmatpush1.msra.mxu0 0.0
  %92 = vmatprep.subr.mxu0 0.0
  %93 = vmatpush1.msra.mxu0 0.0
  %94 = vmatprep.subr.mxu0 0.0
  %95 = vmatpush1.msra.mxu0 0.0
  %96 = vmatprep.subr.mxu0 0.0
  %97 = vmatpush1.msra.mxu0 0.0
  %98 = vmatprep.subr.mxu0 0.0
  %99 = vmatpush1.msra.mxu0 0.0
  %100 = vmatprep.subr.mxu0 0.0
  %101 = vmatpush1.msra.mxu0 0.0
  %102 = vmatprep.subr.mxu0 0.0
  %103 = vmatpush1.msra.mxu0 0.0
  %104 = vmatprep.subr.mxu0 0.0
  %105 = vmatpush1.msra.mxu0 0.0
  %106 = vmatprep.subr.mxu0 0.0
  %107 = vmatpush1.msra.mxu0 0.0
  %108 = vmatprep.subr.mxu0 0.0
  %109 = vmatpush1.msra.mxu0 0.0
  %110 = vmatprep.subr.mxu0 0.0
  %111 = vmatpush1.msra.mxu0 0.0
  %112 = vmatprep.subr.mxu0 0.0
  %113 = vmatpush1.msra.mxu0 0.0
  %114 = vmatprep.subr.mxu0 0.0
  %115 = vmatpush1.msra.mxu0 0.0
  %116 = vmatprep.mubr.f32.mxu0 0.0
  %117 = vmatmul.mubr.f32.gmra.mrb[0].mxu0 %v50
  %v118 = vpop.f32.mrb[0].mxu0
  %v119 = vadd.f32 0.0, %v118
  %v120 = vpop.f32.mrb[0].mxu0
  %v121 = vadd.f32 0.0, %v120
  %122 = vdwg.mxu0
  %123 = vmatprep.subr.mxu0 %v41
  %124 = vmatpush1.msra.mxu0 %v40
  %125 = vmatprep.subr.mxu0 0.0
  %126 = vmatpush1.msra.mxu0 0.0
  %127 = vmatprep.subr.mxu0 0.0
  %128 = vmatpush1.msra.mxu0 0.0
  %129 = vmatprep.subr.mxu0 0.0
  %130 = vmatpush1.msra.mxu0 0.0
  %131 = vmatprep.subr.mxu0 0.0
  %132 = vmatpush1.msra.mxu0 0.0
  %133 = vmatprep.subr.mxu0 0.0
  %134 = vmatpush1.msra.mxu0 0.0
  %135 = vmatprep.subr.mxu0 0.0
  %136 = vmatpush1.msra.mxu0 0.0
  %137 = vmatprep.subr.mxu0 0.0
  %138 = vmatpush1.msra.mxu0 0.0
  %139 = vmatprep.subr.mxu0 0.0
  %140 = vmatpush1.msra.mxu0 0.0
  %141 = vmatprep.subr.mxu0 0.0
  %142 = vmatpush1.msra.mxu0 0.0
  %143 = vmatprep.subr.mxu0 0.0
  %144 = vmatpush1.msra.mxu0 0.0
  %145 = vmatprep.subr.mxu0 0.0
  %146 = vmatpush1.msra.mxu0 0.0
  %147 = vmatprep.subr.mxu0 0.0
  %148 = vmatpush1.msra.mxu0 0.0
  %149 = vmatprep.subr.mxu0 0.0
  %150 = vmatpush1.msra.mxu0 0.0
  %151 = vmatprep.subr.mxu0 0.0
  %152 = vmatpush1.msra.mxu0 0.0
  %153 = vmatprep.subr.mxu0 0.0
  %154 = vmatpush1.msra.mxu0 0.0
  %155 = vmatprep.subr.mxu0 0.0
  %156 = vmatpush1.msra.mxu0 0.0
  %157 = vmatprep.subr.mxu0 0.0
  %158 = vmatpush1.msra.mxu0 0.0
  %159 = vmatprep.subr.mxu0 0.0
  %160 = vmatpush1.msra.mxu0 0.0
  %161 = vmatprep.subr.mxu0 0.0
  %162 = vmatpush1.msra.mxu0 0.0
  %163 = vmatprep.subr.mxu0 0.0
  %164 = vmatpush1.msra.mxu0 0.0
  %165 = vmatprep.subr.mxu0 0.0
  %166 = vmatpush1.msra.mxu0 0.0
  %167 = vmatprep.subr.mxu0 0.0
  %168 = vmatpush1.msra.mxu0 0.0
  %169 = vmatprep.subr.mxu0 0.0
  %170 = vmatpush1.msra.mxu0 0.0
  %171 = vmatprep.subr.mxu0 0.0
  %172 = vmatpush1.msra.mxu0 0.0
  %173 = vmatprep.subr.mxu0 0.0
  %174 = vmatpush1.msra.mxu0 0.0
  %175 = vmatprep.subr.mxu0 0.0
  %176 = vmatpush1.msra.mxu0 0.0
  %177 = vmatprep.subr.mxu0 0.0
  %178 = vmatpush1.msra.mxu0 0.0
  %179 = vmatprep.subr.mxu0 0.0
  %180 = vmatpush1.msra.mxu0 0.0
  %181 = vmatprep.subr.mxu0 0.0
  %182 = vmatpush1.msra.mxu0 0.0
  %183 = vmatprep.subr.mxu0 0.0
  %184 = vmatpush1.msra.mxu0 0.0
  %185 = vmatprep.subr.mxu0 0.0
  %186 = vmatpush1.msra.mxu0 0.0
  %187 = vmatprep.mubr.f32.mxu0 0.0
  %188 = vmatmul.mubr.f32.gmra.mrb[0].mxu0 %v50
  %v189 = vpop.f32.mrb[0].mxu0
  %v190 = vadd.f32 0.0, %v189
  %v191 = vpop.f32.mrb[0].mxu0
  %v192 = vadd.f32 0.0, %v191
  %193 = vdwg.mxu0
  %194 = vmatprep.subr.mxu0 %v43
  %195 = vmatpush1.msra.mxu0 %v42
  %196 = vmatprep.subr.mxu0 0.0
  %197 = vmatpush1.msra.mxu0 0.0
  %198 = vmatprep.subr.mxu0 0.0
  %199 = vmatpush1.msra.mxu0 0.0
  %200 = vmatprep.subr.mxu0 0.0
  %201 = vmatpush1.msra.mxu0 0.0
  %202 = vmatprep.subr.mxu0 0.0
  %203 = vmatpush1.msra.mxu0 0.0
  %204 = vmatprep.subr.mxu0 0.0
  %205 = vmatpush1.msra.mxu0 0.0
  %206 = vmatprep.subr.mxu0 0.0
  %207 = vmatpush1.msra.mxu0 0.0
  %208 = vmatprep.subr.mxu0 0.0
  %209 = vmatpush1.msra.mxu0 0.0
  %210 = vmatprep.subr.mxu0 0.0
  %211 = vmatpush1.msra.mxu0 0.0
  %212 = vmatprep.subr.mxu0 0.0
  %213 = vmatpush1.msra.mxu0 0.0
  %214 = vmatprep.subr.mxu0 0.0
  %215 = vmatpush1.msra.mxu0 0.0
  %216 = vmatprep.subr.mxu0 0.0
  %217 = vmatpush1.msra.mxu0 0.0
  %218 = vmatprep.subr.mxu0 0.0
  %219 = vmatpush1.msra.mxu0 0.0
  %220 = vmatprep.subr.mxu0 0.0
  %221 = vmatpush1.msra.mxu0 0.0
  %222 = vmatprep.subr.mxu0 0.0
  %223 = vmatpush1.msra.mxu0 0.0
  %224 = vmatprep.subr.mxu0 0.0
  %225 = vmatpush1.msra.mxu0 0.0
  %226 = vmatprep.subr.mxu0 0.0
  %227 = vmatpush1.msra.mxu0 0.0
  %228 = vmatprep.subr.mxu0 0.0
  %229 = vmatpush1.msra.mxu0 0.0
  %230 = vmatprep.subr.mxu0 0.0
  %231 = vmatpush1.msra.mxu0 0.0
  %232 = vmatprep.subr.mxu0 0.0
  %233 = vmatpush1.msra.mxu0 0.0
  %234 = vmatprep.subr.mxu0 0.0
  %235 = vmatpush1.msra.mxu0 0.0
  %236 = vmatprep.subr.mxu0 0.0
  %237 = vmatpush1.msra.mxu0 0.0
  %238 = vmatprep.subr.mxu0 0.0
  %239 = vmatpush1.msra.mxu0 0.0
  %240 = vmatprep.subr.mxu0 0.0
  %241 = vmatpush1.msra.mxu0 0.0
  %242 = vmatprep.subr.mxu0 0.0
  %243 = vmatpush1.msra.mxu0 0.0
  %244 = vmatprep.subr.mxu0 0.0
  %245 = vmatpush1.msra.mxu0 0.0
  %246 = vmatprep.subr.mxu0 0.0
  %247 = vmatpush1.msra.mxu0 0.0
  %248 = vmatprep.subr.mxu0 0.0
  %249 = vmatpush1.msra.mxu0 0.0
  %250 = vmatprep.subr.mxu0 0.0
  %251 = vmatpush1.msra.mxu0 0.0
  %252 = vmatprep.subr.mxu0 0.0
  %253 = vmatpush1.msra.mxu0 0.0
  %254 = vmatprep.subr.mxu0 0.0
  %255 = vmatpush1.msra.mxu0 0.0
  %256 = vmatprep.subr.mxu0 0.0
  %257 = vmatpush1.msra.mxu0 0.0
  %258 = vmatprep.mubr.f32.mxu0 0.0
  %259 = vmatmul.mubr.f32.gmra.mrb[0].mxu0 %v50
  %v260 = vpop.f32.mrb[0].mxu0
  %v261 = vadd.f32 0.0, %v260
  %v262 = vpop.f32.mrb[0].mxu0
  %v263 = vadd.f32 0.0, %v262
  %264 = vdwg.mxu0
  %265 = vmatprep.subr.mxu0 %v45
  %266 = vmatpush1.msra.mxu0 %v44
  %267 = vmatprep.subr.mxu0 0.0
  %268 = vmatpush1.msra.mxu0 0.0
  %269 = vmatprep.subr.mxu0 0.0
  %270 = vmatpush1.msra.mxu0 0.0
  %271 = vmatprep.subr.mxu0 0.0
  %272 = vmatpush1.msra.mxu0 0.0
  %273 = vmatprep.subr.mxu0 0.0
  %274 = vmatpush1.msra.mxu0 0.0
  %275 = vmatprep.subr.mxu0 0.0
  %276 = vmatpush1.msra.mxu0 0.0
  %277 = vmatprep.subr.mxu0 0.0
  %278 = vmatpush1.msra.mxu0 0.0
  %279 = vmatprep.subr.mxu0 0.0
  %280 = vmatpush1.msra.mxu0 0.0
  %281 = vmatprep.subr.mxu0 0.0
  %282 = vmatpush1.msra.mxu0 0.0
  %283 = vmatprep.subr.mxu0 0.0
  %284 = vmatpush1.msra.mxu0 0.0
  %285 = vmatprep.subr.mxu0 0.0
  %286 = vmatpush1.msra.mxu0 0.0
  %287 = vmatprep.subr.mxu0 0.0
  %288 = vmatpush1.msra.mxu0 0.0
  %289 = vmatprep.subr.mxu0 0.0
  %290 = vmatpush1.msra.mxu0 0.0
  %291 = vmatprep.subr.mxu0 0.0
  %292 = vmatpush1.msra.mxu0 0.0
  %293 = vmatprep.subr.mxu0 0.0
  %294 = vmatpush1.msra.mxu0 0.0
  %295 = vmatprep.subr.mxu0 0.0
  %296 = vmatpush1.msra.mxu0 0.0
  %297 = vmatprep.subr.mxu0 0.0
  %298 = vmatpush1.msra.mxu0 0.0
  %299 = vmatprep.subr.mxu0 0.0
  %300 = vmatpush1.msra.mxu0 0.0
  %301 = vmatprep.subr.mxu0 0.0
  %302 = vmatpush1.msra.mxu0 0.0
  %303 = vmatprep.subr.mxu0 0.0
  %304 = vmatpush1.msra.mxu0 0.0
  %305 = vmatprep.subr.mxu0 0.0
  %306 = vmatpush1.msra.mxu0 0.0
  %307 = vmatprep.subr.mxu0 0.0
  %308 = vmatpush1.msra.mxu0 0.0
  %309 = vmatprep.subr.mxu0 0.0
  %310 = vmatpush1.msra.mxu0 0.0
  %311 = vmatprep.subr.mxu0 0.0
  %312 = vmatpush1.msra.mxu0 0.0
  %313 = vmatprep.subr.mxu0 0.0
  %314 = vmatpush1.msra.mxu0 0.0
  %315 = vmatprep.subr.mxu0 0.0
  %316 = vmatpush1.msra.mxu0 0.0
  %317 = vmatprep.subr.mxu0 0.0
  %318 = vmatpush1.msra.mxu0 0.0
  %319 = vmatprep.subr.mxu0 0.0
  %320 = vmatpush1.msra.mxu0 0.0
  %321 = vmatprep.subr.mxu0 0.0
  %322 = vmatpush1.msra.mxu0 0.0
  %323 = vmatprep.subr.mxu0 0.0
  %324 = vmatpush1.msra.mxu0 0.0
  %325 = vmatprep.subr.mxu0 0.0
  %326 = vmatpush1.msra.mxu0 0.0
  %327 = vmatprep.subr.mxu0 0.0
  %328 = vmatpush1.msra.mxu0 0.0
  %329 = vmatprep.mubr.f32.mxu0 0.0
  %330 = vmatmul.mubr.f32.gmra.mrb[0].mxu0 %v50
  %v331 = vpop.f32.mrb[0].mxu0
  %v332 = vadd.f32 0.0, %v331
  %v333 = vpop.f32.mrb[0].mxu0
  %v334 = vadd.f32 0.0, %v333
  %335 = vdwg.mxu0
  %v337 = vlaneseq
  %v338 = vshrl.u32 %v337, 7
  %v339 = vsub.s32 0, %v338
  %v340 = vrot.slane %v46, %v339
  %v341 = vlaneseq
  %v342 = vshrl.u32 %v341, 7
  %v343 = vsub.s32 1, %v342
  %v344 = vrot.slane %v46, %v343
  %v345 = vlaneseq
  %v346 = vshrl.u32 %v345, 7
  %v347 = vsub.s32 2, %v346
  %v348 = vrot.slane %v46, %v347
  %v349 = vlaneseq
  %v350 = vshrl.u32 %v349, 7
  %v351 = vsub.s32 3, %v350
  %v352 = vrot.slane %v46, %v351
  %v353 = vlaneseq
  %v354 = vshrl.u32 %v353, 7
  %v355 = vsub.s32 4, %v354
  %v356 = vrot.slane %v46, %v355
  %v357 = vlaneseq
  %v358 = vshrl.u32 %v357, 7
  %v359 = vsub.s32 5, %v358
  %v360 = vrot.slane %v46, %v359
  %v361 = vlaneseq
  %v362 = vshrl.u32 %v361, 7
  %v363 = vsub.s32 6, %v362
  %v364 = vrot.slane %v46, %v363
  %v365 = vlaneseq
  %v366 = vshrl.u32 %v365, 7
  %v367 = vsub.s32 7, %v366
  %v368 = vrot.slane %v46, %v367
  %v377 = vmul.f32 %v119, %v340
  %v378 = vmul.f32 %v121, %v344
  %v379 = vmul.f32 %v190, %v348
  %v380 = vmul.f32 %v192, %v352
  %v381 = vmul.f32 %v261, %v356
  %v382 = vmul.f32 %v263, %v360
  %v383 = vmul.f32 %v332, %v364
  %v384 = vmul.f32 %v334, %v368
  %vm385 = vcmask 1043456
  %v386 = vsel %vm385, %v377, 0.0
  %v387 = vsel %vm385, %v378, 0.0
  %v388 = vadd.f32 %v386, %v387
  %v389 = vsel %vm385, %v379, 0.0
  %v390 = vadd.f32 %v388, %v389
  %v391 = vsel %vm385, %v380, 0.0
  %v392 = vadd.f32 %v390, %v391
  %v393 = vsel %vm385, %v381, 0.0
  %v394 = vadd.f32 %v392, %v393
  %v395 = vsel %vm385, %v382, 0.0
  %v396 = vadd.f32 %v394, %v395
  %v397 = vsel %vm385, %v383, 0.0
  %v398 = vadd.f32 %v396, %v397
  %v399 = vsel %vm385, %v384, 0.0
  %v400 = vadd.f32 %v398, %v399
  %401 = vadd.xlane.f32.xlu0 %v400
  %v402 = vpop.xlane.xlu0 %401
  %v403 = vmul.f32 %v119, %v119
  %v404 = vmul.f32 %v121, %v121
  %v405 = vmul.f32 %v190, %v190
  %v406 = vmul.f32 %v192, %v192
  %v407 = vmul.f32 %v261, %v261
  %v408 = vmul.f32 %v263, %v263
  %v409 = vmul.f32 %v332, %v332
  %v410 = vmul.f32 %v334, %v334
  %v411 = vmul.f32 %v403, %v340
  %v412 = vmul.f32 %v404, %v344
  %v413 = vmul.f32 %v405, %v348
  %v414 = vmul.f32 %v406, %v352
  %v415 = vmul.f32 %v407, %v356
  %v416 = vmul.f32 %v408, %v360
  %v417 = vmul.f32 %v409, %v364
  %v418 = vmul.f32 %v410, %v368
  %v419 = vsel %vm385, %v411, 0.0
  %v420 = vsel %vm385, %v412, 0.0
  %v421 = vadd.f32 %v419, %v420
  %v422 = vsel %vm385, %v413, 0.0
  %v423 = vadd.f32 %v421, %v422
  %v424 = vsel %vm385, %v414, 0.0
  %v425 = vadd.f32 %v423, %v424
  %v426 = vsel %vm385, %v415, 0.0
  %v427 = vadd.f32 %v425, %v426
  %v428 = vsel %vm385, %v416, 0.0
  %v429 = vadd.f32 %v427, %v428
  %v430 = vsel %vm385, %v417, 0.0
  %v431 = vadd.f32 %v429, %v430
  %v432 = vsel %vm385, %v418, 0.0
  %v433 = vadd.f32 %v431, %v432
  %434 = vadd.xlane.f32.xlu0 %v433
  %v435 = vpop.xlane.xlu0 %434
  %v436 = vmul.f32 %v402, 0.001953125
  %v437 = vmul.f32 %v435, 0.001953125
  %v438 = vmul.f32 %v436, %v436
  %v439 = vsub.f32 %v437, %v438
  %v440 = vmax.f32 %v439, 0.0
  %v441 = vld [vmem:[%s5] sm:$0xf]
  %v442 = vadd.f32 %v440, 1e-05
  %v443 = vrsqrt.pop %v442
  %v444 = vmul.f32 %v441, %v443
  %v445 = vld [vmem:[%s6] sm:$0xf]
  %v446 = vmul.f32 %v436, %v444
  %v447 = vsub.f32 %v445, %v446
  %449 = vset.pattern.permute.xlu0 0
  %450 = vperm.xlu0 %449, %v444
  %v451 = vpop.permute.xlu0 %450
  %v453 = vmul.f32 %v119, %v451
  %v454 = vmul.f32 %v121, %v451
  %v455 = vmul.f32 %v190, %v451
  %v456 = vmul.f32 %v192, %v451
  %v457 = vmul.f32 %v261, %v451
  %v458 = vmul.f32 %v263, %v451
  %v459 = vmul.f32 %v332, %v451
  %v460 = vmul.f32 %v334, %v451
  %462 = vset.pattern.permute.xlu0 0
  %463 = vperm.xlu0 %462, %v447
  %v464 = vpop.permute.xlu0 %463
  %v466 = vadd.f32 %v453, %v464
  %v467 = vadd.f32 %v454, %v464
  %v468 = vadd.f32 %v455, %v464
  %v469 = vadd.f32 %v456, %v464
  %v470 = vadd.f32 %v457, %v464
  %v471 = vadd.f32 %v458, %v464
  %v472 = vadd.f32 %v459, %v464
  %v473 = vadd.f32 %v460, %v464
  %v474 = vmax.f32 %v466, 0.0
  %v475 = vmax.f32 %v467, 0.0
  %v476 = vmax.f32 %v468, 0.0
  %v477 = vmax.f32 %v469, 0.0
  %v478 = vmax.f32 %v470, 0.0
  %v479 = vmax.f32 %v471, 0.0
  %v480 = vmax.f32 %v472, 0.0
  %v481 = vmax.f32 %v473, 0.0
  %v482 = vmul.f32 %v474, %v340
  %v483 = vmul.f32 %v475, %v344
  %v484 = vmul.f32 %v476, %v348
  %v485 = vmul.f32 %v477, %v352
  %v486 = vmul.f32 %v478, %v356
  %v487 = vmul.f32 %v479, %v360
  %v488 = vmul.f32 %v480, %v364
  %v489 = vmul.f32 %v481, %v368
  %v490 = vld [vmem:[%s3] sm:$0xf]
  %s491 = scalar_lea.vmem %s3, 4
  %v492 = vld [vmem:[%s491] sm:$0xf]
  %501 = vrot.lane.b32.xlu0 %v482, 126
  %v502 = vpop.permute.xlu0 %501
  %503 = vrot.lane.b32.xlu0 %v483, 126
  %v504 = vpop.permute.xlu0 %503
  %505 = vrot.lane.b32.xlu0 %v484, 126
  %v506 = vpop.permute.xlu0 %505
  %507 = vrot.lane.b32.xlu0 %v485, 126
  %v508 = vpop.permute.xlu0 %507
  %509 = vrot.lane.b32.xlu0 %v486, 126
  %v510 = vpop.permute.xlu0 %509
  %511 = vrot.lane.b32.xlu0 %v487, 126
  %v512 = vpop.permute.xlu0 %511
  %513 = vrot.lane.b32.xlu0 %v488, 126
  %v514 = vpop.permute.xlu0 %513
  %515 = vrot.lane.b32.xlu0 %v489, 126
  %v516 = vpop.permute.xlu0 %515
  %vm517 = vcmask 1031168
  %v518 = vsel %vm517, %v502, %v504
  %v519 = vsel %vm517, %v504, %v506
  %v520 = vsel %vm517, %v506, %v508
  %v521 = vsel %vm517, %v508, %v510
  %v522 = vsel %vm517, %v510, %v512
  %v523 = vsel %vm517, %v512, %v514
  %v524 = vsel %vm517, %v514, %v516
  %vm525 = vcmask 31744
  %v527 = vsel %vm525, %v492, 0
  %v529 = vsel %vm385, %v518, 0
  %v531 = vsel %vm385, %v519, 0
  %v533 = vsel %vm385, %v520, 0
  %v535 = vsel %vm385, %v521, 0
  %v537 = vsel %vm385, %v522, 0
  %v539 = vsel %vm385, %v523, 0
  %v541 = vsel %vm385, %v524, 0
  %543 = vmatprep.subr.mxu0 %v531
  %544 = vmatpush1.msra.mxu0 %v529
  %545 = vmatprep.subr.mxu0 0.0
  %546 = vmatpush1.msra.mxu0 0.0
  %547 = vmatprep.subr.mxu0 0.0
  %548 = vmatpush1.msra.mxu0 0.0
  %549 = vmatprep.subr.mxu0 0.0
  %550 = vmatpush1.msra.mxu0 0.0
  %551 = vmatprep.subr.mxu0 0.0
  %552 = vmatpush1.msra.mxu0 0.0
  %553 = vmatprep.subr.mxu0 0.0
  %554 = vmatpush1.msra.mxu0 0.0
  %555 = vmatprep.subr.mxu0 0.0
  %556 = vmatpush1.msra.mxu0 0.0
  %557 = vmatprep.subr.mxu0 0.0
  %558 = vmatpush1.msra.mxu0 0.0
  %559 = vmatprep.subr.mxu0 0.0
  %560 = vmatpush1.msra.mxu0 0.0
  %561 = vmatprep.subr.mxu0 0.0
  %562 = vmatpush1.msra.mxu0 0.0
  %563 = vmatprep.subr.mxu0 0.0
  %564 = vmatpush1.msra.mxu0 0.0
  %565 = vmatprep.subr.mxu0 0.0
  %566 = vmatpush1.msra.mxu0 0.0
  %567 = vmatprep.subr.mxu0 0.0
  %568 = vmatpush1.msra.mxu0 0.0
  %569 = vmatprep.subr.mxu0 0.0
  %570 = vmatpush1.msra.mxu0 0.0
  %571 = vmatprep.subr.mxu0 0.0
  %572 = vmatpush1.msra.mxu0 0.0
  %573 = vmatprep.subr.mxu0 0.0
  %574 = vmatpush1.msra.mxu0 0.0
  %575 = vmatprep.subr.mxu0 0.0
  %576 = vmatpush1.msra.mxu0 0.0
  %577 = vmatprep.subr.mxu0 0.0
  %578 = vmatpush1.msra.mxu0 0.0
  %579 = vmatprep.subr.mxu0 0.0
  %580 = vmatpush1.msra.mxu0 0.0
  %581 = vmatprep.subr.mxu0 0.0
  %582 = vmatpush1.msra.mxu0 0.0
  %583 = vmatprep.subr.mxu0 0.0
  %584 = vmatpush1.msra.mxu0 0.0
  %585 = vmatprep.subr.mxu0 0.0
  %586 = vmatpush1.msra.mxu0 0.0
  %587 = vmatprep.subr.mxu0 0.0
  %588 = vmatpush1.msra.mxu0 0.0
  %589 = vmatprep.subr.mxu0 0.0
  %590 = vmatpush1.msra.mxu0 0.0
  %591 = vmatprep.subr.mxu0 0.0
  %592 = vmatpush1.msra.mxu0 0.0
  %593 = vmatprep.subr.mxu0 0.0
  %594 = vmatpush1.msra.mxu0 0.0
  %595 = vmatprep.subr.mxu0 0.0
  %596 = vmatpush1.msra.mxu0 0.0
  %597 = vmatprep.subr.mxu0 0.0
  %598 = vmatpush1.msra.mxu0 0.0
  %599 = vmatprep.subr.mxu0 0.0
  %600 = vmatpush1.msra.mxu0 0.0
  %601 = vmatprep.subr.mxu0 0.0
  %602 = vmatpush1.msra.mxu0 0.0
  %603 = vmatprep.subr.mxu0 0.0
  %604 = vmatpush1.msra.mxu0 0.0
  %605 = vmatprep.subr.mxu0 0.0
  %606 = vmatpush1.msra.mxu0 0.0
  %607 = vmatprep.mubr.f32.mxu0 0.0
  %608 = vmatmul.mubr.f32.gmra.mrb[0].mxu0 %v527
  %v609 = vpop.f32.mrb[0].mxu0
  %v610 = vadd.f32 0.0, %v609
  %v611 = vpop.f32.mrb[0].mxu0
  %v612 = vadd.f32 0.0, %v611
  %613 = vdwg.mxu0
  %614 = vmatprep.subr.mxu0 %v535
  %615 = vmatpush1.msra.mxu0 %v533
  %616 = vmatprep.subr.mxu0 0.0
  %617 = vmatpush1.msra.mxu0 0.0
  %618 = vmatprep.subr.mxu0 0.0
  %619 = vmatpush1.msra.mxu0 0.0
  %620 = vmatprep.subr.mxu0 0.0
  %621 = vmatpush1.msra.mxu0 0.0
  %622 = vmatprep.subr.mxu0 0.0
  %623 = vmatpush1.msra.mxu0 0.0
  %624 = vmatprep.subr.mxu0 0.0
  %625 = vmatpush1.msra.mxu0 0.0
  %626 = vmatprep.subr.mxu0 0.0
  %627 = vmatpush1.msra.mxu0 0.0
  %628 = vmatprep.subr.mxu0 0.0
  %629 = vmatpush1.msra.mxu0 0.0
  %630 = vmatprep.subr.mxu0 0.0
  %631 = vmatpush1.msra.mxu0 0.0
  %632 = vmatprep.subr.mxu0 0.0
  %633 = vmatpush1.msra.mxu0 0.0
  %634 = vmatprep.subr.mxu0 0.0
  %635 = vmatpush1.msra.mxu0 0.0
  %636 = vmatprep.subr.mxu0 0.0
  %637 = vmatpush1.msra.mxu0 0.0
  %638 = vmatprep.subr.mxu0 0.0
  %639 = vmatpush1.msra.mxu0 0.0
  %640 = vmatprep.subr.mxu0 0.0
  %641 = vmatpush1.msra.mxu0 0.0
  %642 = vmatprep.subr.mxu0 0.0
  %643 = vmatpush1.msra.mxu0 0.0
  %644 = vmatprep.subr.mxu0 0.0
  %645 = vmatpush1.msra.mxu0 0.0
  %646 = vmatprep.subr.mxu0 0.0
  %647 = vmatpush1.msra.mxu0 0.0
  %648 = vmatprep.subr.mxu0 0.0
  %649 = vmatpush1.msra.mxu0 0.0
  %650 = vmatprep.subr.mxu0 0.0
  %651 = vmatpush1.msra.mxu0 0.0
  %652 = vmatprep.subr.mxu0 0.0
  %653 = vmatpush1.msra.mxu0 0.0
  %654 = vmatprep.subr.mxu0 0.0
  %655 = vmatpush1.msra.mxu0 0.0
  %656 = vmatprep.subr.mxu0 0.0
  %657 = vmatpush1.msra.mxu0 0.0
  %658 = vmatprep.subr.mxu0 0.0
  %659 = vmatpush1.msra.mxu0 0.0
  %660 = vmatprep.subr.mxu0 0.0
  %661 = vmatpush1.msra.mxu0 0.0
  %662 = vmatprep.subr.mxu0 0.0
  %663 = vmatpush1.msra.mxu0 0.0
  %664 = vmatprep.subr.mxu0 0.0
  %665 = vmatpush1.msra.mxu0 0.0
  %666 = vmatprep.subr.mxu0 0.0
  %667 = vmatpush1.msra.mxu0 0.0
  %668 = vmatprep.subr.mxu0 0.0
  %669 = vmatpush1.msra.mxu0 0.0
  %670 = vmatprep.subr.mxu0 0.0
  %671 = vmatpush1.msra.mxu0 0.0
  %672 = vmatprep.subr.mxu0 0.0
  %673 = vmatpush1.msra.mxu0 0.0
  %674 = vmatprep.subr.mxu0 0.0
  %675 = vmatpush1.msra.mxu0 0.0
  %676 = vmatprep.subr.mxu0 0.0
  %677 = vmatpush1.msra.mxu0 0.0
  %678 = vmatprep.mubr.f32.mxu0 0.0
  %679 = vmatmul.mubr.f32.gmra.mrb[0].mxu0 %v527
  %v680 = vpop.f32.mrb[0].mxu0
  %v681 = vadd.f32 0.0, %v680
  %v682 = vpop.f32.mrb[0].mxu0
  %v683 = vadd.f32 0.0, %v682
  %684 = vdwg.mxu0
  %685 = vmatprep.subr.mxu0 %v539
  %686 = vmatpush1.msra.mxu0 %v537
  %687 = vmatprep.subr.mxu0 0.0
  %688 = vmatpush1.msra.mxu0 0.0
  %689 = vmatprep.subr.mxu0 0.0
  %690 = vmatpush1.msra.mxu0 0.0
  %691 = vmatprep.subr.mxu0 0.0
  %692 = vmatpush1.msra.mxu0 0.0
  %693 = vmatprep.subr.mxu0 0.0
  %694 = vmatpush1.msra.mxu0 0.0
  %695 = vmatprep.subr.mxu0 0.0
  %696 = vmatpush1.msra.mxu0 0.0
  %697 = vmatprep.subr.mxu0 0.0
  %698 = vmatpush1.msra.mxu0 0.0
  %699 = vmatprep.subr.mxu0 0.0
  %700 = vmatpush1.msra.mxu0 0.0
  %701 = vmatprep.subr.mxu0 0.0
  %702 = vmatpush1.msra.mxu0 0.0
  %703 = vmatprep.subr.mxu0 0.0
  %704 = vmatpush1.msra.mxu0 0.0
  %705 = vmatprep.subr.mxu0 0.0
  %706 = vmatpush1.msra.mxu0 0.0
  %707 = vmatprep.subr.mxu0 0.0
  %708 = vmatpush1.msra.mxu0 0.0
  %709 = vmatprep.subr.mxu0 0.0
  %710 = vmatpush1.msra.mxu0 0.0
  %711 = vmatprep.subr.mxu0 0.0
  %712 = vmatpush1.msra.mxu0 0.0
  %713 = vmatprep.subr.mxu0 0.0
  %714 = vmatpush1.msra.mxu0 0.0
  %715 = vmatprep.subr.mxu0 0.0
  %716 = vmatpush1.msra.mxu0 0.0
  %717 = vmatprep.subr.mxu0 0.0
  %718 = vmatpush1.msra.mxu0 0.0
  %719 = vmatprep.subr.mxu0 0.0
  %720 = vmatpush1.msra.mxu0 0.0
  %721 = vmatprep.subr.mxu0 0.0
  %722 = vmatpush1.msra.mxu0 0.0
  %723 = vmatprep.subr.mxu0 0.0
  %724 = vmatpush1.msra.mxu0 0.0
  %725 = vmatprep.subr.mxu0 0.0
  %726 = vmatpush1.msra.mxu0 0.0
  %727 = vmatprep.subr.mxu0 0.0
  %728 = vmatpush1.msra.mxu0 0.0
  %729 = vmatprep.subr.mxu0 0.0
  %730 = vmatpush1.msra.mxu0 0.0
  %731 = vmatprep.subr.mxu0 0.0
  %732 = vmatpush1.msra.mxu0 0.0
  %733 = vmatprep.subr.mxu0 0.0
  %734 = vmatpush1.msra.mxu0 0.0
  %735 = vmatprep.subr.mxu0 0.0
  %736 = vmatpush1.msra.mxu0 0.0
  %737 = vmatprep.subr.mxu0 0.0
  %738 = vmatpush1.msra.mxu0 0.0
  %739 = vmatprep.subr.mxu0 0.0
  %740 = vmatpush1.msra.mxu0 0.0
  %741 = vmatprep.subr.mxu0 0.0
  %742 = vmatpush1.msra.mxu0 0.0
  %743 = vmatprep.subr.mxu0 0.0
  %744 = vmatpush1.msra.mxu0 0.0
  %745 = vmatprep.subr.mxu0 0.0
  %746 = vmatpush1.msra.mxu0 0.0
  %747 = vmatprep.subr.mxu0 0.0
  %748 = vmatpush1.msra.mxu0 0.0
  %749 = vmatprep.mubr.f32.mxu0 0.0
  %750 = vmatmul.mubr.f32.gmra.mrb[0].mxu0 %v527
  %v751 = vpop.f32.mrb[0].mxu0
  %v752 = vadd.f32 0.0, %v751
  %v753 = vpop.f32.mrb[0].mxu0
  %v754 = vadd.f32 0.0, %v753
  %755 = vdwg.mxu0
  %756 = vmatprep.subr.mxu0 0.0
  %757 = vmatpush1.msra.mxu0 %v541
  %758 = vmatprep.subr.mxu0 0.0
  %759 = vmatpush1.msra.mxu0 0.0
  %760 = vmatprep.subr.mxu0 0.0
  %761 = vmatpush1.msra.mxu0 0.0
  %762 = vmatprep.subr.mxu0 0.0
  %763 = vmatpush1.msra.mxu0 0.0
  %764 = vmatprep.subr.mxu0 0.0
  %765 = vmatpush1.msra.mxu0 0.0
  %766 = vmatprep.subr.mxu0 0.0
  %767 = vmatpush1.msra.mxu0 0.0
  %768 = vmatprep.subr.mxu0 0.0
  %769 = vmatpush1.msra.mxu0 0.0
  %770 = vmatprep.subr.mxu0 0.0
  %771 = vmatpush1.msra.mxu0 0.0
  %772 = vmatprep.subr.mxu0 0.0
  %773 = vmatpush1.msra.mxu0 0.0
  %774 = vmatprep.subr.mxu0 0.0
  %775 = vmatpush1.msra.mxu0 0.0
  %776 = vmatprep.subr.mxu0 0.0
  %777 = vmatpush1.msra.mxu0 0.0
  %778 = vmatprep.subr.mxu0 0.0
  %779 = vmatpush1.msra.mxu0 0.0
  %780 = vmatprep.subr.mxu0 0.0
  %781 = vmatpush1.msra.mxu0 0.0
  %782 = vmatprep.subr.mxu0 0.0
  %783 = vmatpush1.msra.mxu0 0.0
  %784 = vmatprep.subr.mxu0 0.0
  %785 = vmatpush1.msra.mxu0 0.0
  %786 = vmatprep.subr.mxu0 0.0
  %787 = vmatpush1.msra.mxu0 0.0
  %788 = vmatprep.subr.mxu0 0.0
  %789 = vmatpush1.msra.mxu0 0.0
  %790 = vmatprep.subr.mxu0 0.0
  %791 = vmatpush1.msra.mxu0 0.0
  %792 = vmatprep.subr.mxu0 0.0
  %793 = vmatpush1.msra.mxu0 0.0
  %794 = vmatprep.subr.mxu0 0.0
  %795 = vmatpush1.msra.mxu0 0.0
  %796 = vmatprep.subr.mxu0 0.0
  %797 = vmatpush1.msra.mxu0 0.0
  %798 = vmatprep.subr.mxu0 0.0
  %799 = vmatpush1.msra.mxu0 0.0
  %800 = vmatprep.subr.mxu0 0.0
  %801 = vmatpush1.msra.mxu0 0.0
  %802 = vmatprep.subr.mxu0 0.0
  %803 = vmatpush1.msra.mxu0 0.0
  %804 = vmatprep.subr.mxu0 0.0
  %805 = vmatpush1.msra.mxu0 0.0
  %806 = vmatprep.subr.mxu0 0.0
  %807 = vmatpush1.msra.mxu0 0.0
  %808 = vmatprep.subr.mxu0 0.0
  %809 = vmatpush1.msra.mxu0 0.0
  %810 = vmatprep.subr.mxu0 0.0
  %811 = vmatpush1.msra.mxu0 0.0
  %812 = vmatprep.subr.mxu0 0.0
  %813 = vmatpush1.msra.mxu0 0.0
  %814 = vmatprep.subr.mxu0 0.0
  %815 = vmatpush1.msra.mxu0 0.0
  %816 = vmatprep.subr.mxu0 0.0
  %817 = vmatpush1.msra.mxu0 0.0
  %818 = vmatprep.subr.mxu0 0.0
  %819 = vmatpush1.msra.mxu0 0.0
  %820 = vmatprep.mubr.f32.mxu0 0.0
  %821 = vmatmul.mubr.f32.gmra.mrb[0].mxu0 %v527
  %v822 = vpop.f32.mrb[0].mxu0
  %v823 = vadd.f32 0.0, %v822
  %v824 = vpop.f32.mrb[0].mxu0
  %825 = vdwg.mxu0
  %v827 = vsel %vm525, %v490, 0
  %v829 = vsel %vm385, %v482, 0
  %v831 = vsel %vm385, %v483, 0
  %v833 = vsel %vm385, %v484, 0
  %v835 = vsel %vm385, %v485, 0
  %v837 = vsel %vm385, %v486, 0
  %v839 = vsel %vm385, %v487, 0
  %v841 = vsel %vm385, %v488, 0
  %843 = vmatprep.subr.mxu0 %v831
  %844 = vmatpush1.msra.mxu0 %v829
  %845 = vmatprep.subr.mxu0 0.0
  %846 = vmatpush1.msra.mxu0 0.0
  %847 = vmatprep.subr.mxu0 0.0
  %848 = vmatpush1.msra.mxu0 0.0
  %849 = vmatprep.subr.mxu0 0.0
  %850 = vmatpush1.msra.mxu0 0.0
  %851 = vmatprep.subr.mxu0 0.0
  %852 = vmatpush1.msra.mxu0 0.0
  %853 = vmatprep.subr.mxu0 0.0
  %854 = vmatpush1.msra.mxu0 0.0
  %855 = vmatprep.subr.mxu0 0.0
  %856 = vmatpush1.msra.mxu0 0.0
  %857 = vmatprep.subr.mxu0 0.0
  %858 = vmatpush1.msra.mxu0 0.0
  %859 = vmatprep.subr.mxu0 0.0
  %860 = vmatpush1.msra.mxu0 0.0
  %861 = vmatprep.subr.mxu0 0.0
  %862 = vmatpush1.msra.mxu0 0.0
  %863 = vmatprep.subr.mxu0 0.0
  %864 = vmatpush1.msra.mxu0 0.0
  %865 = vmatprep.subr.mxu0 0.0
  %866 = vmatpush1.msra.mxu0 0.0
  %867 = vmatprep.subr.mxu0 0.0
  %868 = vmatpush1.msra.mxu0 0.0
  %869 = vmatprep.subr.mxu0 0.0
  %870 = vmatpush1.msra.mxu0 0.0
  %871 = vmatprep.subr.mxu0 0.0
  %872 = vmatpush1.msra.mxu0 0.0
  %873 = vmatprep.subr.mxu0 0.0
  %874 = vmatpush1.msra.mxu0 0.0
  %875 = vmatprep.subr.mxu0 0.0
  %876 = vmatpush1.msra.mxu0 0.0
  %877 = vmatprep.subr.mxu0 0.0
  %878 = vmatpush1.msra.mxu0 0.0
  %879 = vmatprep.subr.mxu0 0.0
  %880 = vmatpush1.msra.mxu0 0.0
  %881 = vmatprep.subr.mxu0 0.0
  %882 = vmatpush1.msra.mxu0 0.0
  %883 = vmatprep.subr.mxu0 0.0
  %884 = vmatpush1.msra.mxu0 0.0
  %885 = vmatprep.subr.mxu0 0.0
  %886 = vmatpush1.msra.mxu0 0.0
  %887 = vmatprep.subr.mxu0 0.0
  %888 = vmatpush1.msra.mxu0 0.0
  %889 = vmatprep.subr.mxu0 0.0
  %890 = vmatpush1.msra.mxu0 0.0
  %891 = vmatprep.subr.mxu0 0.0
  %892 = vmatpush1.msra.mxu0 0.0
  %893 = vmatprep.subr.mxu0 0.0
  %894 = vmatpush1.msra.mxu0 0.0
  %895 = vmatprep.subr.mxu0 0.0
  %896 = vmatpush1.msra.mxu0 0.0
  %897 = vmatprep.subr.mxu0 0.0
  %898 = vmatpush1.msra.mxu0 0.0
  %899 = vmatprep.subr.mxu0 0.0
  %900 = vmatpush1.msra.mxu0 0.0
  %901 = vmatprep.subr.mxu0 0.0
  %902 = vmatpush1.msra.mxu0 0.0
  %903 = vmatprep.subr.mxu0 0.0
  %904 = vmatpush1.msra.mxu0 0.0
  %905 = vmatprep.subr.mxu0 0.0
  %906 = vmatpush1.msra.mxu0 0.0
  %907 = vmatprep.mubr.f32.mxu0 0.0
  %908 = vmatmul.mubr.f32.gmra.mrb[0].mxu0 %v827
  %v909 = vpop.f32.mrb[0].mxu0
  %v910 = vadd.f32 %v610, %v909
  %v911 = vpop.f32.mrb[0].mxu0
  %v912 = vadd.f32 %v612, %v911
  %913 = vdwg.mxu0
  %914 = vmatprep.subr.mxu0 %v835
  %915 = vmatpush1.msra.mxu0 %v833
  %916 = vmatprep.subr.mxu0 0.0
  %917 = vmatpush1.msra.mxu0 0.0
  %918 = vmatprep.subr.mxu0 0.0
  %919 = vmatpush1.msra.mxu0 0.0
  %920 = vmatprep.subr.mxu0 0.0
  %921 = vmatpush1.msra.mxu0 0.0
  %922 = vmatprep.subr.mxu0 0.0
  %923 = vmatpush1.msra.mxu0 0.0
  %924 = vmatprep.subr.mxu0 0.0
  %925 = vmatpush1.msra.mxu0 0.0
  %926 = vmatprep.subr.mxu0 0.0
  %927 = vmatpush1.msra.mxu0 0.0
  %928 = vmatprep.subr.mxu0 0.0
  %929 = vmatpush1.msra.mxu0 0.0
  %930 = vmatprep.subr.mxu0 0.0
  %931 = vmatpush1.msra.mxu0 0.0
  %932 = vmatprep.subr.mxu0 0.0
  %933 = vmatpush1.msra.mxu0 0.0
  %934 = vmatprep.subr.mxu0 0.0
  %935 = vmatpush1.msra.mxu0 0.0
  %936 = vmatprep.subr.mxu0 0.0
  %937 = vmatpush1.msra.mxu0 0.0
  %938 = vmatprep.subr.mxu0 0.0
  %939 = vmatpush1.msra.mxu0 0.0
  %940 = vmatprep.subr.mxu0 0.0
  %941 = vmatpush1.msra.mxu0 0.0
  %942 = vmatprep.subr.mxu0 0.0
  %943 = vmatpush1.msra.mxu0 0.0
  %944 = vmatprep.subr.mxu0 0.0
  %945 = vmatpush1.msra.mxu0 0.0
  %946 = vmatprep.subr.mxu0 0.0
  %947 = vmatpush1.msra.mxu0 0.0
  %948 = vmatprep.subr.mxu0 0.0
  %949 = vmatpush1.msra.mxu0 0.0
  %950 = vmatprep.subr.mxu0 0.0
  %951 = vmatpush1.msra.mxu0 0.0
  %952 = vmatprep.subr.mxu0 0.0
  %953 = vmatpush1.msra.mxu0 0.0
  %954 = vmatprep.subr.mxu0 0.0
  %955 = vmatpush1.msra.mxu0 0.0
  %956 = vmatprep.subr.mxu0 0.0
  %957 = vmatpush1.msra.mxu0 0.0
  %958 = vmatprep.subr.mxu0 0.0
  %959 = vmatpush1.msra.mxu0 0.0
  %960 = vmatprep.subr.mxu0 0.0
  %961 = vmatpush1.msra.mxu0 0.0
  %962 = vmatprep.subr.mxu0 0.0
  %963 = vmatpush1.msra.mxu0 0.0
  %964 = vmatprep.subr.mxu0 0.0
  %965 = vmatpush1.msra.mxu0 0.0
  %966 = vmatprep.subr.mxu0 0.0
  %967 = vmatpush1.msra.mxu0 0.0
  %968 = vmatprep.subr.mxu0 0.0
  %969 = vmatpush1.msra.mxu0 0.0
  %970 = vmatprep.subr.mxu0 0.0
  %971 = vmatpush1.msra.mxu0 0.0
  %972 = vmatprep.subr.mxu0 0.0
  %973 = vmatpush1.msra.mxu0 0.0
  %974 = vmatprep.subr.mxu0 0.0
  %975 = vmatpush1.msra.mxu0 0.0
  %976 = vmatprep.subr.mxu0 0.0
  %977 = vmatpush1.msra.mxu0 0.0
  %978 = vmatprep.mubr.f32.mxu0 0.0
  %979 = vmatmul.mubr.f32.gmra.mrb[0].mxu0 %v827
  %v980 = vpop.f32.mrb[0].mxu0
  %v981 = vadd.f32 %v681, %v980
  %v982 = vpop.f32.mrb[0].mxu0
  %v983 = vadd.f32 %v683, %v982
  %984 = vdwg.mxu0
  %985 = vmatprep.subr.mxu0 %v839
  %986 = vmatpush1.msra.mxu0 %v837
  %987 = vmatprep.subr.mxu0 0.0
  %988 = vmatpush1.msra.mxu0 0.0
  %989 = vmatprep.subr.mxu0 0.0
  %990 = vmatpush1.msra.mxu0 0.0
  %991 = vmatprep.subr.mxu0 0.0
  %992 = vmatpush1.msra.mxu0 0.0
  %993 = vmatprep.subr.mxu0 0.0
  %994 = vmatpush1.msra.mxu0 0.0
  %995 = vmatprep.subr.mxu0 0.0
  %996 = vmatpush1.msra.mxu0 0.0
  %997 = vmatprep.subr.mxu0 0.0
  %998 = vmatpush1.msra.mxu0 0.0
  %999 = vmatprep.subr.mxu0 0.0
  %1000 = vmatpush1.msra.mxu0 0.0
  %1001 = vmatprep.subr.mxu0 0.0
  %1002 = vmatpush1.msra.mxu0 0.0
  %1003 = vmatprep.subr.mxu0 0.0
  %1004 = vmatpush1.msra.mxu0 0.0
  %1005 = vmatprep.subr.mxu0 0.0
  %1006 = vmatpush1.msra.mxu0 0.0
  %1007 = vmatprep.subr.mxu0 0.0
  %1008 = vmatpush1.msra.mxu0 0.0
  %1009 = vmatprep.subr.mxu0 0.0
  %1010 = vmatpush1.msra.mxu0 0.0
  %1011 = vmatprep.subr.mxu0 0.0
  %1012 = vmatpush1.msra.mxu0 0.0
  %1013 = vmatprep.subr.mxu0 0.0
  %1014 = vmatpush1.msra.mxu0 0.0
  %1015 = vmatprep.subr.mxu0 0.0
  %1016 = vmatpush1.msra.mxu0 0.0
  %1017 = vmatprep.subr.mxu0 0.0
  %1018 = vmatpush1.msra.mxu0 0.0
  %1019 = vmatprep.subr.mxu0 0.0
  %1020 = vmatpush1.msra.mxu0 0.0
  %1021 = vmatprep.subr.mxu0 0.0
  %1022 = vmatpush1.msra.mxu0 0.0
  %1023 = vmatprep.subr.mxu0 0.0
  %1024 = vmatpush1.msra.mxu0 0.0
  %1025 = vmatprep.subr.mxu0 0.0
  %1026 = vmatpush1.msra.mxu0 0.0
  %1027 = vmatprep.subr.mxu0 0.0
  %1028 = vmatpush1.msra.mxu0 0.0
  %1029 = vmatprep.subr.mxu0 0.0
  %1030 = vmatpush1.msra.mxu0 0.0
  %1031 = vmatprep.subr.mxu0 0.0
  %1032 = vmatpush1.msra.mxu0 0.0
  %1033 = vmatprep.subr.mxu0 0.0
  %1034 = vmatpush1.msra.mxu0 0.0
  %1035 = vmatprep.subr.mxu0 0.0
  %1036 = vmatpush1.msra.mxu0 0.0
  %1037 = vmatprep.subr.mxu0 0.0
  %1038 = vmatpush1.msra.mxu0 0.0
  %1039 = vmatprep.subr.mxu0 0.0
  %1040 = vmatpush1.msra.mxu0 0.0
  %1041 = vmatprep.subr.mxu0 0.0
  %1042 = vmatpush1.msra.mxu0 0.0
  %1043 = vmatprep.subr.mxu0 0.0
  %1044 = vmatpush1.msra.mxu0 0.0
  %1045 = vmatprep.subr.mxu0 0.0
  %1046 = vmatpush1.msra.mxu0 0.0
  %1047 = vmatprep.subr.mxu0 0.0
  %1048 = vmatpush1.msra.mxu0 0.0
  %1049 = vmatprep.mubr.f32.mxu0 0.0
  %1050 = vmatmul.mubr.f32.gmra.mrb[0].mxu0 %v827
  %v1051 = vpop.f32.mrb[0].mxu0
  %v1052 = vadd.f32 %v752, %v1051
  %v1053 = vpop.f32.mrb[0].mxu0
  %v1054 = vadd.f32 %v754, %v1053
  %1055 = vdwg.mxu0
  %1056 = vmatprep.subr.mxu0 0.0
  %1057 = vmatpush1.msra.mxu0 %v841
  %1058 = vmatprep.subr.mxu0 0.0
  %1059 = vmatpush1.msra.mxu0 0.0
  %1060 = vmatprep.subr.mxu0 0.0
  %1061 = vmatpush1.msra.mxu0 0.0
  %1062 = vmatprep.subr.mxu0 0.0
  %1063 = vmatpush1.msra.mxu0 0.0
  %1064 = vmatprep.subr.mxu0 0.0
  %1065 = vmatpush1.msra.mxu0 0.0
  %1066 = vmatprep.subr.mxu0 0.0
  %1067 = vmatpush1.msra.mxu0 0.0
  %1068 = vmatprep.subr.mxu0 0.0
  %1069 = vmatpush1.msra.mxu0 0.0
  %1070 = vmatprep.subr.mxu0 0.0
  %1071 = vmatpush1.msra.mxu0 0.0
  %1072 = vmatprep.subr.mxu0 0.0
  %1073 = vmatpush1.msra.mxu0 0.0
  %1074 = vmatprep.subr.mxu0 0.0
  %1075 = vmatpush1.msra.mxu0 0.0
  %1076 = vmatprep.subr.mxu0 0.0
  %1077 = vmatpush1.msra.mxu0 0.0
  %1078 = vmatprep.subr.mxu0 0.0
  %1079 = vmatpush1.msra.mxu0 0.0
  %1080 = vmatprep.subr.mxu0 0.0
  %1081 = vmatpush1.msra.mxu0 0.0
  %1082 = vmatprep.subr.mxu0 0.0
  %1083 = vmatpush1.msra.mxu0 0.0
  %1084 = vmatprep.subr.mxu0 0.0
  %1085 = vmatpush1.msra.mxu0 0.0
  %1086 = vmatprep.subr.mxu0 0.0
  %1087 = vmatpush1.msra.mxu0 0.0
  %1088 = vmatprep.subr.mxu0 0.0
  %1089 = vmatpush1.msra.mxu0 0.0
  %1090 = vmatprep.subr.mxu0 0.0
  %1091 = vmatpush1.msra.mxu0 0.0
  %1092 = vmatprep.subr.mxu0 0.0
  %1093 = vmatpush1.msra.mxu0 0.0
  %1094 = vmatprep.subr.mxu0 0.0
  %1095 = vmatpush1.msra.mxu0 0.0
  %1096 = vmatprep.subr.mxu0 0.0
  %1097 = vmatpush1.msra.mxu0 0.0
  %1098 = vmatprep.subr.mxu0 0.0
  %1099 = vmatpush1.msra.mxu0 0.0
  %1100 = vmatprep.subr.mxu0 0.0
  %1101 = vmatpush1.msra.mxu0 0.0
  %1102 = vmatprep.subr.mxu0 0.0
  %1103 = vmatpush1.msra.mxu0 0.0
  %1104 = vmatprep.subr.mxu0 0.0
  %1105 = vmatpush1.msra.mxu0 0.0
  %1106 = vmatprep.subr.mxu0 0.0
  %1107 = vmatpush1.msra.mxu0 0.0
  %1108 = vmatprep.subr.mxu0 0.0
  %1109 = vmatpush1.msra.mxu0 0.0
  %1110 = vmatprep.subr.mxu0 0.0
  %1111 = vmatpush1.msra.mxu0 0.0
  %1112 = vmatprep.subr.mxu0 0.0
  %1113 = vmatpush1.msra.mxu0 0.0
  %1114 = vmatprep.subr.mxu0 0.0
  %1115 = vmatpush1.msra.mxu0 0.0
  %1116 = vmatprep.subr.mxu0 0.0
  %1117 = vmatpush1.msra.mxu0 0.0
  %1118 = vmatprep.subr.mxu0 0.0
  %1119 = vmatpush1.msra.mxu0 0.0
  %1120 = vmatprep.mubr.f32.mxu0 0.0
  %1121 = vmatmul.mubr.f32.gmra.mrb[0].mxu0 %v827
  %v1122 = vpop.f32.mrb[0].mxu0
  %v1123 = vadd.f32 %v823, %v1122
  %v1124 = vpop.f32.mrb[0].mxu0
  %1125 = vdwg.mxu0
  %s1126 = scalar_lea.vmem %s3, 8
  %v1127 = vld [vmem:[%s1126] sm:$0xf]
  %1128 = vrot.lane.b32.xlu0 %v482, 124
  %v1129 = vpop.permute.xlu0 %1128
  %1130 = vrot.lane.b32.xlu0 %v483, 124
  %v1131 = vpop.permute.xlu0 %1130
  %1132 = vrot.lane.b32.xlu0 %v484, 124
  %v1133 = vpop.permute.xlu0 %1132
  %1134 = vrot.lane.b32.xlu0 %v485, 124
  %v1135 = vpop.permute.xlu0 %1134
  %1136 = vrot.lane.b32.xlu0 %v486, 124
  %v1137 = vpop.permute.xlu0 %1136
  %1138 = vrot.lane.b32.xlu0 %v487, 124
  %v1139 = vpop.permute.xlu0 %1138
  %1140 = vrot.lane.b32.xlu0 %v488, 124
  %v1141 = vpop.permute.xlu0 %1140
  %1142 = vrot.lane.b32.xlu0 %v489, 124
  %v1143 = vpop.permute.xlu0 %1142
  %vm1144 = vcmask 1014784
  %v1145 = vsel %vm1144, %v1129, %v1131
  %v1146 = vsel %vm1144, %v1131, %v1133
  %v1147 = vsel %vm1144, %v1133, %v1135
  %v1148 = vsel %vm1144, %v1135, %v1137
  %v1149 = vsel %vm1144, %v1137, %v1139
  %v1150 = vsel %vm1144, %v1139, %v1141
  %v1151 = vsel %vm1144, %v1141, %v1143
  %v1153 = vsel %vm525, %v1127, 0
  %v1155 = vsel %vm385, %v1145, 0
  %v1157 = vsel %vm385, %v1146, 0
  %v1159 = vsel %vm385, %v1147, 0
  %v1161 = vsel %vm385, %v1148, 0
  %v1163 = vsel %vm385, %v1149, 0
  %v1165 = vsel %vm385, %v1150, 0
  %v1167 = vsel %vm385, %v1151, 0
  %1169 = vmatprep.subr.mxu0 %v1157
  %1170 = vmatpush1.msra.mxu0 %v1155
  %1171 = vmatprep.subr.mxu0 0.0
  %1172 = vmatpush1.msra.mxu0 0.0
  %1173 = vmatprep.subr.mxu0 0.0
  %1174 = vmatpush1.msra.mxu0 0.0
  %1175 = vmatprep.subr.mxu0 0.0
  %1176 = vmatpush1.msra.mxu0 0.0
  %1177 = vmatprep.subr.mxu0 0.0
  %1178 = vmatpush1.msra.mxu0 0.0
  %1179 = vmatprep.subr.mxu0 0.0
  %1180 = vmatpush1.msra.mxu0 0.0
  %1181 = vmatprep.subr.mxu0 0.0
  %1182 = vmatpush1.msra.mxu0 0.0
  %1183 = vmatprep.subr.mxu0 0.0
  %1184 = vmatpush1.msra.mxu0 0.0
  %1185 = vmatprep.subr.mxu0 0.0
  %1186 = vmatpush1.msra.mxu0 0.0
  %1187 = vmatprep.subr.mxu0 0.0
  %1188 = vmatpush1.msra.mxu0 0.0
  %1189 = vmatprep.subr.mxu0 0.0
  %1190 = vmatpush1.msra.mxu0 0.0
  %1191 = vmatprep.subr.mxu0 0.0
  %1192 = vmatpush1.msra.mxu0 0.0
  %1193 = vmatprep.subr.mxu0 0.0
  %1194 = vmatpush1.msra.mxu0 0.0
  %1195 = vmatprep.subr.mxu0 0.0
  %1196 = vmatpush1.msra.mxu0 0.0
  %1197 = vmatprep.subr.mxu0 0.0
  %1198 = vmatpush1.msra.mxu0 0.0
  %1199 = vmatprep.subr.mxu0 0.0
  %1200 = vmatpush1.msra.mxu0 0.0
  %1201 = vmatprep.subr.mxu0 0.0
  %1202 = vmatpush1.msra.mxu0 0.0
  %1203 = vmatprep.subr.mxu0 0.0
  %1204 = vmatpush1.msra.mxu0 0.0
  %1205 = vmatprep.subr.mxu0 0.0
  %1206 = vmatpush1.msra.mxu0 0.0
  %1207 = vmatprep.subr.mxu0 0.0
  %1208 = vmatpush1.msra.mxu0 0.0
  %1209 = vmatprep.subr.mxu0 0.0
  %1210 = vmatpush1.msra.mxu0 0.0
  %1211 = vmatprep.subr.mxu0 0.0
  %1212 = vmatpush1.msra.mxu0 0.0
  %1213 = vmatprep.subr.mxu0 0.0
  %1214 = vmatpush1.msra.mxu0 0.0
  %1215 = vmatprep.subr.mxu0 0.0
  %1216 = vmatpush1.msra.mxu0 0.0
  %1217 = vmatprep.subr.mxu0 0.0
  %1218 = vmatpush1.msra.mxu0 0.0
  %1219 = vmatprep.subr.mxu0 0.0
  %1220 = vmatpush1.msra.mxu0 0.0
  %1221 = vmatprep.subr.mxu0 0.0
  %1222 = vmatpush1.msra.mxu0 0.0
  %1223 = vmatprep.subr.mxu0 0.0
  %1224 = vmatpush1.msra.mxu0 0.0
  %1225 = vmatprep.subr.mxu0 0.0
  %1226 = vmatpush1.msra.mxu0 0.0
  %1227 = vmatprep.subr.mxu0 0.0
  %1228 = vmatpush1.msra.mxu0 0.0
  %1229 = vmatprep.subr.mxu0 0.0
  %1230 = vmatpush1.msra.mxu0 0.0
  %1231 = vmatprep.subr.mxu0 0.0
  %1232 = vmatpush1.msra.mxu0 0.0
  %1233 = vmatprep.mubr.f32.mxu0 0.0
  %1234 = vmatmul.mubr.f32.gmra.mrb[0].mxu0 %v1153
  %v1235 = vpop.f32.mrb[0].mxu0
  %v1236 = vadd.f32 0.0, %v1235
  %v1237 = vpop.f32.mrb[0].mxu0
  %v1238 = vadd.f32 0.0, %v1237
  %1239 = vdwg.mxu0
  %1240 = vmatprep.subr.mxu0 %v1161
  %1241 = vmatpush1.msra.mxu0 %v1159
  %1242 = vmatprep.subr.mxu0 0.0
  %1243 = vmatpush1.msra.mxu0 0.0
  %1244 = vmatprep.subr.mxu0 0.0
  %1245 = vmatpush1.msra.mxu0 0.0
  %1246 = vmatprep.subr.mxu0 0.0
  %1247 = vmatpush1.msra.mxu0 0.0
  %1248 = vmatprep.subr.mxu0 0.0
  %1249 = vmatpush1.msra.mxu0 0.0
  %1250 = vmatprep.subr.mxu0 0.0
  %1251 = vmatpush1.msra.mxu0 0.0
  %1252 = vmatprep.subr.mxu0 0.0
  %1253 = vmatpush1.msra.mxu0 0.0
  %1254 = vmatprep.subr.mxu0 0.0
  %1255 = vmatpush1.msra.mxu0 0.0
  %1256 = vmatprep.subr.mxu0 0.0
  %1257 = vmatpush1.msra.mxu0 0.0
  %1258 = vmatprep.subr.mxu0 0.0
  %1259 = vmatpush1.msra.mxu0 0.0
  %1260 = vmatprep.subr.mxu0 0.0
  %1261 = vmatpush1.msra.mxu0 0.0
  %1262 = vmatprep.subr.mxu0 0.0
  %1263 = vmatpush1.msra.mxu0 0.0
  %1264 = vmatprep.subr.mxu0 0.0
  %1265 = vmatpush1.msra.mxu0 0.0
  %1266 = vmatprep.subr.mxu0 0.0
  %1267 = vmatpush1.msra.mxu0 0.0
  %1268 = vmatprep.subr.mxu0 0.0
  %1269 = vmatpush1.msra.mxu0 0.0
  %1270 = vmatprep.subr.mxu0 0.0
  %1271 = vmatpush1.msra.mxu0 0.0
  %1272 = vmatprep.subr.mxu0 0.0
  %1273 = vmatpush1.msra.mxu0 0.0
  %1274 = vmatprep.subr.mxu0 0.0
  %1275 = vmatpush1.msra.mxu0 0.0
  %1276 = vmatprep.subr.mxu0 0.0
  %1277 = vmatpush1.msra.mxu0 0.0
  %1278 = vmatprep.subr.mxu0 0.0
  %1279 = vmatpush1.msra.mxu0 0.0
  %1280 = vmatprep.subr.mxu0 0.0
  %1281 = vmatpush1.msra.mxu0 0.0
  %1282 = vmatprep.subr.mxu0 0.0
  %1283 = vmatpush1.msra.mxu0 0.0
  %1284 = vmatprep.subr.mxu0 0.0
  %1285 = vmatpush1.msra.mxu0 0.0
  %1286 = vmatprep.subr.mxu0 0.0
  %1287 = vmatpush1.msra.mxu0 0.0
  %1288 = vmatprep.subr.mxu0 0.0
  %1289 = vmatpush1.msra.mxu0 0.0
  %1290 = vmatprep.subr.mxu0 0.0
  %1291 = vmatpush1.msra.mxu0 0.0
  %1292 = vmatprep.subr.mxu0 0.0
  %1293 = vmatpush1.msra.mxu0 0.0
  %1294 = vmatprep.subr.mxu0 0.0
  %1295 = vmatpush1.msra.mxu0 0.0
  %1296 = vmatprep.subr.mxu0 0.0
  %1297 = vmatpush1.msra.mxu0 0.0
  %1298 = vmatprep.subr.mxu0 0.0
  %1299 = vmatpush1.msra.mxu0 0.0
  %1300 = vmatprep.subr.mxu0 0.0
  %1301 = vmatpush1.msra.mxu0 0.0
  %1302 = vmatprep.subr.mxu0 0.0
  %1303 = vmatpush1.msra.mxu0 0.0
  %1304 = vmatprep.mubr.f32.mxu0 0.0
  %1305 = vmatmul.mubr.f32.gmra.mrb[0].mxu0 %v1153
  %v1306 = vpop.f32.mrb[0].mxu0
  %v1307 = vadd.f32 0.0, %v1306
  %v1308 = vpop.f32.mrb[0].mxu0
  %v1309 = vadd.f32 0.0, %v1308
  %1310 = vdwg.mxu0
  %1311 = vmatprep.subr.mxu0 %v1165
  %1312 = vmatpush1.msra.mxu0 %v1163
  %1313 = vmatprep.subr.mxu0 0.0
  %1314 = vmatpush1.msra.mxu0 0.0
  %1315 = vmatprep.subr.mxu0 0.0
  %1316 = vmatpush1.msra.mxu0 0.0
  %1317 = vmatprep.subr.mxu0 0.0
  %1318 = vmatpush1.msra.mxu0 0.0
  %1319 = vmatprep.subr.mxu0 0.0
  %1320 = vmatpush1.msra.mxu0 0.0
  %1321 = vmatprep.subr.mxu0 0.0
  %1322 = vmatpush1.msra.mxu0 0.0
  %1323 = vmatprep.subr.mxu0 0.0
  %1324 = vmatpush1.msra.mxu0 0.0
  %1325 = vmatprep.subr.mxu0 0.0
  %1326 = vmatpush1.msra.mxu0 0.0
  %1327 = vmatprep.subr.mxu0 0.0
  %1328 = vmatpush1.msra.mxu0 0.0
  %1329 = vmatprep.subr.mxu0 0.0
  %1330 = vmatpush1.msra.mxu0 0.0
  %1331 = vmatprep.subr.mxu0 0.0
  %1332 = vmatpush1.msra.mxu0 0.0
  %1333 = vmatprep.subr.mxu0 0.0
  %1334 = vmatpush1.msra.mxu0 0.0
  %1335 = vmatprep.subr.mxu0 0.0
  %1336 = vmatpush1.msra.mxu0 0.0
  %1337 = vmatprep.subr.mxu0 0.0
  %1338 = vmatpush1.msra.mxu0 0.0
  %1339 = vmatprep.subr.mxu0 0.0
  %1340 = vmatpush1.msra.mxu0 0.0
  %1341 = vmatprep.subr.mxu0 0.0
  %1342 = vmatpush1.msra.mxu0 0.0
  %1343 = vmatprep.subr.mxu0 0.0
  %1344 = vmatpush1.msra.mxu0 0.0
  %1345 = vmatprep.subr.mxu0 0.0
  %1346 = vmatpush1.msra.mxu0 0.0
  %1347 = vmatprep.subr.mxu0 0.0
  %1348 = vmatpush1.msra.mxu0 0.0
  %1349 = vmatprep.subr.mxu0 0.0
  %1350 = vmatpush1.msra.mxu0 0.0
  %1351 = vmatprep.subr.mxu0 0.0
  %1352 = vmatpush1.msra.mxu0 0.0
  %1353 = vmatprep.subr.mxu0 0.0
  %1354 = vmatpush1.msra.mxu0 0.0
  %1355 = vmatprep.subr.mxu0 0.0
  %1356 = vmatpush1.msra.mxu0 0.0
  %1357 = vmatprep.subr.mxu0 0.0
  %1358 = vmatpush1.msra.mxu0 0.0
  %1359 = vmatprep.subr.mxu0 0.0
  %1360 = vmatpush1.msra.mxu0 0.0
  %1361 = vmatprep.subr.mxu0 0.0
  %1362 = vmatpush1.msra.mxu0 0.0
  %1363 = vmatprep.subr.mxu0 0.0
  %1364 = vmatpush1.msra.mxu0 0.0
  %1365 = vmatprep.subr.mxu0 0.0
  %1366 = vmatpush1.msra.mxu0 0.0
  %1367 = vmatprep.subr.mxu0 0.0
  %1368 = vmatpush1.msra.mxu0 0.0
  %1369 = vmatprep.subr.mxu0 0.0
  %1370 = vmatpush1.msra.mxu0 0.0
  %1371 = vmatprep.subr.mxu0 0.0
  %1372 = vmatpush1.msra.mxu0 0.0
  %1373 = vmatprep.subr.mxu0 0.0
  %1374 = vmatpush1.msra.mxu0 0.0
  %1375 = vmatprep.mubr.f32.mxu0 0.0
  %1376 = vmatmul.mubr.f32.gmra.mrb[0].mxu0 %v1153
  %v1377 = vpop.f32.mrb[0].mxu0
  %v1378 = vadd.f32 0.0, %v1377
  %v1379 = vpop.f32.mrb[0].mxu0
  %v1380 = vadd.f32 0.0, %v1379
  %1381 = vdwg.mxu0
  %1382 = vmatprep.subr.mxu0 0.0
  %1383 = vmatpush1.msra.mxu0 %v1167
  %1384 = vmatprep.subr.mxu0 0.0
  %1385 = vmatpush1.msra.mxu0 0.0
  %1386 = vmatprep.subr.mxu0 0.0
  %1387 = vmatpush1.msra.mxu0 0.0
  %1388 = vmatprep.subr.mxu0 0.0
  %1389 = vmatpush1.msra.mxu0 0.0
  %1390 = vmatprep.subr.mxu0 0.0
  %1391 = vmatpush1.msra.mxu0 0.0
  %1392 = vmatprep.subr.mxu0 0.0
  %1393 = vmatpush1.msra.mxu0 0.0
  %1394 = vmatprep.subr.mxu0 0.0
  %1395 = vmatpush1.msra.mxu0 0.0
  %1396 = vmatprep.subr.mxu0 0.0
  %1397 = vmatpush1.msra.mxu0 0.0
  %1398 = vmatprep.subr.mxu0 0.0
  %1399 = vmatpush1.msra.mxu0 0.0
  %1400 = vmatprep.subr.mxu0 0.0
  %1401 = vmatpush1.msra.mxu0 0.0
  %1402 = vmatprep.subr.mxu0 0.0
  %1403 = vmatpush1.msra.mxu0 0.0
  %1404 = vmatprep.subr.mxu0 0.0
  %1405 = vmatpush1.msra.mxu0 0.0
  %1406 = vmatprep.subr.mxu0 0.0
  %1407 = vmatpush1.msra.mxu0 0.0
  %1408 = vmatprep.subr.mxu0 0.0
  %1409 = vmatpush1.msra.mxu0 0.0
  %1410 = vmatprep.subr.mxu0 0.0
  %1411 = vmatpush1.msra.mxu0 0.0
  %1412 = vmatprep.subr.mxu0 0.0
  %1413 = vmatpush1.msra.mxu0 0.0
  %1414 = vmatprep.subr.mxu0 0.0
  %1415 = vmatpush1.msra.mxu0 0.0
  %1416 = vmatprep.subr.mxu0 0.0
  %1417 = vmatpush1.msra.mxu0 0.0
  %1418 = vmatprep.subr.mxu0 0.0
  %1419 = vmatpush1.msra.mxu0 0.0
  %1420 = vmatprep.subr.mxu0 0.0
  %1421 = vmatpush1.msra.mxu0 0.0
  %1422 = vmatprep.subr.mxu0 0.0
  %1423 = vmatpush1.msra.mxu0 0.0
  %1424 = vmatprep.subr.mxu0 0.0
  %1425 = vmatpush1.msra.mxu0 0.0
  %1426 = vmatprep.subr.mxu0 0.0
  %1427 = vmatpush1.msra.mxu0 0.0
  %1428 = vmatprep.subr.mxu0 0.0
  %1429 = vmatpush1.msra.mxu0 0.0
  %1430 = vmatprep.subr.mxu0 0.0
  %1431 = vmatpush1.msra.mxu0 0.0
  %1432 = vmatprep.subr.mxu0 0.0
  %1433 = vmatpush1.msra.mxu0 0.0
  %1434 = vmatprep.subr.mxu0 0.0
  %1435 = vmatpush1.msra.mxu0 0.0
  %1436 = vmatprep.subr.mxu0 0.0
  %1437 = vmatpush1.msra.mxu0 0.0
  %1438 = vmatprep.subr.mxu0 0.0
  %1439 = vmatpush1.msra.mxu0 0.0
  %1440 = vmatprep.subr.mxu0 0.0
  %1441 = vmatpush1.msra.mxu0 0.0
  %1442 = vmatprep.subr.mxu0 0.0
  %1443 = vmatpush1.msra.mxu0 0.0
  %1444 = vmatprep.subr.mxu0 0.0
  %1445 = vmatpush1.msra.mxu0 0.0
  %1446 = vmatprep.mubr.f32.mxu0 0.0
  %1447 = vmatmul.mubr.f32.gmra.mrb[0].mxu0 %v1153
  %v1448 = vpop.f32.mrb[0].mxu0
  %v1449 = vadd.f32 0.0, %v1448
  %v1450 = vpop.f32.mrb[0].mxu0
  %1451 = vdwg.mxu0
  %v1452 = vadd.f32 %v910, %v1236
  %v1453 = vadd.f32 %v912, %v1238
  %v1454 = vadd.f32 %v981, %v1307
  %v1455 = vadd.f32 %v983, %v1309
  %v1456 = vadd.f32 %v1052, %v1378
  %v1457 = vadd.f32 %v1054, %v1380
  %v1458 = vadd.f32 %v1123, %v1449
  %s1459 = scalar_lea.vmem %s3, 12
  %v1460 = vld [vmem:[%s1459] sm:$0xf]
  %1461 = vrot.lane.b32.xlu0 %v482, 88
  %v1462 = vpop.permute.xlu0 %1461
  %1463 = vrot.lane.b32.xlu0 %v483, 88
  %v1464 = vpop.permute.xlu0 %1463
  %1465 = vrot.lane.b32.xlu0 %v484, 88
  %v1466 = vpop.permute.xlu0 %1465
  %1467 = vrot.lane.b32.xlu0 %v485, 88
  %v1468 = vpop.permute.xlu0 %1467
  %1469 = vrot.lane.b32.xlu0 %v486, 88
  %v1470 = vpop.permute.xlu0 %1469
  %1471 = vrot.lane.b32.xlu0 %v487, 88
  %v1472 = vpop.permute.xlu0 %1471
  %1473 = vrot.lane.b32.xlu0 %v488, 88
  %v1474 = vpop.permute.xlu0 %1473
  %1475 = vrot.lane.b32.xlu0 %v489, 88
  %v1476 = vpop.permute.xlu0 %1475
  %vm1477 = vcmask 719872
  %v1478 = vsel %vm1477, %v1462, %v1464
  %v1479 = vsel %vm1477, %v1464, %v1466
  %v1480 = vsel %vm1477, %v1466, %v1468
  %v1481 = vsel %vm1477, %v1468, %v1470
  %v1482 = vsel %vm1477, %v1470, %v1472
  %v1483 = vsel %vm1477, %v1472, %v1474
  %v1484 = vsel %vm1477, %v1474, %v1476
  %v1486 = vsel %vm525, %v1460, 0
  %v1488 = vsel %vm385, %v1478, 0
  %v1490 = vsel %vm385, %v1479, 0
  %v1492 = vsel %vm385, %v1480, 0
  %v1494 = vsel %vm385, %v1481, 0
  %v1496 = vsel %vm385, %v1482, 0
  %v1498 = vsel %vm385, %v1483, 0
  %v1500 = vsel %vm385, %v1484, 0
  %1502 = vmatprep.subr.mxu0 %v1490
  %1503 = vmatpush1.msra.mxu0 %v1488
  %1504 = vmatprep.subr.mxu0 0.0
  %1505 = vmatpush1.msra.mxu0 0.0
  %1506 = vmatprep.subr.mxu0 0.0
  %1507 = vmatpush1.msra.mxu0 0.0
  %1508 = vmatprep.subr.mxu0 0.0
  %1509 = vmatpush1.msra.mxu0 0.0
  %1510 = vmatprep.subr.mxu0 0.0
  %1511 = vmatpush1.msra.mxu0 0.0
  %1512 = vmatprep.subr.mxu0 0.0
  %1513 = vmatpush1.msra.mxu0 0.0
  %1514 = vmatprep.subr.mxu0 0.0
  %1515 = vmatpush1.msra.mxu0 0.0
  %1516 = vmatprep.subr.mxu0 0.0
  %1517 = vmatpush1.msra.mxu0 0.0
  %1518 = vmatprep.subr.mxu0 0.0
  %1519 = vmatpush1.msra.mxu0 0.0
  %1520 = vmatprep.subr.mxu0 0.0
  %1521 = vmatpush1.msra.mxu0 0.0
  %1522 = vmatprep.subr.mxu0 0.0
  %1523 = vmatpush1.msra.mxu0 0.0
  %1524 = vmatprep.subr.mxu0 0.0
  %1525 = vmatpush1.msra.mxu0 0.0
  %1526 = vmatprep.subr.mxu0 0.0
  %1527 = vmatpush1.msra.mxu0 0.0
  %1528 = vmatprep.subr.mxu0 0.0
  %1529 = vmatpush1.msra.mxu0 0.0
  %1530 = vmatprep.subr.mxu0 0.0
  %1531 = vmatpush1.msra.mxu0 0.0
  %1532 = vmatprep.subr.mxu0 0.0
  %1533 = vmatpush1.msra.mxu0 0.0
  %1534 = vmatprep.subr.mxu0 0.0
  %1535 = vmatpush1.msra.mxu0 0.0
  %1536 = vmatprep.subr.mxu0 0.0
  %1537 = vmatpush1.msra.mxu0 0.0
  %1538 = vmatprep.subr.mxu0 0.0
  %1539 = vmatpush1.msra.mxu0 0.0
  %1540 = vmatprep.subr.mxu0 0.0
  %1541 = vmatpush1.msra.mxu0 0.0
  %1542 = vmatprep.subr.mxu0 0.0
  %1543 = vmatpush1.msra.mxu0 0.0
  %1544 = vmatprep.subr.mxu0 0.0
  %1545 = vmatpush1.msra.mxu0 0.0
  %1546 = vmatprep.subr.mxu0 0.0
  %1547 = vmatpush1.msra.mxu0 0.0
  %1548 = vmatprep.subr.mxu0 0.0
  %1549 = vmatpush1.msra.mxu0 0.0
  %1550 = vmatprep.subr.mxu0 0.0
  %1551 = vmatpush1.msra.mxu0 0.0
  %1552 = vmatprep.subr.mxu0 0.0
  %1553 = vmatpush1.msra.mxu0 0.0
  %1554 = vmatprep.subr.mxu0 0.0
  %1555 = vmatpush1.msra.mxu0 0.0
  %1556 = vmatprep.subr.mxu0 0.0
  %1557 = vmatpush1.msra.mxu0 0.0
  %1558 = vmatprep.subr.mxu0 0.0
  %1559 = vmatpush1.msra.mxu0 0.0
  %1560 = vmatprep.subr.mxu0 0.0
  %1561 = vmatpush1.msra.mxu0 0.0
  %1562 = vmatprep.subr.mxu0 0.0
  %1563 = vmatpush1.msra.mxu0 0.0
  %1564 = vmatprep.subr.mxu0 0.0
  %1565 = vmatpush1.msra.mxu0 0.0
  %1566 = vmatprep.mubr.f32.mxu0 0.0
  %1567 = vmatmul.mubr.f32.gmra.mrb[0].mxu0 %v1486
  %v1568 = vpop.f32.mrb[0].mxu0
  %v1569 = vadd.f32 0.0, %v1568
  %v1570 = vpop.f32.mrb[0].mxu0
  %v1571 = vadd.f32 0.0, %v1570
  %1572 = vdwg.mxu0
  %1573 = vmatprep.subr.mxu0 %v1494
  %1574 = vmatpush1.msra.mxu0 %v1492
  %1575 = vmatprep.subr.mxu0 0.0
  %1576 = vmatpush1.msra.mxu0 0.0
  %1577 = vmatprep.subr.mxu0 0.0
  %1578 = vmatpush1.msra.mxu0 0.0
  %1579 = vmatprep.subr.mxu0 0.0
  %1580 = vmatpush1.msra.mxu0 0.0
  %1581 = vmatprep.subr.mxu0 0.0
  %1582 = vmatpush1.msra.mxu0 0.0
  %1583 = vmatprep.subr.mxu0 0.0
  %1584 = vmatpush1.msra.mxu0 0.0
  %1585 = vmatprep.subr.mxu0 0.0
  %1586 = vmatpush1.msra.mxu0 0.0
  %1587 = vmatprep.subr.mxu0 0.0
  %1588 = vmatpush1.msra.mxu0 0.0
  %1589 = vmatprep.subr.mxu0 0.0
  %1590 = vmatpush1.msra.mxu0 0.0
  %1591 = vmatprep.subr.mxu0 0.0
  %1592 = vmatpush1.msra.mxu0 0.0
  %1593 = vmatprep.subr.mxu0 0.0
  %1594 = vmatpush1.msra.mxu0 0.0
  %1595 = vmatprep.subr.mxu0 0.0
  %1596 = vmatpush1.msra.mxu0 0.0
  %1597 = vmatprep.subr.mxu0 0.0
  %1598 = vmatpush1.msra.mxu0 0.0
  %1599 = vmatprep.subr.mxu0 0.0
  %1600 = vmatpush1.msra.mxu0 0.0
  %1601 = vmatprep.subr.mxu0 0.0
  %1602 = vmatpush1.msra.mxu0 0.0
  %1603 = vmatprep.subr.mxu0 0.0
  %1604 = vmatpush1.msra.mxu0 0.0
  %1605 = vmatprep.subr.mxu0 0.0
  %1606 = vmatpush1.msra.mxu0 0.0
  %1607 = vmatprep.subr.mxu0 0.0
  %1608 = vmatpush1.msra.mxu0 0.0
  %1609 = vmatprep.subr.mxu0 0.0
  %1610 = vmatpush1.msra.mxu0 0.0
  %1611 = vmatprep.subr.mxu0 0.0
  %1612 = vmatpush1.msra.mxu0 0.0
  %1613 = vmatprep.subr.mxu0 0.0
  %1614 = vmatpush1.msra.mxu0 0.0
  %1615 = vmatprep.subr.mxu0 0.0
  %1616 = vmatpush1.msra.mxu0 0.0
  %1617 = vmatprep.subr.mxu0 0.0
  %1618 = vmatpush1.msra.mxu0 0.0
  %1619 = vmatprep.subr.mxu0 0.0
  %1620 = vmatpush1.msra.mxu0 0.0
  %1621 = vmatprep.subr.mxu0 0.0
  %1622 = vmatpush1.msra.mxu0 0.0
  %1623 = vmatprep.subr.mxu0 0.0
  %1624 = vmatpush1.msra.mxu0 0.0
  %1625 = vmatprep.subr.mxu0 0.0
  %1626 = vmatpush1.msra.mxu0 0.0
  %1627 = vmatprep.subr.mxu0 0.0
  %1628 = vmatpush1.msra.mxu0 0.0
  %1629 = vmatprep.subr.mxu0 0.0
  %1630 = vmatpush1.msra.mxu0 0.0
  %1631 = vmatprep.subr.mxu0 0.0
  %1632 = vmatpush1.msra.mxu0 0.0
  %1633 = vmatprep.subr.mxu0 0.0
  %1634 = vmatpush1.msra.mxu0 0.0
  %1635 = vmatprep.subr.mxu0 0.0
  %1636 = vmatpush1.msra.mxu0 0.0
  %1637 = vmatprep.mubr.f32.mxu0 0.0
  %1638 = vmatmul.mubr.f32.gmra.mrb[0].mxu0 %v1486
  %v1639 = vpop.f32.mrb[0].mxu0
  %v1640 = vadd.f32 0.0, %v1639
  %v1641 = vpop.f32.mrb[0].mxu0
  %v1642 = vadd.f32 0.0, %v1641
  %1643 = vdwg.mxu0
  %1644 = vmatprep.subr.mxu0 %v1498
  %1645 = vmatpush1.msra.mxu0 %v1496
  %1646 = vmatprep.subr.mxu0 0.0
  %1647 = vmatpush1.msra.mxu0 0.0
  %1648 = vmatprep.subr.mxu0 0.0
  %1649 = vmatpush1.msra.mxu0 0.0
  %1650 = vmatprep.subr.mxu0 0.0
  %1651 = vmatpush1.msra.mxu0 0.0
  %1652 = vmatprep.subr.mxu0 0.0
  %1653 = vmatpush1.msra.mxu0 0.0
  %1654 = vmatprep.subr.mxu0 0.0
  %1655 = vmatpush1.msra.mxu0 0.0
  %1656 = vmatprep.subr.mxu0 0.0
  %1657 = vmatpush1.msra.mxu0 0.0
  %1658 = vmatprep.subr.mxu0 0.0
  %1659 = vmatpush1.msra.mxu0 0.0
  %1660 = vmatprep.subr.mxu0 0.0
  %1661 = vmatpush1.msra.mxu0 0.0
  %1662 = vmatprep.subr.mxu0 0.0
  %1663 = vmatpush1.msra.mxu0 0.0
  %1664 = vmatprep.subr.mxu0 0.0
  %1665 = vmatpush1.msra.mxu0 0.0
  %1666 = vmatprep.subr.mxu0 0.0
  %1667 = vmatpush1.msra.mxu0 0.0
  %1668 = vmatprep.subr.mxu0 0.0
  %1669 = vmatpush1.msra.mxu0 0.0
  %1670 = vmatprep.subr.mxu0 0.0
  %1671 = vmatpush1.msra.mxu0 0.0
  %1672 = vmatprep.subr.mxu0 0.0
  %1673 = vmatpush1.msra.mxu0 0.0
  %1674 = vmatprep.subr.mxu0 0.0
  %1675 = vmatpush1.msra.mxu0 0.0
  %1676 = vmatprep.subr.mxu0 0.0
  %1677 = vmatpush1.msra.mxu0 0.0
  %1678 = vmatprep.subr.mxu0 0.0
  %1679 = vmatpush1.msra.mxu0 0.0
  %1680 = vmatprep.subr.mxu0 0.0
  %1681 = vmatpush1.msra.mxu0 0.0
  %1682 = vmatprep.subr.mxu0 0.0
  %1683 = vmatpush1.msra.mxu0 0.0
  %1684 = vmatprep.subr.mxu0 0.0
  %1685 = vmatpush1.msra.mxu0 0.0
  %1686 = vmatprep.subr.mxu0 0.0
  %1687 = vmatpush1.msra.mxu0 0.0
  %1688 = vmatprep.subr.mxu0 0.0
  %1689 = vmatpush1.msra.mxu0 0.0
  %1690 = vmatprep.subr.mxu0 0.0
  %1691 = vmatpush1.msra.mxu0 0.0
  %1692 = vmatprep.subr.mxu0 0.0
  %1693 = vmatpush1.msra.mxu0 0.0
  %1694 = vmatprep.subr.mxu0 0.0
  %1695 = vmatpush1.msra.mxu0 0.0
  %1696 = vmatprep.subr.mxu0 0.0
  %1697 = vmatpush1.msra.mxu0 0.0
  %1698 = vmatprep.subr.mxu0 0.0
  %1699 = vmatpush1.msra.mxu0 0.0
  %1700 = vmatprep.subr.mxu0 0.0
  %1701 = vmatpush1.msra.mxu0 0.0
  %1702 = vmatprep.subr.mxu0 0.0
  %1703 = vmatpush1.msra.mxu0 0.0
  %1704 = vmatprep.subr.mxu0 0.0
  %1705 = vmatpush1.msra.mxu0 0.0
  %1706 = vmatprep.subr.mxu0 0.0
  %1707 = vmatpush1.msra.mxu0 0.0
  %1708 = vmatprep.mubr.f32.mxu0 0.0
  %1709 = vmatmul.mubr.f32.gmra.mrb[0].mxu0 %v1486
  %v1710 = vpop.f32.mrb[0].mxu0
  %v1711 = vadd.f32 0.0, %v1710
  %v1712 = vpop.f32.mrb[0].mxu0
  %v1713 = vadd.f32 0.0, %v1712
  %1714 = vdwg.mxu0
  %1715 = vmatprep.subr.mxu0 0.0
  %1716 = vmatpush1.msra.mxu0 %v1500
  %1717 = vmatprep.subr.mxu0 0.0
  %1718 = vmatpush1.msra.mxu0 0.0
  %1719 = vmatprep.subr.mxu0 0.0
  %1720 = vmatpush1.msra.mxu0 0.0
  %1721 = vmatprep.subr.mxu0 0.0
  %1722 = vmatpush1.msra.mxu0 0.0
  %1723 = vmatprep.subr.mxu0 0.0
  %1724 = vmatpush1.msra.mxu0 0.0
  %1725 = vmatprep.subr.mxu0 0.0
  %1726 = vmatpush1.msra.mxu0 0.0
  %1727 = vmatprep.subr.mxu0 0.0
  %1728 = vmatpush1.msra.mxu0 0.0
  %1729 = vmatprep.subr.mxu0 0.0
  %1730 = vmatpush1.msra.mxu0 0.0
  %1731 = vmatprep.subr.mxu0 0.0
  %1732 = vmatpush1.msra.mxu0 0.0
  %1733 = vmatprep.subr.mxu0 0.0
  %1734 = vmatpush1.msra.mxu0 0.0
  %1735 = vmatprep.subr.mxu0 0.0
  %1736 = vmatpush1.msra.mxu0 0.0
  %1737 = vmatprep.subr.mxu0 0.0
  %1738 = vmatpush1.msra.mxu0 0.0
  %1739 = vmatprep.subr.mxu0 0.0
  %1740 = vmatpush1.msra.mxu0 0.0
  %1741 = vmatprep.subr.mxu0 0.0
  %1742 = vmatpush1.msra.mxu0 0.0
  %1743 = vmatprep.subr.mxu0 0.0
  %1744 = vmatpush1.msra.mxu0 0.0
  %1745 = vmatprep.subr.mxu0 0.0
  %1746 = vmatpush1.msra.mxu0 0.0
  %1747 = vmatprep.subr.mxu0 0.0
  %1748 = vmatpush1.msra.mxu0 0.0
  %1749 = vmatprep.subr.mxu0 0.0
  %1750 = vmatpush1.msra.mxu0 0.0
  %1751 = vmatprep.subr.mxu0 0.0
  %1752 = vmatpush1.msra.mxu0 0.0
  %1753 = vmatprep.subr.mxu0 0.0
  %1754 = vmatpush1.msra.mxu0 0.0
  %1755 = vmatprep.subr.mxu0 0.0
  %1756 = vmatpush1.msra.mxu0 0.0
  %1757 = vmatprep.subr.mxu0 0.0
  %1758 = vmatpush1.msra.mxu0 0.0
  %1759 = vmatprep.subr.mxu0 0.0
  %1760 = vmatpush1.msra.mxu0 0.0
  %1761 = vmatprep.subr.mxu0 0.0
  %1762 = vmatpush1.msra.mxu0 0.0
  %1763 = vmatprep.subr.mxu0 0.0
  %1764 = vmatpush1.msra.mxu0 0.0
  %1765 = vmatprep.subr.mxu0 0.0
  %1766 = vmatpush1.msra.mxu0 0.0
  %1767 = vmatprep.subr.mxu0 0.0
  %1768 = vmatpush1.msra.mxu0 0.0
  %1769 = vmatprep.subr.mxu0 0.0
  %1770 = vmatpush1.msra.mxu0 0.0
  %1771 = vmatprep.subr.mxu0 0.0
  %1772 = vmatpush1.msra.mxu0 0.0
  %1773 = vmatprep.subr.mxu0 0.0
  %1774 = vmatpush1.msra.mxu0 0.0
  %1775 = vmatprep.subr.mxu0 0.0
  %1776 = vmatpush1.msra.mxu0 0.0
  %1777 = vmatprep.subr.mxu0 0.0
  %1778 = vmatpush1.msra.mxu0 0.0
  %1779 = vmatprep.mubr.f32.mxu0 0.0
  %1780 = vmatmul.mubr.f32.gmra.mrb[0].mxu0 %v1486
  %v1781 = vpop.f32.mrb[0].mxu0
  %v1782 = vadd.f32 0.0, %v1781
  %v1783 = vpop.f32.mrb[0].mxu0
  %1784 = vdwg.mxu0
  %v1785 = vadd.f32 %v1452, %v1569
  %v1786 = vadd.f32 %v1453, %v1571
  %v1787 = vadd.f32 %v1454, %v1640
  %v1788 = vadd.f32 %v1455, %v1642
  %v1789 = vadd.f32 %v1456, %v1711
  %v1790 = vadd.f32 %v1457, %v1713
  %v1791 = vadd.f32 %v1458, %v1782
  %s1792 = scalar_lea.vmem %s3, 16
  %v1793 = vld [vmem:[%s1792] sm:$0xf]
  %1794 = vrot.lane.b32.xlu0 %v482, 86
  %v1795 = vpop.permute.xlu0 %1794
  %1796 = vrot.lane.b32.xlu0 %v483, 86
  %v1797 = vpop.permute.xlu0 %1796
  %1798 = vrot.lane.b32.xlu0 %v484, 86
  %v1799 = vpop.permute.xlu0 %1798
  %1800 = vrot.lane.b32.xlu0 %v485, 86
  %v1801 = vpop.permute.xlu0 %1800
  %1802 = vrot.lane.b32.xlu0 %v486, 86
  %v1803 = vpop.permute.xlu0 %1802
  %1804 = vrot.lane.b32.xlu0 %v487, 86
  %v1805 = vpop.permute.xlu0 %1804
  %1806 = vrot.lane.b32.xlu0 %v488, 86
  %v1807 = vpop.permute.xlu0 %1806
  %1808 = vrot.lane.b32.xlu0 %v489, 86
  %v1809 = vpop.permute.xlu0 %1808
  %vm1810 = vcmask 703488
  %v1811 = vsel %vm1810, %v1795, %v1797
  %v1812 = vsel %vm1810, %v1797, %v1799
  %v1813 = vsel %vm1810, %v1799, %v1801
  %v1814 = vsel %vm1810, %v1801, %v1803
  %v1815 = vsel %vm1810, %v1803, %v1805
  %v1816 = vsel %vm1810, %v1805, %v1807
  %v1817 = vsel %vm1810, %v1807, %v1809
  %v1819 = vsel %vm525, %v1793, 0
  %v1821 = vsel %vm385, %v1811, 0
  %v1823 = vsel %vm385, %v1812, 0
  %v1825 = vsel %vm385, %v1813, 0
  %v1827 = vsel %vm385, %v1814, 0
  %v1829 = vsel %vm385, %v1815, 0
  %v1831 = vsel %vm385, %v1816, 0
  %v1833 = vsel %vm385, %v1817, 0
  %1835 = vmatprep.subr.mxu0 %v1823
  %1836 = vmatpush1.msra.mxu0 %v1821
  %1837 = vmatprep.subr.mxu0 0.0
  %1838 = vmatpush1.msra.mxu0 0.0
  %1839 = vmatprep.subr.mxu0 0.0
  %1840 = vmatpush1.msra.mxu0 0.0
  %1841 = vmatprep.subr.mxu0 0.0
  %1842 = vmatpush1.msra.mxu0 0.0
  %1843 = vmatprep.subr.mxu0 0.0
  %1844 = vmatpush1.msra.mxu0 0.0
  %1845 = vmatprep.subr.mxu0 0.0
  %1846 = vmatpush1.msra.mxu0 0.0
  %1847 = vmatprep.subr.mxu0 0.0
  %1848 = vmatpush1.msra.mxu0 0.0
  %1849 = vmatprep.subr.mxu0 0.0
  %1850 = vmatpush1.msra.mxu0 0.0
  %1851 = vmatprep.subr.mxu0 0.0
  %1852 = vmatpush1.msra.mxu0 0.0
  %1853 = vmatprep.subr.mxu0 0.0
  %1854 = vmatpush1.msra.mxu0 0.0
  %1855 = vmatprep.subr.mxu0 0.0
  %1856 = vmatpush1.msra.mxu0 0.0
  %1857 = vmatprep.subr.mxu0 0.0
  %1858 = vmatpush1.msra.mxu0 0.0
  %1859 = vmatprep.subr.mxu0 0.0
  %1860 = vmatpush1.msra.mxu0 0.0
  %1861 = vmatprep.subr.mxu0 0.0
  %1862 = vmatpush1.msra.mxu0 0.0
  %1863 = vmatprep.subr.mxu0 0.0
  %1864 = vmatpush1.msra.mxu0 0.0
  %1865 = vmatprep.subr.mxu0 0.0
  %1866 = vmatpush1.msra.mxu0 0.0
  %1867 = vmatprep.subr.mxu0 0.0
  %1868 = vmatpush1.msra.mxu0 0.0
  %1869 = vmatprep.subr.mxu0 0.0
  %1870 = vmatpush1.msra.mxu0 0.0
  %1871 = vmatprep.subr.mxu0 0.0
  %1872 = vmatpush1.msra.mxu0 0.0
  %1873 = vmatprep.subr.mxu0 0.0
  %1874 = vmatpush1.msra.mxu0 0.0
  %1875 = vmatprep.subr.mxu0 0.0
  %1876 = vmatpush1.msra.mxu0 0.0
  %1877 = vmatprep.subr.mxu0 0.0
  %1878 = vmatpush1.msra.mxu0 0.0
  %1879 = vmatprep.subr.mxu0 0.0
  %1880 = vmatpush1.msra.mxu0 0.0
  %1881 = vmatprep.subr.mxu0 0.0
  %1882 = vmatpush1.msra.mxu0 0.0
  %1883 = vmatprep.subr.mxu0 0.0
  %1884 = vmatpush1.msra.mxu0 0.0
  %1885 = vmatprep.subr.mxu0 0.0
  %1886 = vmatpush1.msra.mxu0 0.0
  %1887 = vmatprep.subr.mxu0 0.0
  %1888 = vmatpush1.msra.mxu0 0.0
  %1889 = vmatprep.subr.mxu0 0.0
  %1890 = vmatpush1.msra.mxu0 0.0
  %1891 = vmatprep.subr.mxu0 0.0
  %1892 = vmatpush1.msra.mxu0 0.0
  %1893 = vmatprep.subr.mxu0 0.0
  %1894 = vmatpush1.msra.mxu0 0.0
  %1895 = vmatprep.subr.mxu0 0.0
  %1896 = vmatpush1.msra.mxu0 0.0
  %1897 = vmatprep.subr.mxu0 0.0
  %1898 = vmatpush1.msra.mxu0 0.0
  %1899 = vmatprep.mubr.f32.mxu0 0.0
  %1900 = vmatmul.mubr.f32.gmra.mrb[0].mxu0 %v1819
  %v1901 = vpop.f32.mrb[0].mxu0
  %v1902 = vadd.f32 0.0, %v1901
  %v1903 = vpop.f32.mrb[0].mxu0
  %v1904 = vadd.f32 0.0, %v1903
  %1905 = vdwg.mxu0
  %1906 = vmatprep.subr.mxu0 %v1827
  %1907 = vmatpush1.msra.mxu0 %v1825
  %1908 = vmatprep.subr.mxu0 0.0
  %1909 = vmatpush1.msra.mxu0 0.0
  %1910 = vmatprep.subr.mxu0 0.0
  %1911 = vmatpush1.msra.mxu0 0.0
  %1912 = vmatprep.subr.mxu0 0.0
  %1913 = vmatpush1.msra.mxu0 0.0
  %1914 = vmatprep.subr.mxu0 0.0
  %1915 = vmatpush1.msra.mxu0 0.0
  %1916 = vmatprep.subr.mxu0 0.0
  %1917 = vmatpush1.msra.mxu0 0.0
  %1918 = vmatprep.subr.mxu0 0.0
  %1919 = vmatpush1.msra.mxu0 0.0
  %1920 = vmatprep.subr.mxu0 0.0
  %1921 = vmatpush1.msra.mxu0 0.0
  %1922 = vmatprep.subr.mxu0 0.0
  %1923 = vmatpush1.msra.mxu0 0.0
  %1924 = vmatprep.subr.mxu0 0.0
  %1925 = vmatpush1.msra.mxu0 0.0
  %1926 = vmatprep.subr.mxu0 0.0
  %1927 = vmatpush1.msra.mxu0 0.0
  %1928 = vmatprep.subr.mxu0 0.0
  %1929 = vmatpush1.msra.mxu0 0.0
  %1930 = vmatprep.subr.mxu0 0.0
  %1931 = vmatpush1.msra.mxu0 0.0
  %1932 = vmatprep.subr.mxu0 0.0
  %1933 = vmatpush1.msra.mxu0 0.0
  %1934 = vmatprep.subr.mxu0 0.0
  %1935 = vmatpush1.msra.mxu0 0.0
  %1936 = vmatprep.subr.mxu0 0.0
  %1937 = vmatpush1.msra.mxu0 0.0
  %1938 = vmatprep.subr.mxu0 0.0
  %1939 = vmatpush1.msra.mxu0 0.0
  %1940 = vmatprep.subr.mxu0 0.0
  %1941 = vmatpush1.msra.mxu0 0.0
  %1942 = vmatprep.subr.mxu0 0.0
  %1943 = vmatpush1.msra.mxu0 0.0
  %1944 = vmatprep.subr.mxu0 0.0
  %1945 = vmatpush1.msra.mxu0 0.0
  %1946 = vmatprep.subr.mxu0 0.0
  %1947 = vmatpush1.msra.mxu0 0.0
  %1948 = vmatprep.subr.mxu0 0.0
  %1949 = vmatpush1.msra.mxu0 0.0
  %1950 = vmatprep.subr.mxu0 0.0
  %1951 = vmatpush1.msra.mxu0 0.0
  %1952 = vmatprep.subr.mxu0 0.0
  %1953 = vmatpush1.msra.mxu0 0.0
  %1954 = vmatprep.subr.mxu0 0.0
  %1955 = vmatpush1.msra.mxu0 0.0
  %1956 = vmatprep.subr.mxu0 0.0
  %1957 = vmatpush1.msra.mxu0 0.0
  %1958 = vmatprep.subr.mxu0 0.0
  %1959 = vmatpush1.msra.mxu0 0.0
  %1960 = vmatprep.subr.mxu0 0.0
  %1961 = vmatpush1.msra.mxu0 0.0
  %1962 = vmatprep.subr.mxu0 0.0
  %1963 = vmatpush1.msra.mxu0 0.0
  %1964 = vmatprep.subr.mxu0 0.0
  %1965 = vmatpush1.msra.mxu0 0.0
  %1966 = vmatprep.subr.mxu0 0.0
  %1967 = vmatpush1.msra.mxu0 0.0
  %1968 = vmatprep.subr.mxu0 0.0
  %1969 = vmatpush1.msra.mxu0 0.0
  %1970 = vmatprep.mubr.f32.mxu0 0.0
  %1971 = vmatmul.mubr.f32.gmra.mrb[0].mxu0 %v1819
  %v1972 = vpop.f32.mrb[0].mxu0
  %v1973 = vadd.f32 0.0, %v1972
  %v1974 = vpop.f32.mrb[0].mxu0
  %v1975 = vadd.f32 0.0, %v1974
  %1976 = vdwg.mxu0
  %1977 = vmatprep.subr.mxu0 %v1831
  %1978 = vmatpush1.msra.mxu0 %v1829
  %1979 = vmatprep.subr.mxu0 0.0
  %1980 = vmatpush1.msra.mxu0 0.0
  %1981 = vmatprep.subr.mxu0 0.0
  %1982 = vmatpush1.msra.mxu0 0.0
  %1983 = vmatprep.subr.mxu0 0.0
  %1984 = vmatpush1.msra.mxu0 0.0
  %1985 = vmatprep.subr.mxu0 0.0
  %1986 = vmatpush1.msra.mxu0 0.0
  %1987 = vmatprep.subr.mxu0 0.0
  %1988 = vmatpush1.msra.mxu0 0.0
  %1989 = vmatprep.subr.mxu0 0.0
  %1990 = vmatpush1.msra.mxu0 0.0
  %1991 = vmatprep.subr.mxu0 0.0
  %1992 = vmatpush1.msra.mxu0 0.0
  %1993 = vmatprep.subr.mxu0 0.0
  %1994 = vmatpush1.msra.mxu0 0.0
  %1995 = vmatprep.subr.mxu0 0.0
  %1996 = vmatpush1.msra.mxu0 0.0
  %1997 = vmatprep.subr.mxu0 0.0
  %1998 = vmatpush1.msra.mxu0 0.0
  %1999 = vmatprep.subr.mxu0 0.0
  %2000 = vmatpush1.msra.mxu0 0.0
  %2001 = vmatprep.subr.mxu0 0.0
  %2002 = vmatpush1.msra.mxu0 0.0
  %2003 = vmatprep.subr.mxu0 0.0
  %2004 = vmatpush1.msra.mxu0 0.0
  %2005 = vmatprep.subr.mxu0 0.0
  %2006 = vmatpush1.msra.mxu0 0.0
  %2007 = vmatprep.subr.mxu0 0.0
  %2008 = vmatpush1.msra.mxu0 0.0
  %2009 = vmatprep.subr.mxu0 0.0
  %2010 = vmatpush1.msra.mxu0 0.0
  %2011 = vmatprep.subr.mxu0 0.0
  %2012 = vmatpush1.msra.mxu0 0.0
  %2013 = vmatprep.subr.mxu0 0.0
  %2014 = vmatpush1.msra.mxu0 0.0
  %2015 = vmatprep.subr.mxu0 0.0
  %2016 = vmatpush1.msra.mxu0 0.0
  %2017 = vmatprep.subr.mxu0 0.0
  %2018 = vmatpush1.msra.mxu0 0.0
  %2019 = vmatprep.subr.mxu0 0.0
  %2020 = vmatpush1.msra.mxu0 0.0
  %2021 = vmatprep.subr.mxu0 0.0
  %2022 = vmatpush1.msra.mxu0 0.0
  %2023 = vmatprep.subr.mxu0 0.0
  %2024 = vmatpush1.msra.mxu0 0.0
  %2025 = vmatprep.subr.mxu0 0.0
  %2026 = vmatpush1.msra.mxu0 0.0
  %2027 = vmatprep.subr.mxu0 0.0
  %2028 = vmatpush1.msra.mxu0 0.0
  %2029 = vmatprep.subr.mxu0 0.0
  %2030 = vmatpush1.msra.mxu0 0.0
  %2031 = vmatprep.subr.mxu0 0.0
  %2032 = vmatpush1.msra.mxu0 0.0
  %2033 = vmatprep.subr.mxu0 0.0
  %2034 = vmatpush1.msra.mxu0 0.0
  %2035 = vmatprep.subr.mxu0 0.0
  %2036 = vmatpush1.msra.mxu0 0.0
  %2037 = vmatprep.subr.mxu0 0.0
  %2038 = vmatpush1.msra.mxu0 0.0
  %2039 = vmatprep.subr.mxu0 0.0
  %2040 = vmatpush1.msra.mxu0 0.0
  %2041 = vmatprep.mubr.f32.mxu0 0.0
  %2042 = vmatmul.mubr.f32.gmra.mrb[0].mxu0 %v1819
  %v2043 = vpop.f32.mrb[0].mxu0
  %v2044 = vadd.f32 0.0, %v2043
  %v2045 = vpop.f32.mrb[0].mxu0
  %v2046 = vadd.f32 0.0, %v2045
  %2047 = vdwg.mxu0
  %2048 = vmatprep.subr.mxu0 0.0
  %2049 = vmatpush1.msra.mxu0 %v1833
  %2050 = vmatprep.subr.mxu0 0.0
  %2051 = vmatpush1.msra.mxu0 0.0
  %2052 = vmatprep.subr.mxu0 0.0
  %2053 = vmatpush1.msra.mxu0 0.0
  %2054 = vmatprep.subr.mxu0 0.0
  %2055 = vmatpush1.msra.mxu0 0.0
  %2056 = vmatprep.subr.mxu0 0.0
  %2057 = vmatpush1.msra.mxu0 0.0
  %2058 = vmatprep.subr.mxu0 0.0
  %2059 = vmatpush1.msra.mxu0 0.0
  %2060 = vmatprep.subr.mxu0 0.0
  %2061 = vmatpush1.msra.mxu0 0.0
  %2062 = vmatprep.subr.mxu0 0.0
  %2063 = vmatpush1.msra.mxu0 0.0
  %2064 = vmatprep.subr.mxu0 0.0
  %2065 = vmatpush1.msra.mxu0 0.0
  %2066 = vmatprep.subr.mxu0 0.0
  %2067 = vmatpush1.msra.mxu0 0.0
  %2068 = vmatprep.subr.mxu0 0.0
  %2069 = vmatpush1.msra.mxu0 0.0
  %2070 = vmatprep.subr.mxu0 0.0
  %2071 = vmatpush1.msra.mxu0 0.0
  %2072 = vmatprep.subr.mxu0 0.0
  %2073 = vmatpush1.msra.mxu0 0.0
  %2074 = vmatprep.subr.mxu0 0.0
  %2075 = vmatpush1.msra.mxu0 0.0
  %2076 = vmatprep.subr.mxu0 0.0
  %2077 = vmatpush1.msra.mxu0 0.0
  %2078 = vmatprep.subr.mxu0 0.0
  %2079 = vmatpush1.msra.mxu0 0.0
  %2080 = vmatprep.subr.mxu0 0.0
  %2081 = vmatpush1.msra.mxu0 0.0
  %2082 = vmatprep.subr.mxu0 0.0
  %2083 = vmatpush1.msra.mxu0 0.0
  %2084 = vmatprep.subr.mxu0 0.0
  %2085 = vmatpush1.msra.mxu0 0.0
  %2086 = vmatprep.subr.mxu0 0.0
  %2087 = vmatpush1.msra.mxu0 0.0
  %2088 = vmatprep.subr.mxu0 0.0
  %2089 = vmatpush1.msra.mxu0 0.0
  %2090 = vmatprep.subr.mxu0 0.0
  %2091 = vmatpush1.msra.mxu0 0.0
  %2092 = vmatprep.subr.mxu0 0.0
  %2093 = vmatpush1.msra.mxu0 0.0
  %2094 = vmatprep.subr.mxu0 0.0
  %2095 = vmatpush1.msra.mxu0 0.0
  %2096 = vmatprep.subr.mxu0 0.0
  %2097 = vmatpush1.msra.mxu0 0.0
  %2098 = vmatprep.subr.mxu0 0.0
  %2099 = vmatpush1.msra.mxu0 0.0
  %2100 = vmatprep.subr.mxu0 0.0
  %2101 = vmatpush1.msra.mxu0 0.0
  %2102 = vmatprep.subr.mxu0 0.0
  %2103 = vmatpush1.msra.mxu0 0.0
  %2104 = vmatprep.subr.mxu0 0.0
  %2105 = vmatpush1.msra.mxu0 0.0
  %2106 = vmatprep.subr.mxu0 0.0
  %2107 = vmatpush1.msra.mxu0 0.0
  %2108 = vmatprep.subr.mxu0 0.0
  %2109 = vmatpush1.msra.mxu0 0.0
  %2110 = vmatprep.subr.mxu0 0.0
  %2111 = vmatpush1.msra.mxu0 0.0
  %2112 = vmatprep.mubr.f32.mxu0 0.0
  %2113 = vmatmul.mubr.f32.gmra.mrb[0].mxu0 %v1819
  %v2114 = vpop.f32.mrb[0].mxu0
  %v2115 = vadd.f32 0.0, %v2114
  %v2116 = vpop.f32.mrb[0].mxu0
  %2117 = vdwg.mxu0
  %v2118 = vadd.f32 %v1785, %v1902
  %v2119 = vadd.f32 %v1786, %v1904
  %v2120 = vadd.f32 %v1787, %v1973
  %v2121 = vadd.f32 %v1788, %v1975
  %v2122 = vadd.f32 %v1789, %v2044
  %v2123 = vadd.f32 %v1790, %v2046
  %v2124 = vadd.f32 %v1791, %v2115
  %s2125 = scalar_lea.vmem %s3, 20
  %v2126 = vld [vmem:[%s2125] sm:$0xf]
  %2127 = vrot.lane.b32.xlu0 %v482, 84
  %v2128 = vpop.permute.xlu0 %2127
  %2129 = vrot.lane.b32.xlu0 %v483, 84
  %v2130 = vpop.permute.xlu0 %2129
  %2131 = vrot.lane.b32.xlu0 %v484, 84
  %v2132 = vpop.permute.xlu0 %2131
  %2133 = vrot.lane.b32.xlu0 %v485, 84
  %v2134 = vpop.permute.xlu0 %2133
  %2135 = vrot.lane.b32.xlu0 %v486, 84
  %v2136 = vpop.permute.xlu0 %2135
  %2137 = vrot.lane.b32.xlu0 %v487, 84
  %v2138 = vpop.permute.xlu0 %2137
  %2139 = vrot.lane.b32.xlu0 %v488, 84
  %v2140 = vpop.permute.xlu0 %2139
  %2141 = vrot.lane.b32.xlu0 %v489, 84
  %v2142 = vpop.permute.xlu0 %2141
  %vm2143 = vcmask 687104
  %v2144 = vsel %vm2143, %v2128, %v2130
  %v2145 = vsel %vm2143, %v2130, %v2132
  %v2146 = vsel %vm2143, %v2132, %v2134
  %v2147 = vsel %vm2143, %v2134, %v2136
  %v2148 = vsel %vm2143, %v2136, %v2138
  %v2149 = vsel %vm2143, %v2138, %v2140
  %v2150 = vsel %vm2143, %v2140, %v2142
  %v2152 = vsel %vm525, %v2126, 0
  %v2154 = vsel %vm385, %v2144, 0
  %v2156 = vsel %vm385, %v2145, 0
  %v2158 = vsel %vm385, %v2146, 0
  %v2160 = vsel %vm385, %v2147, 0
  %v2162 = vsel %vm385, %v2148, 0
  %v2164 = vsel %vm385, %v2149, 0
  %v2166 = vsel %vm385, %v2150, 0
  %2168 = vmatprep.subr.mxu0 %v2156
  %2169 = vmatpush1.msra.mxu0 %v2154
  %2170 = vmatprep.subr.mxu0 0.0
  %2171 = vmatpush1.msra.mxu0 0.0
  %2172 = vmatprep.subr.mxu0 0.0
  %2173 = vmatpush1.msra.mxu0 0.0
  %2174 = vmatprep.subr.mxu0 0.0
  %2175 = vmatpush1.msra.mxu0 0.0
  %2176 = vmatprep.subr.mxu0 0.0
  %2177 = vmatpush1.msra.mxu0 0.0
  %2178 = vmatprep.subr.mxu0 0.0
  %2179 = vmatpush1.msra.mxu0 0.0
  %2180 = vmatprep.subr.mxu0 0.0
  %2181 = vmatpush1.msra.mxu0 0.0
  %2182 = vmatprep.subr.mxu0 0.0
  %2183 = vmatpush1.msra.mxu0 0.0
  %2184 = vmatprep.subr.mxu0 0.0
  %2185 = vmatpush1.msra.mxu0 0.0
  %2186 = vmatprep.subr.mxu0 0.0
  %2187 = vmatpush1.msra.mxu0 0.0
  %2188 = vmatprep.subr.mxu0 0.0
  %2189 = vmatpush1.msra.mxu0 0.0
  %2190 = vmatprep.subr.mxu0 0.0
  %2191 = vmatpush1.msra.mxu0 0.0
  %2192 = vmatprep.subr.mxu0 0.0
  %2193 = vmatpush1.msra.mxu0 0.0
  %2194 = vmatprep.subr.mxu0 0.0
  %2195 = vmatpush1.msra.mxu0 0.0
  %2196 = vmatprep.subr.mxu0 0.0
  %2197 = vmatpush1.msra.mxu0 0.0
  %2198 = vmatprep.subr.mxu0 0.0
  %2199 = vmatpush1.msra.mxu0 0.0
  %2200 = vmatprep.subr.mxu0 0.0
  %2201 = vmatpush1.msra.mxu0 0.0
  %2202 = vmatprep.subr.mxu0 0.0
  %2203 = vmatpush1.msra.mxu0 0.0
  %2204 = vmatprep.subr.mxu0 0.0
  %2205 = vmatpush1.msra.mxu0 0.0
  %2206 = vmatprep.subr.mxu0 0.0
  %2207 = vmatpush1.msra.mxu0 0.0
  %2208 = vmatprep.subr.mxu0 0.0
  %2209 = vmatpush1.msra.mxu0 0.0
  %2210 = vmatprep.subr.mxu0 0.0
  %2211 = vmatpush1.msra.mxu0 0.0
  %2212 = vmatprep.subr.mxu0 0.0
  %2213 = vmatpush1.msra.mxu0 0.0
  %2214 = vmatprep.subr.mxu0 0.0
  %2215 = vmatpush1.msra.mxu0 0.0
  %2216 = vmatprep.subr.mxu0 0.0
  %2217 = vmatpush1.msra.mxu0 0.0
  %2218 = vmatprep.subr.mxu0 0.0
  %2219 = vmatpush1.msra.mxu0 0.0
  %2220 = vmatprep.subr.mxu0 0.0
  %2221 = vmatpush1.msra.mxu0 0.0
  %2222 = vmatprep.subr.mxu0 0.0
  %2223 = vmatpush1.msra.mxu0 0.0
  %2224 = vmatprep.subr.mxu0 0.0
  %2225 = vmatpush1.msra.mxu0 0.0
  %2226 = vmatprep.subr.mxu0 0.0
  %2227 = vmatpush1.msra.mxu0 0.0
  %2228 = vmatprep.subr.mxu0 0.0
  %2229 = vmatpush1.msra.mxu0 0.0
  %2230 = vmatprep.subr.mxu0 0.0
  %2231 = vmatpush1.msra.mxu0 0.0
  %2232 = vmatprep.mubr.f32.mxu0 0.0
  %2233 = vmatmul.mubr.f32.gmra.mrb[0].mxu0 %v2152
  %v2234 = vpop.f32.mrb[0].mxu0
  %v2235 = vadd.f32 0.0, %v2234
  %v2236 = vpop.f32.mrb[0].mxu0
  %v2237 = vadd.f32 0.0, %v2236
  %2238 = vdwg.mxu0
  %2239 = vmatprep.subr.mxu0 %v2160
  %2240 = vmatpush1.msra.mxu0 %v2158
  %2241 = vmatprep.subr.mxu0 0.0
  %2242 = vmatpush1.msra.mxu0 0.0
  %2243 = vmatprep.subr.mxu0 0.0
  %2244 = vmatpush1.msra.mxu0 0.0
  %2245 = vmatprep.subr.mxu0 0.0
  %2246 = vmatpush1.msra.mxu0 0.0
  %2247 = vmatprep.subr.mxu0 0.0
  %2248 = vmatpush1.msra.mxu0 0.0
  %2249 = vmatprep.subr.mxu0 0.0
  %2250 = vmatpush1.msra.mxu0 0.0
  %2251 = vmatprep.subr.mxu0 0.0
  %2252 = vmatpush1.msra.mxu0 0.0
  %2253 = vmatprep.subr.mxu0 0.0
  %2254 = vmatpush1.msra.mxu0 0.0
  %2255 = vmatprep.subr.mxu0 0.0
  %2256 = vmatpush1.msra.mxu0 0.0
  %2257 = vmatprep.subr.mxu0 0.0
  %2258 = vmatpush1.msra.mxu0 0.0
  %2259 = vmatprep.subr.mxu0 0.0
  %2260 = vmatpush1.msra.mxu0 0.0
  %2261 = vmatprep.subr.mxu0 0.0
  %2262 = vmatpush1.msra.mxu0 0.0
  %2263 = vmatprep.subr.mxu0 0.0
  %2264 = vmatpush1.msra.mxu0 0.0
  %2265 = vmatprep.subr.mxu0 0.0
  %2266 = vmatpush1.msra.mxu0 0.0
  %2267 = vmatprep.subr.mxu0 0.0
  %2268 = vmatpush1.msra.mxu0 0.0
  %2269 = vmatprep.subr.mxu0 0.0
  %2270 = vmatpush1.msra.mxu0 0.0
  %2271 = vmatprep.subr.mxu0 0.0
  %2272 = vmatpush1.msra.mxu0 0.0
  %2273 = vmatprep.subr.mxu0 0.0
  %2274 = vmatpush1.msra.mxu0 0.0
  %2275 = vmatprep.subr.mxu0 0.0
  %2276 = vmatpush1.msra.mxu0 0.0
  %2277 = vmatprep.subr.mxu0 0.0
  %2278 = vmatpush1.msra.mxu0 0.0
  %2279 = vmatprep.subr.mxu0 0.0
  %2280 = vmatpush1.msra.mxu0 0.0
  %2281 = vmatprep.subr.mxu0 0.0
  %2282 = vmatpush1.msra.mxu0 0.0
  %2283 = vmatprep.subr.mxu0 0.0
  %2284 = vmatpush1.msra.mxu0 0.0
  %2285 = vmatprep.subr.mxu0 0.0
  %2286 = vmatpush1.msra.mxu0 0.0
  %2287 = vmatprep.subr.mxu0 0.0
  %2288 = vmatpush1.msra.mxu0 0.0
  %2289 = vmatprep.subr.mxu0 0.0
  %2290 = vmatpush1.msra.mxu0 0.0
  %2291 = vmatprep.subr.mxu0 0.0
  %2292 = vmatpush1.msra.mxu0 0.0
  %2293 = vmatprep.subr.mxu0 0.0
  %2294 = vmatpush1.msra.mxu0 0.0
  %2295 = vmatprep.subr.mxu0 0.0
  %2296 = vmatpush1.msra.mxu0 0.0
  %2297 = vmatprep.subr.mxu0 0.0
  %2298 = vmatpush1.msra.mxu0 0.0
  %2299 = vmatprep.subr.mxu0 0.0
  %2300 = vmatpush1.msra.mxu0 0.0
  %2301 = vmatprep.subr.mxu0 0.0
  %2302 = vmatpush1.msra.mxu0 0.0
  %2303 = vmatprep.mubr.f32.mxu0 0.0
  %2304 = vmatmul.mubr.f32.gmra.mrb[0].mxu0 %v2152
  %v2305 = vpop.f32.mrb[0].mxu0
  %v2306 = vadd.f32 0.0, %v2305
  %v2307 = vpop.f32.mrb[0].mxu0
  %v2308 = vadd.f32 0.0, %v2307
  %2309 = vdwg.mxu0
  %2310 = vmatprep.subr.mxu0 %v2164
  %2311 = vmatpush1.msra.mxu0 %v2162
  %2312 = vmatprep.subr.mxu0 0.0
  %2313 = vmatpush1.msra.mxu0 0.0
  %2314 = vmatprep.subr.mxu0 0.0
  %2315 = vmatpush1.msra.mxu0 0.0
  %2316 = vmatprep.subr.mxu0 0.0
  %2317 = vmatpush1.msra.mxu0 0.0
  %2318 = vmatprep.subr.mxu0 0.0
  %2319 = vmatpush1.msra.mxu0 0.0
  %2320 = vmatprep.subr.mxu0 0.0
  %2321 = vmatpush1.msra.mxu0 0.0
  %2322 = vmatprep.subr.mxu0 0.0
  %2323 = vmatpush1.msra.mxu0 0.0
  %2324 = vmatprep.subr.mxu0 0.0
  %2325 = vmatpush1.msra.mxu0 0.0
  %2326 = vmatprep.subr.mxu0 0.0
  %2327 = vmatpush1.msra.mxu0 0.0
  %2328 = vmatprep.subr.mxu0 0.0
  %2329 = vmatpush1.msra.mxu0 0.0
  %2330 = vmatprep.subr.mxu0 0.0
  %2331 = vmatpush1.msra.mxu0 0.0
  %2332 = vmatprep.subr.mxu0 0.0
  %2333 = vmatpush1.msra.mxu0 0.0
  %2334 = vmatprep.subr.mxu0 0.0
  %2335 = vmatpush1.msra.mxu0 0.0
  %2336 = vmatprep.subr.mxu0 0.0
  %2337 = vmatpush1.msra.mxu0 0.0
  %2338 = vmatprep.subr.mxu0 0.0
  %2339 = vmatpush1.msra.mxu0 0.0
  %2340 = vmatprep.subr.mxu0 0.0
  %2341 = vmatpush1.msra.mxu0 0.0
  %2342 = vmatprep.subr.mxu0 0.0
  %2343 = vmatpush1.msra.mxu0 0.0
  %2344 = vmatprep.subr.mxu0 0.0
  %2345 = vmatpush1.msra.mxu0 0.0
  %2346 = vmatprep.subr.mxu0 0.0
  %2347 = vmatpush1.msra.mxu0 0.0
  %2348 = vmatprep.subr.mxu0 0.0
  %2349 = vmatpush1.msra.mxu0 0.0
  %2350 = vmatprep.subr.mxu0 0.0
  %2351 = vmatpush1.msra.mxu0 0.0
  %2352 = vmatprep.subr.mxu0 0.0
  %2353 = vmatpush1.msra.mxu0 0.0
  %2354 = vmatprep.subr.mxu0 0.0
  %2355 = vmatpush1.msra.mxu0 0.0
  %2356 = vmatprep.subr.mxu0 0.0
  %2357 = vmatpush1.msra.mxu0 0.0
  %2358 = vmatprep.subr.mxu0 0.0
  %2359 = vmatpush1.msra.mxu0 0.0
  %2360 = vmatprep.subr.mxu0 0.0
  %2361 = vmatpush1.msra.mxu0 0.0
  %2362 = vmatprep.subr.mxu0 0.0
  %2363 = vmatpush1.msra.mxu0 0.0
  %2364 = vmatprep.subr.mxu0 0.0
  %2365 = vmatpush1.msra.mxu0 0.0
  %2366 = vmatprep.subr.mxu0 0.0
  %2367 = vmatpush1.msra.mxu0 0.0
  %2368 = vmatprep.subr.mxu0 0.0
  %2369 = vmatpush1.msra.mxu0 0.0
  %2370 = vmatprep.subr.mxu0 0.0
  %2371 = vmatpush1.msra.mxu0 0.0
  %2372 = vmatprep.subr.mxu0 0.0
  %2373 = vmatpush1.msra.mxu0 0.0
  %2374 = vmatprep.mubr.f32.mxu0 0.0
  %2375 = vmatmul.mubr.f32.gmra.mrb[0].mxu0 %v2152
  %v2376 = vpop.f32.mrb[0].mxu0
  %v2377 = vadd.f32 0.0, %v2376
  %v2378 = vpop.f32.mrb[0].mxu0
  %v2379 = vadd.f32 0.0, %v2378
  %2380 = vdwg.mxu0
  %2381 = vmatprep.subr.mxu0 0.0
  %2382 = vmatpush1.msra.mxu0 %v2166
  %2383 = vmatprep.subr.mxu0 0.0
  %2384 = vmatpush1.msra.mxu0 0.0
  %2385 = vmatprep.subr.mxu0 0.0
  %2386 = vmatpush1.msra.mxu0 0.0
  %2387 = vmatprep.subr.mxu0 0.0
  %2388 = vmatpush1.msra.mxu0 0.0
  %2389 = vmatprep.subr.mxu0 0.0
  %2390 = vmatpush1.msra.mxu0 0.0
  %2391 = vmatprep.subr.mxu0 0.0
  %2392 = vmatpush1.msra.mxu0 0.0
  %2393 = vmatprep.subr.mxu0 0.0
  %2394 = vmatpush1.msra.mxu0 0.0
  %2395 = vmatprep.subr.mxu0 0.0
  %2396 = vmatpush1.msra.mxu0 0.0
  %2397 = vmatprep.subr.mxu0 0.0
  %2398 = vmatpush1.msra.mxu0 0.0
  %2399 = vmatprep.subr.mxu0 0.0
  %2400 = vmatpush1.msra.mxu0 0.0
  %2401 = vmatprep.subr.mxu0 0.0
  %2402 = vmatpush1.msra.mxu0 0.0
  %2403 = vmatprep.subr.mxu0 0.0
  %2404 = vmatpush1.msra.mxu0 0.0
  %2405 = vmatprep.subr.mxu0 0.0
  %2406 = vmatpush1.msra.mxu0 0.0
  %2407 = vmatprep.subr.mxu0 0.0
  %2408 = vmatpush1.msra.mxu0 0.0
  %2409 = vmatprep.subr.mxu0 0.0
  %2410 = vmatpush1.msra.mxu0 0.0
  %2411 = vmatprep.subr.mxu0 0.0
  %2412 = vmatpush1.msra.mxu0 0.0
  %2413 = vmatprep.subr.mxu0 0.0
  %2414 = vmatpush1.msra.mxu0 0.0
  %2415 = vmatprep.subr.mxu0 0.0
  %2416 = vmatpush1.msra.mxu0 0.0
  %2417 = vmatprep.subr.mxu0 0.0
  %2418 = vmatpush1.msra.mxu0 0.0
  %2419 = vmatprep.subr.mxu0 0.0
  %2420 = vmatpush1.msra.mxu0 0.0
  %2421 = vmatprep.subr.mxu0 0.0
  %2422 = vmatpush1.msra.mxu0 0.0
  %2423 = vmatprep.subr.mxu0 0.0
  %2424 = vmatpush1.msra.mxu0 0.0
  %2425 = vmatprep.subr.mxu0 0.0
  %2426 = vmatpush1.msra.mxu0 0.0
  %2427 = vmatprep.subr.mxu0 0.0
  %2428 = vmatpush1.msra.mxu0 0.0
  %2429 = vmatprep.subr.mxu0 0.0
  %2430 = vmatpush1.msra.mxu0 0.0
  %2431 = vmatprep.subr.mxu0 0.0
  %2432 = vmatpush1.msra.mxu0 0.0
  %2433 = vmatprep.subr.mxu0 0.0
  %2434 = vmatpush1.msra.mxu0 0.0
  %2435 = vmatprep.subr.mxu0 0.0
  %2436 = vmatpush1.msra.mxu0 0.0
  %2437 = vmatprep.subr.mxu0 0.0
  %2438 = vmatpush1.msra.mxu0 0.0
  %2439 = vmatprep.subr.mxu0 0.0
  %2440 = vmatpush1.msra.mxu0 0.0
  %2441 = vmatprep.subr.mxu0 0.0
  %2442 = vmatpush1.msra.mxu0 0.0
  %2443 = vmatprep.subr.mxu0 0.0
  %2444 = vmatpush1.msra.mxu0 0.0
  %2445 = vmatprep.mubr.f32.mxu0 0.0
  %2446 = vmatmul.mubr.f32.gmra.mrb[0].mxu0 %v2152
  %v2447 = vpop.f32.mrb[0].mxu0
  %v2448 = vadd.f32 0.0, %v2447
  %v2449 = vpop.f32.mrb[0].mxu0
  %2450 = vdwg.mxu0
  %v2451 = vadd.f32 %v2118, %v2235
  %v2452 = vadd.f32 %v2119, %v2237
  %v2453 = vadd.f32 %v2120, %v2306
  %v2454 = vadd.f32 %v2121, %v2308
  %v2455 = vadd.f32 %v2122, %v2377
  %v2456 = vadd.f32 %v2123, %v2379
  %v2457 = vadd.f32 %v2124, %v2448
  %s2458 = scalar_lea.vmem %s3, 24
  %v2459 = vld [vmem:[%s2458] sm:$0xf]
  %2460 = vrot.lane.b32.xlu0 %v482, 48
  %v2461 = vpop.permute.xlu0 %2460
  %2462 = vrot.lane.b32.xlu0 %v483, 48
  %v2463 = vpop.permute.xlu0 %2462
  %2464 = vrot.lane.b32.xlu0 %v484, 48
  %v2465 = vpop.permute.xlu0 %2464
  %2466 = vrot.lane.b32.xlu0 %v485, 48
  %v2467 = vpop.permute.xlu0 %2466
  %2468 = vrot.lane.b32.xlu0 %v486, 48
  %v2469 = vpop.permute.xlu0 %2468
  %2470 = vrot.lane.b32.xlu0 %v487, 48
  %v2471 = vpop.permute.xlu0 %2470
  %2472 = vrot.lane.b32.xlu0 %v488, 48
  %v2473 = vpop.permute.xlu0 %2472
  %2474 = vrot.lane.b32.xlu0 %v489, 48
  %v2475 = vpop.permute.xlu0 %2474
  %vm2476 = vcmask 392192
  %v2477 = vsel %vm2476, %v2461, %v2463
  %v2478 = vsel %vm2476, %v2463, %v2465
  %v2479 = vsel %vm2476, %v2465, %v2467
  %v2480 = vsel %vm2476, %v2467, %v2469
  %v2481 = vsel %vm2476, %v2469, %v2471
  %v2482 = vsel %vm2476, %v2471, %v2473
  %v2483 = vsel %vm2476, %v2473, %v2475
  %v2485 = vsel %vm525, %v2459, 0
  %v2487 = vsel %vm385, %v2477, 0
  %v2489 = vsel %vm385, %v2478, 0
  %v2491 = vsel %vm385, %v2479, 0
  %v2493 = vsel %vm385, %v2480, 0
  %v2495 = vsel %vm385, %v2481, 0
  %v2497 = vsel %vm385, %v2482, 0
  %v2499 = vsel %vm385, %v2483, 0
  %2501 = vmatprep.subr.mxu0 %v2489
  %2502 = vmatpush1.msra.mxu0 %v2487
  %2503 = vmatprep.subr.mxu0 0.0
  %2504 = vmatpush1.msra.mxu0 0.0
  %2505 = vmatprep.subr.mxu0 0.0
  %2506 = vmatpush1.msra.mxu0 0.0
  %2507 = vmatprep.subr.mxu0 0.0
  %2508 = vmatpush1.msra.mxu0 0.0
  %2509 = vmatprep.subr.mxu0 0.0
  %2510 = vmatpush1.msra.mxu0 0.0
  %2511 = vmatprep.subr.mxu0 0.0
  %2512 = vmatpush1.msra.mxu0 0.0
  %2513 = vmatprep.subr.mxu0 0.0
  %2514 = vmatpush1.msra.mxu0 0.0
  %2515 = vmatprep.subr.mxu0 0.0
  %2516 = vmatpush1.msra.mxu0 0.0
  %2517 = vmatprep.subr.mxu0 0.0
  %2518 = vmatpush1.msra.mxu0 0.0
  %2519 = vmatprep.subr.mxu0 0.0
  %2520 = vmatpush1.msra.mxu0 0.0
  %2521 = vmatprep.subr.mxu0 0.0
  %2522 = vmatpush1.msra.mxu0 0.0
  %2523 = vmatprep.subr.mxu0 0.0
  %2524 = vmatpush1.msra.mxu0 0.0
  %2525 = vmatprep.subr.mxu0 0.0
  %2526 = vmatpush1.msra.mxu0 0.0
  %2527 = vmatprep.subr.mxu0 0.0
  %2528 = vmatpush1.msra.mxu0 0.0
  %2529 = vmatprep.subr.mxu0 0.0
  %2530 = vmatpush1.msra.mxu0 0.0
  %2531 = vmatprep.subr.mxu0 0.0
  %2532 = vmatpush1.msra.mxu0 0.0
  %2533 = vmatprep.subr.mxu0 0.0
  %2534 = vmatpush1.msra.mxu0 0.0
  %2535 = vmatprep.subr.mxu0 0.0
  %2536 = vmatpush1.msra.mxu0 0.0
  %2537 = vmatprep.subr.mxu0 0.0
  %2538 = vmatpush1.msra.mxu0 0.0
  %2539 = vmatprep.subr.mxu0 0.0
  %2540 = vmatpush1.msra.mxu0 0.0
  %2541 = vmatprep.subr.mxu0 0.0
  %2542 = vmatpush1.msra.mxu0 0.0
  %2543 = vmatprep.subr.mxu0 0.0
  %2544 = vmatpush1.msra.mxu0 0.0
  %2545 = vmatprep.subr.mxu0 0.0
  %2546 = vmatpush1.msra.mxu0 0.0
  %2547 = vmatprep.subr.mxu0 0.0
  %2548 = vmatpush1.msra.mxu0 0.0
  %2549 = vmatprep.subr.mxu0 0.0
  %2550 = vmatpush1.msra.mxu0 0.0
  %2551 = vmatprep.subr.mxu0 0.0
  %2552 = vmatpush1.msra.mxu0 0.0
  %2553 = vmatprep.subr.mxu0 0.0
  %2554 = vmatpush1.msra.mxu0 0.0
  %2555 = vmatprep.subr.mxu0 0.0
  %2556 = vmatpush1.msra.mxu0 0.0
  %2557 = vmatprep.subr.mxu0 0.0
  %2558 = vmatpush1.msra.mxu0 0.0
  %2559 = vmatprep.subr.mxu0 0.0
  %2560 = vmatpush1.msra.mxu0 0.0
  %2561 = vmatprep.subr.mxu0 0.0
  %2562 = vmatpush1.msra.mxu0 0.0
  %2563 = vmatprep.subr.mxu0 0.0
  %2564 = vmatpush1.msra.mxu0 0.0
  %2565 = vmatprep.mubr.f32.mxu0 0.0
  %2566 = vmatmul.mubr.f32.gmra.mrb[0].mxu0 %v2485
  %v2567 = vpop.f32.mrb[0].mxu0
  %v2568 = vadd.f32 0.0, %v2567
  %v2569 = vpop.f32.mrb[0].mxu0
  %v2570 = vadd.f32 0.0, %v2569
  %2571 = vdwg.mxu0
  %2572 = vmatprep.subr.mxu0 %v2493
  %2573 = vmatpush1.msra.mxu0 %v2491
  %2574 = vmatprep.subr.mxu0 0.0
  %2575 = vmatpush1.msra.mxu0 0.0
  %2576 = vmatprep.subr.mxu0 0.0
  %2577 = vmatpush1.msra.mxu0 0.0
  %2578 = vmatprep.subr.mxu0 0.0
  %2579 = vmatpush1.msra.mxu0 0.0
  %2580 = vmatprep.subr.mxu0 0.0
  %2581 = vmatpush1.msra.mxu0 0.0
  %2582 = vmatprep.subr.mxu0 0.0
  %2583 = vmatpush1.msra.mxu0 0.0
  %2584 = vmatprep.subr.mxu0 0.0
  %2585 = vmatpush1.msra.mxu0 0.0
  %2586 = vmatprep.subr.mxu0 0.0
  %2587 = vmatpush1.msra.mxu0 0.0
  %2588 = vmatprep.subr.mxu0 0.0
  %2589 = vmatpush1.msra.mxu0 0.0
  %2590 = vmatprep.subr.mxu0 0.0
  %2591 = vmatpush1.msra.mxu0 0.0
  %2592 = vmatprep.subr.mxu0 0.0
  %2593 = vmatpush1.msra.mxu0 0.0
  %2594 = vmatprep.subr.mxu0 0.0
  %2595 = vmatpush1.msra.mxu0 0.0
  %2596 = vmatprep.subr.mxu0 0.0
  %2597 = vmatpush1.msra.mxu0 0.0
  %2598 = vmatprep.subr.mxu0 0.0
  %2599 = vmatpush1.msra.mxu0 0.0
  %2600 = vmatprep.subr.mxu0 0.0
  %2601 = vmatpush1.msra.mxu0 0.0
  %2602 = vmatprep.subr.mxu0 0.0
  %2603 = vmatpush1.msra.mxu0 0.0
  %2604 = vmatprep.subr.mxu0 0.0
  %2605 = vmatpush1.msra.mxu0 0.0
  %2606 = vmatprep.subr.mxu0 0.0
  %2607 = vmatpush1.msra.mxu0 0.0
  %2608 = vmatprep.subr.mxu0 0.0
  %2609 = vmatpush1.msra.mxu0 0.0
  %2610 = vmatprep.subr.mxu0 0.0
  %2611 = vmatpush1.msra.mxu0 0.0
  %2612 = vmatprep.subr.mxu0 0.0
  %2613 = vmatpush1.msra.mxu0 0.0
  %2614 = vmatprep.subr.mxu0 0.0
  %2615 = vmatpush1.msra.mxu0 0.0
  %2616 = vmatprep.subr.mxu0 0.0
  %2617 = vmatpush1.msra.mxu0 0.0
  %2618 = vmatprep.subr.mxu0 0.0
  %2619 = vmatpush1.msra.mxu0 0.0
  %2620 = vmatprep.subr.mxu0 0.0
  %2621 = vmatpush1.msra.mxu0 0.0
  %2622 = vmatprep.subr.mxu0 0.0
  %2623 = vmatpush1.msra.mxu0 0.0
  %2624 = vmatprep.subr.mxu0 0.0
  %2625 = vmatpush1.msra.mxu0 0.0
  %2626 = vmatprep.subr.mxu0 0.0
  %2627 = vmatpush1.msra.mxu0 0.0
  %2628 = vmatprep.subr.mxu0 0.0
  %2629 = vmatpush1.msra.mxu0 0.0
  %2630 = vmatprep.subr.mxu0 0.0
  %2631 = vmatpush1.msra.mxu0 0.0
  %2632 = vmatprep.subr.mxu0 0.0
  %2633 = vmatpush1.msra.mxu0 0.0
  %2634 = vmatprep.subr.mxu0 0.0
  %2635 = vmatpush1.msra.mxu0 0.0
  %2636 = vmatprep.mubr.f32.mxu0 0.0
  %2637 = vmatmul.mubr.f32.gmra.mrb[0].mxu0 %v2485
  %v2638 = vpop.f32.mrb[0].mxu0
  %v2639 = vadd.f32 0.0, %v2638
  %v2640 = vpop.f32.mrb[0].mxu0
  %v2641 = vadd.f32 0.0, %v2640
  %2642 = vdwg.mxu0
  %2643 = vmatprep.subr.mxu0 %v2497
  %2644 = vmatpush1.msra.mxu0 %v2495
  %2645 = vmatprep.subr.mxu0 0.0
  %2646 = vmatpush1.msra.mxu0 0.0
  %2647 = vmatprep.subr.mxu0 0.0
  %2648 = vmatpush1.msra.mxu0 0.0
  %2649 = vmatprep.subr.mxu0 0.0
  %2650 = vmatpush1.msra.mxu0 0.0
  %2651 = vmatprep.subr.mxu0 0.0
  %2652 = vmatpush1.msra.mxu0 0.0
  %2653 = vmatprep.subr.mxu0 0.0
  %2654 = vmatpush1.msra.mxu0 0.0
  %2655 = vmatprep.subr.mxu0 0.0
  %2656 = vmatpush1.msra.mxu0 0.0
  %2657 = vmatprep.subr.mxu0 0.0
  %2658 = vmatpush1.msra.mxu0 0.0
  %2659 = vmatprep.subr.mxu0 0.0
  %2660 = vmatpush1.msra.mxu0 0.0
  %2661 = vmatprep.subr.mxu0 0.0
  %2662 = vmatpush1.msra.mxu0 0.0
  %2663 = vmatprep.subr.mxu0 0.0
  %2664 = vmatpush1.msra.mxu0 0.0
  %2665 = vmatprep.subr.mxu0 0.0
  %2666 = vmatpush1.msra.mxu0 0.0
  %2667 = vmatprep.subr.mxu0 0.0
  %2668 = vmatpush1.msra.mxu0 0.0
  %2669 = vmatprep.subr.mxu0 0.0
  %2670 = vmatpush1.msra.mxu0 0.0
  %2671 = vmatprep.subr.mxu0 0.0
  %2672 = vmatpush1.msra.mxu0 0.0
  %2673 = vmatprep.subr.mxu0 0.0
  %2674 = vmatpush1.msra.mxu0 0.0
  %2675 = vmatprep.subr.mxu0 0.0
  %2676 = vmatpush1.msra.mxu0 0.0
  %2677 = vmatprep.subr.mxu0 0.0
  %2678 = vmatpush1.msra.mxu0 0.0
  %2679 = vmatprep.subr.mxu0 0.0
  %2680 = vmatpush1.msra.mxu0 0.0
  %2681 = vmatprep.subr.mxu0 0.0
  %2682 = vmatpush1.msra.mxu0 0.0
  %2683 = vmatprep.subr.mxu0 0.0
  %2684 = vmatpush1.msra.mxu0 0.0
  %2685 = vmatprep.subr.mxu0 0.0
  %2686 = vmatpush1.msra.mxu0 0.0
  %2687 = vmatprep.subr.mxu0 0.0
  %2688 = vmatpush1.msra.mxu0 0.0
  %2689 = vmatprep.subr.mxu0 0.0
  %2690 = vmatpush1.msra.mxu0 0.0
  %2691 = vmatprep.subr.mxu0 0.0
  %2692 = vmatpush1.msra.mxu0 0.0
  %2693 = vmatprep.subr.mxu0 0.0
  %2694 = vmatpush1.msra.mxu0 0.0
  %2695 = vmatprep.subr.mxu0 0.0
  %2696 = vmatpush1.msra.mxu0 0.0
  %2697 = vmatprep.subr.mxu0 0.0
  %2698 = vmatpush1.msra.mxu0 0.0
  %2699 = vmatprep.subr.mxu0 0.0
  %2700 = vmatpush1.msra.mxu0 0.0
  %2701 = vmatprep.subr.mxu0 0.0
  %2702 = vmatpush1.msra.mxu0 0.0
  %2703 = vmatprep.subr.mxu0 0.0
  %2704 = vmatpush1.msra.mxu0 0.0
  %2705 = vmatprep.subr.mxu0 0.0
  %2706 = vmatpush1.msra.mxu0 0.0
  %2707 = vmatprep.mubr.f32.mxu0 0.0
  %2708 = vmatmul.mubr.f32.gmra.mrb[0].mxu0 %v2485
  %v2709 = vpop.f32.mrb[0].mxu0
  %v2710 = vadd.f32 0.0, %v2709
  %v2711 = vpop.f32.mrb[0].mxu0
  %v2712 = vadd.f32 0.0, %v2711
  %2713 = vdwg.mxu0
  %2714 = vmatprep.subr.mxu0 0.0
  %2715 = vmatpush1.msra.mxu0 %v2499
  %2716 = vmatprep.subr.mxu0 0.0
  %2717 = vmatpush1.msra.mxu0 0.0
  %2718 = vmatprep.subr.mxu0 0.0
  %2719 = vmatpush1.msra.mxu0 0.0
  %2720 = vmatprep.subr.mxu0 0.0
  %2721 = vmatpush1.msra.mxu0 0.0
  %2722 = vmatprep.subr.mxu0 0.0
  %2723 = vmatpush1.msra.mxu0 0.0
  %2724 = vmatprep.subr.mxu0 0.0
  %2725 = vmatpush1.msra.mxu0 0.0
  %2726 = vmatprep.subr.mxu0 0.0
  %2727 = vmatpush1.msra.mxu0 0.0
  %2728 = vmatprep.subr.mxu0 0.0
  %2729 = vmatpush1.msra.mxu0 0.0
  %2730 = vmatprep.subr.mxu0 0.0
  %2731 = vmatpush1.msra.mxu0 0.0
  %2732 = vmatprep.subr.mxu0 0.0
  %2733 = vmatpush1.msra.mxu0 0.0
  %2734 = vmatprep.subr.mxu0 0.0
  %2735 = vmatpush1.msra.mxu0 0.0
  %2736 = vmatprep.subr.mxu0 0.0
  %2737 = vmatpush1.msra.mxu0 0.0
  %2738 = vmatprep.subr.mxu0 0.0
  %2739 = vmatpush1.msra.mxu0 0.0
  %2740 = vmatprep.subr.mxu0 0.0
  %2741 = vmatpush1.msra.mxu0 0.0
  %2742 = vmatprep.subr.mxu0 0.0
  %2743 = vmatpush1.msra.mxu0 0.0
  %2744 = vmatprep.subr.mxu0 0.0
  %2745 = vmatpush1.msra.mxu0 0.0
  %2746 = vmatprep.subr.mxu0 0.0
  %2747 = vmatpush1.msra.mxu0 0.0
  %2748 = vmatprep.subr.mxu0 0.0
  %2749 = vmatpush1.msra.mxu0 0.0
  %2750 = vmatprep.subr.mxu0 0.0
  %2751 = vmatpush1.msra.mxu0 0.0
  %2752 = vmatprep.subr.mxu0 0.0
  %2753 = vmatpush1.msra.mxu0 0.0
  %2754 = vmatprep.subr.mxu0 0.0
  %2755 = vmatpush1.msra.mxu0 0.0
  %2756 = vmatprep.subr.mxu0 0.0
  %2757 = vmatpush1.msra.mxu0 0.0
  %2758 = vmatprep.subr.mxu0 0.0
  %2759 = vmatpush1.msra.mxu0 0.0
  %2760 = vmatprep.subr.mxu0 0.0
  %2761 = vmatpush1.msra.mxu0 0.0
  %2762 = vmatprep.subr.mxu0 0.0
  %2763 = vmatpush1.msra.mxu0 0.0
  %2764 = vmatprep.subr.mxu0 0.0
  %2765 = vmatpush1.msra.mxu0 0.0
  %2766 = vmatprep.subr.mxu0 0.0
  %2767 = vmatpush1.msra.mxu0 0.0
  %2768 = vmatprep.subr.mxu0 0.0
  %2769 = vmatpush1.msra.mxu0 0.0
  %2770 = vmatprep.subr.mxu0 0.0
  %2771 = vmatpush1.msra.mxu0 0.0
  %2772 = vmatprep.subr.mxu0 0.0
  %2773 = vmatpush1.msra.mxu0 0.0
  %2774 = vmatprep.subr.mxu0 0.0
  %2775 = vmatpush1.msra.mxu0 0.0
  %2776 = vmatprep.subr.mxu0 0.0
  %2777 = vmatpush1.msra.mxu0 0.0
  %2778 = vmatprep.mubr.f32.mxu0 0.0
  %2779 = vmatmul.mubr.f32.gmra.mrb[0].mxu0 %v2485
  %v2780 = vpop.f32.mrb[0].mxu0
  %v2781 = vadd.f32 0.0, %v2780
  %v2782 = vpop.f32.mrb[0].mxu0
  %2783 = vdwg.mxu0
  %v2784 = vadd.f32 %v2451, %v2568
  %v2785 = vadd.f32 %v2452, %v2570
  %v2786 = vadd.f32 %v2453, %v2639
  %v2787 = vadd.f32 %v2454, %v2641
  %v2788 = vadd.f32 %v2455, %v2710
  %v2789 = vadd.f32 %v2456, %v2712
  %v2790 = vadd.f32 %v2457, %v2781
  %s2791 = scalar_lea.vmem %s3, 28
  %v2792 = vld [vmem:[%s2791] sm:$0xf]
  %2793 = vrot.lane.b32.xlu0 %v482, 46
  %v2794 = vpop.permute.xlu0 %2793
  %2795 = vrot.lane.b32.xlu0 %v483, 46
  %v2796 = vpop.permute.xlu0 %2795
  %2797 = vrot.lane.b32.xlu0 %v484, 46
  %v2798 = vpop.permute.xlu0 %2797
  %2799 = vrot.lane.b32.xlu0 %v485, 46
  %v2800 = vpop.permute.xlu0 %2799
  %2801 = vrot.lane.b32.xlu0 %v486, 46
  %v2802 = vpop.permute.xlu0 %2801
  %2803 = vrot.lane.b32.xlu0 %v487, 46
  %v2804 = vpop.permute.xlu0 %2803
  %2805 = vrot.lane.b32.xlu0 %v488, 46
  %v2806 = vpop.permute.xlu0 %2805
  %2807 = vrot.lane.b32.xlu0 %v489, 46
  %v2808 = vpop.permute.xlu0 %2807
  %vm2809 = vcmask 375808
  %v2810 = vsel %vm2809, %v2794, %v2796
  %v2811 = vsel %vm2809, %v2796, %v2798
  %v2812 = vsel %vm2809, %v2798, %v2800
  %v2813 = vsel %vm2809, %v2800, %v2802
  %v2814 = vsel %vm2809, %v2802, %v2804
  %v2815 = vsel %vm2809, %v2804, %v2806
  %v2816 = vsel %vm2809, %v2806, %v2808
  %v2818 = vsel %vm525, %v2792, 0
  %v2820 = vsel %vm385, %v2810, 0
  %v2822 = vsel %vm385, %v2811, 0
  %v2824 = vsel %vm385, %v2812, 0
  %v2826 = vsel %vm385, %v2813, 0
  %v2828 = vsel %vm385, %v2814, 0
  %v2830 = vsel %vm385, %v2815, 0
  %v2832 = vsel %vm385, %v2816, 0
  %2834 = vmatprep.subr.mxu0 %v2822
  %2835 = vmatpush1.msra.mxu0 %v2820
  %2836 = vmatprep.subr.mxu0 0.0
  %2837 = vmatpush1.msra.mxu0 0.0
  %2838 = vmatprep.subr.mxu0 0.0
  %2839 = vmatpush1.msra.mxu0 0.0
  %2840 = vmatprep.subr.mxu0 0.0
  %2841 = vmatpush1.msra.mxu0 0.0
  %2842 = vmatprep.subr.mxu0 0.0
  %2843 = vmatpush1.msra.mxu0 0.0
  %2844 = vmatprep.subr.mxu0 0.0
  %2845 = vmatpush1.msra.mxu0 0.0
  %2846 = vmatprep.subr.mxu0 0.0
  %2847 = vmatpush1.msra.mxu0 0.0
  %2848 = vmatprep.subr.mxu0 0.0
  %2849 = vmatpush1.msra.mxu0 0.0
  %2850 = vmatprep.subr.mxu0 0.0
  %2851 = vmatpush1.msra.mxu0 0.0
  %2852 = vmatprep.subr.mxu0 0.0
  %2853 = vmatpush1.msra.mxu0 0.0
  %2854 = vmatprep.subr.mxu0 0.0
  %2855 = vmatpush1.msra.mxu0 0.0
  %2856 = vmatprep.subr.mxu0 0.0
  %2857 = vmatpush1.msra.mxu0 0.0
  %2858 = vmatprep.subr.mxu0 0.0
  %2859 = vmatpush1.msra.mxu0 0.0
  %2860 = vmatprep.subr.mxu0 0.0
  %2861 = vmatpush1.msra.mxu0 0.0
  %2862 = vmatprep.subr.mxu0 0.0
  %2863 = vmatpush1.msra.mxu0 0.0
  %2864 = vmatprep.subr.mxu0 0.0
  %2865 = vmatpush1.msra.mxu0 0.0
  %2866 = vmatprep.subr.mxu0 0.0
  %2867 = vmatpush1.msra.mxu0 0.0
  %2868 = vmatprep.subr.mxu0 0.0
  %2869 = vmatpush1.msra.mxu0 0.0
  %2870 = vmatprep.subr.mxu0 0.0
  %2871 = vmatpush1.msra.mxu0 0.0
  %2872 = vmatprep.subr.mxu0 0.0
  %2873 = vmatpush1.msra.mxu0 0.0
  %2874 = vmatprep.subr.mxu0 0.0
  %2875 = vmatpush1.msra.mxu0 0.0
  %2876 = vmatprep.subr.mxu0 0.0
  %2877 = vmatpush1.msra.mxu0 0.0
  %2878 = vmatprep.subr.mxu0 0.0
  %2879 = vmatpush1.msra.mxu0 0.0
  %2880 = vmatprep.subr.mxu0 0.0
  %2881 = vmatpush1.msra.mxu0 0.0
  %2882 = vmatprep.subr.mxu0 0.0
  %2883 = vmatpush1.msra.mxu0 0.0
  %2884 = vmatprep.subr.mxu0 0.0
  %2885 = vmatpush1.msra.mxu0 0.0
  %2886 = vmatprep.subr.mxu0 0.0
  %2887 = vmatpush1.msra.mxu0 0.0
  %2888 = vmatprep.subr.mxu0 0.0
  %2889 = vmatpush1.msra.mxu0 0.0
  %2890 = vmatprep.subr.mxu0 0.0
  %2891 = vmatpush1.msra.mxu0 0.0
  %2892 = vmatprep.subr.mxu0 0.0
  %2893 = vmatpush1.msra.mxu0 0.0
  %2894 = vmatprep.subr.mxu0 0.0
  %2895 = vmatpush1.msra.mxu0 0.0
  %2896 = vmatprep.subr.mxu0 0.0
  %2897 = vmatpush1.msra.mxu0 0.0
  %2898 = vmatprep.mubr.f32.mxu0 0.0
  %2899 = vmatmul.mubr.f32.gmra.mrb[0].mxu0 %v2818
  %v2900 = vpop.f32.mrb[0].mxu0
  %v2901 = vadd.f32 0.0, %v2900
  %v2902 = vpop.f32.mrb[0].mxu0
  %v2903 = vadd.f32 0.0, %v2902
  %2904 = vdwg.mxu0
  %2905 = vmatprep.subr.mxu0 %v2826
  %2906 = vmatpush1.msra.mxu0 %v2824
  %2907 = vmatprep.subr.mxu0 0.0
  %2908 = vmatpush1.msra.mxu0 0.0
  %2909 = vmatprep.subr.mxu0 0.0
  %2910 = vmatpush1.msra.mxu0 0.0
  %2911 = vmatprep.subr.mxu0 0.0
  %2912 = vmatpush1.msra.mxu0 0.0
  %2913 = vmatprep.subr.mxu0 0.0
  %2914 = vmatpush1.msra.mxu0 0.0
  %2915 = vmatprep.subr.mxu0 0.0
  %2916 = vmatpush1.msra.mxu0 0.0
  %2917 = vmatprep.subr.mxu0 0.0
  %2918 = vmatpush1.msra.mxu0 0.0
  %2919 = vmatprep.subr.mxu0 0.0
  %2920 = vmatpush1.msra.mxu0 0.0
  %2921 = vmatprep.subr.mxu0 0.0
  %2922 = vmatpush1.msra.mxu0 0.0
  %2923 = vmatprep.subr.mxu0 0.0
  %2924 = vmatpush1.msra.mxu0 0.0
  %2925 = vmatprep.subr.mxu0 0.0
  %2926 = vmatpush1.msra.mxu0 0.0
  %2927 = vmatprep.subr.mxu0 0.0
  %2928 = vmatpush1.msra.mxu0 0.0
  %2929 = vmatprep.subr.mxu0 0.0
  %2930 = vmatpush1.msra.mxu0 0.0
  %2931 = vmatprep.subr.mxu0 0.0
  %2932 = vmatpush1.msra.mxu0 0.0
  %2933 = vmatprep.subr.mxu0 0.0
  %2934 = vmatpush1.msra.mxu0 0.0
  %2935 = vmatprep.subr.mxu0 0.0
  %2936 = vmatpush1.msra.mxu0 0.0
  %2937 = vmatprep.subr.mxu0 0.0
  %2938 = vmatpush1.msra.mxu0 0.0
  %2939 = vmatprep.subr.mxu0 0.0
  %2940 = vmatpush1.msra.mxu0 0.0
  %2941 = vmatprep.subr.mxu0 0.0
  %2942 = vmatpush1.msra.mxu0 0.0
  %2943 = vmatprep.subr.mxu0 0.0
  %2944 = vmatpush1.msra.mxu0 0.0
  %2945 = vmatprep.subr.mxu0 0.0
  %2946 = vmatpush1.msra.mxu0 0.0
  %2947 = vmatprep.subr.mxu0 0.0
  %2948 = vmatpush1.msra.mxu0 0.0
  %2949 = vmatprep.subr.mxu0 0.0
  %2950 = vmatpush1.msra.mxu0 0.0
  %2951 = vmatprep.subr.mxu0 0.0
  %2952 = vmatpush1.msra.mxu0 0.0
  %2953 = vmatprep.subr.mxu0 0.0
  %2954 = vmatpush1.msra.mxu0 0.0
  %2955 = vmatprep.subr.mxu0 0.0
  %2956 = vmatpush1.msra.mxu0 0.0
  %2957 = vmatprep.subr.mxu0 0.0
  %2958 = vmatpush1.msra.mxu0 0.0
  %2959 = vmatprep.subr.mxu0 0.0
  %2960 = vmatpush1.msra.mxu0 0.0
  %2961 = vmatprep.subr.mxu0 0.0
  %2962 = vmatpush1.msra.mxu0 0.0
  %2963 = vmatprep.subr.mxu0 0.0
  %2964 = vmatpush1.msra.mxu0 0.0
  %2965 = vmatprep.subr.mxu0 0.0
  %2966 = vmatpush1.msra.mxu0 0.0
  %2967 = vmatprep.subr.mxu0 0.0
  %2968 = vmatpush1.msra.mxu0 0.0
  %2969 = vmatprep.mubr.f32.mxu0 0.0
  %2970 = vmatmul.mubr.f32.gmra.mrb[0].mxu0 %v2818
  %v2971 = vpop.f32.mrb[0].mxu0
  %v2972 = vadd.f32 0.0, %v2971
  %v2973 = vpop.f32.mrb[0].mxu0
  %v2974 = vadd.f32 0.0, %v2973
  %2975 = vdwg.mxu0
  %2976 = vmatprep.subr.mxu0 %v2830
  %2977 = vmatpush1.msra.mxu0 %v2828
  %2978 = vmatprep.subr.mxu0 0.0
  %2979 = vmatpush1.msra.mxu0 0.0
  %2980 = vmatprep.subr.mxu0 0.0
  %2981 = vmatpush1.msra.mxu0 0.0
  %2982 = vmatprep.subr.mxu0 0.0
  %2983 = vmatpush1.msra.mxu0 0.0
  %2984 = vmatprep.subr.mxu0 0.0
  %2985 = vmatpush1.msra.mxu0 0.0
  %2986 = vmatprep.subr.mxu0 0.0
  %2987 = vmatpush1.msra.mxu0 0.0
  %2988 = vmatprep.subr.mxu0 0.0
  %2989 = vmatpush1.msra.mxu0 0.0
  %2990 = vmatprep.subr.mxu0 0.0
  %2991 = vmatpush1.msra.mxu0 0.0
  %2992 = vmatprep.subr.mxu0 0.0
  %2993 = vmatpush1.msra.mxu0 0.0
  %2994 = vmatprep.subr.mxu0 0.0
  %2995 = vmatpush1.msra.mxu0 0.0
  %2996 = vmatprep.subr.mxu0 0.0
  %2997 = vmatpush1.msra.mxu0 0.0
  %2998 = vmatprep.subr.mxu0 0.0
  %2999 = vmatpush1.msra.mxu0 0.0
  %3000 = vmatprep.subr.mxu0 0.0
  %3001 = vmatpush1.msra.mxu0 0.0
  %3002 = vmatprep.subr.mxu0 0.0
  %3003 = vmatpush1.msra.mxu0 0.0
  %3004 = vmatprep.subr.mxu0 0.0
  %3005 = vmatpush1.msra.mxu0 0.0
  %3006 = vmatprep.subr.mxu0 0.0
  %3007 = vmatpush1.msra.mxu0 0.0
  %3008 = vmatprep.subr.mxu0 0.0
  %3009 = vmatpush1.msra.mxu0 0.0
  %3010 = vmatprep.subr.mxu0 0.0
  %3011 = vmatpush1.msra.mxu0 0.0
  %3012 = vmatprep.subr.mxu0 0.0
  %3013 = vmatpush1.msra.mxu0 0.0
  %3014 = vmatprep.subr.mxu0 0.0
  %3015 = vmatpush1.msra.mxu0 0.0
  %3016 = vmatprep.subr.mxu0 0.0
  %3017 = vmatpush1.msra.mxu0 0.0
  %3018 = vmatprep.subr.mxu0 0.0
  %3019 = vmatpush1.msra.mxu0 0.0
  %3020 = vmatprep.subr.mxu0 0.0
  %3021 = vmatpush1.msra.mxu0 0.0
  %3022 = vmatprep.subr.mxu0 0.0
  %3023 = vmatpush1.msra.mxu0 0.0
  %3024 = vmatprep.subr.mxu0 0.0
  %3025 = vmatpush1.msra.mxu0 0.0
  %3026 = vmatprep.subr.mxu0 0.0
  %3027 = vmatpush1.msra.mxu0 0.0
  %3028 = vmatprep.subr.mxu0 0.0
  %3029 = vmatpush1.msra.mxu0 0.0
  %3030 = vmatprep.subr.mxu0 0.0
  %3031 = vmatpush1.msra.mxu0 0.0
  %3032 = vmatprep.subr.mxu0 0.0
  %3033 = vmatpush1.msra.mxu0 0.0
  %3034 = vmatprep.subr.mxu0 0.0
  %3035 = vmatpush1.msra.mxu0 0.0
  %3036 = vmatprep.subr.mxu0 0.0
  %3037 = vmatpush1.msra.mxu0 0.0
  %3038 = vmatprep.subr.mxu0 0.0
  %3039 = vmatpush1.msra.mxu0 0.0
  %3040 = vmatprep.mubr.f32.mxu0 0.0
  %3041 = vmatmul.mubr.f32.gmra.mrb[0].mxu0 %v2818
  %v3042 = vpop.f32.mrb[0].mxu0
  %v3043 = vadd.f32 0.0, %v3042
  %v3044 = vpop.f32.mrb[0].mxu0
  %v3045 = vadd.f32 0.0, %v3044
  %3046 = vdwg.mxu0
  %3047 = vmatprep.subr.mxu0 0.0
  %3048 = vmatpush1.msra.mxu0 %v2832
  %3049 = vmatprep.subr.mxu0 0.0
  %3050 = vmatpush1.msra.mxu0 0.0
  %3051 = vmatprep.subr.mxu0 0.0
  %3052 = vmatpush1.msra.mxu0 0.0
  %3053 = vmatprep.subr.mxu0 0.0
  %3054 = vmatpush1.msra.mxu0 0.0
  %3055 = vmatprep.subr.mxu0 0.0
  %3056 = vmatpush1.msra.mxu0 0.0
  %3057 = vmatprep.subr.mxu0 0.0
  %3058 = vmatpush1.msra.mxu0 0.0
  %3059 = vmatprep.subr.mxu0 0.0
  %3060 = vmatpush1.msra.mxu0 0.0
  %3061 = vmatprep.subr.mxu0 0.0
  %3062 = vmatpush1.msra.mxu0 0.0
  %3063 = vmatprep.subr.mxu0 0.0
  %3064 = vmatpush1.msra.mxu0 0.0
  %3065 = vmatprep.subr.mxu0 0.0
  %3066 = vmatpush1.msra.mxu0 0.0
  %3067 = vmatprep.subr.mxu0 0.0
  %3068 = vmatpush1.msra.mxu0 0.0
  %3069 = vmatprep.subr.mxu0 0.0
  %3070 = vmatpush1.msra.mxu0 0.0
  %3071 = vmatprep.subr.mxu0 0.0
  %3072 = vmatpush1.msra.mxu0 0.0
  %3073 = vmatprep.subr.mxu0 0.0
  %3074 = vmatpush1.msra.mxu0 0.0
  %3075 = vmatprep.subr.mxu0 0.0
  %3076 = vmatpush1.msra.mxu0 0.0
  %3077 = vmatprep.subr.mxu0 0.0
  %3078 = vmatpush1.msra.mxu0 0.0
  %3079 = vmatprep.subr.mxu0 0.0
  %3080 = vmatpush1.msra.mxu0 0.0
  %3081 = vmatprep.subr.mxu0 0.0
  %3082 = vmatpush1.msra.mxu0 0.0
  %3083 = vmatprep.subr.mxu0 0.0
  %3084 = vmatpush1.msra.mxu0 0.0
  %3085 = vmatprep.subr.mxu0 0.0
  %3086 = vmatpush1.msra.mxu0 0.0
  %3087 = vmatprep.subr.mxu0 0.0
  %3088 = vmatpush1.msra.mxu0 0.0
  %3089 = vmatprep.subr.mxu0 0.0
  %3090 = vmatpush1.msra.mxu0 0.0
  %3091 = vmatprep.subr.mxu0 0.0
  %3092 = vmatpush1.msra.mxu0 0.0
  %3093 = vmatprep.subr.mxu0 0.0
  %3094 = vmatpush1.msra.mxu0 0.0
  %3095 = vmatprep.subr.mxu0 0.0
  %3096 = vmatpush1.msra.mxu0 0.0
  %3097 = vmatprep.subr.mxu0 0.0
  %3098 = vmatpush1.msra.mxu0 0.0
  %3099 = vmatprep.subr.mxu0 0.0
  %3100 = vmatpush1.msra.mxu0 0.0
  %3101 = vmatprep.subr.mxu0 0.0
  %3102 = vmatpush1.msra.mxu0 0.0
  %3103 = vmatprep.subr.mxu0 0.0
  %3104 = vmatpush1.msra.mxu0 0.0
  %3105 = vmatprep.subr.mxu0 0.0
  %3106 = vmatpush1.msra.mxu0 0.0
  %3107 = vmatprep.subr.mxu0 0.0
  %3108 = vmatpush1.msra.mxu0 0.0
  %3109 = vmatprep.subr.mxu0 0.0
  %3110 = vmatpush1.msra.mxu0 0.0
  %3111 = vmatprep.mubr.f32.mxu0 0.0
  %3112 = vmatmul.mubr.f32.gmra.mrb[0].mxu0 %v2818
  %v3113 = vpop.f32.mrb[0].mxu0
  %v3114 = vadd.f32 0.0, %v3113
  %v3115 = vpop.f32.mrb[0].mxu0
  %3116 = vdwg.mxu0
  %v3117 = vadd.f32 %v2784, %v2901
  %v3118 = vadd.f32 %v2785, %v2903
  %v3119 = vadd.f32 %v2786, %v2972
  %v3120 = vadd.f32 %v2787, %v2974
  %v3121 = vadd.f32 %v2788, %v3043
  %v3122 = vadd.f32 %v2789, %v3045
  %v3123 = vadd.f32 %v2790, %v3114
  %s3124 = scalar_lea.vmem %s3, 32
  %v3125 = vld [vmem:[%s3124] sm:$0xf]
  %3126 = vrot.lane.b32.xlu0 %v482, 44
  %v3127 = vpop.permute.xlu0 %3126
  %3128 = vrot.lane.b32.xlu0 %v483, 44
  %v3129 = vpop.permute.xlu0 %3128
  %3130 = vrot.lane.b32.xlu0 %v484, 44
  %v3131 = vpop.permute.xlu0 %3130
  %3132 = vrot.lane.b32.xlu0 %v485, 44
  %v3133 = vpop.permute.xlu0 %3132
  %3134 = vrot.lane.b32.xlu0 %v486, 44
  %v3135 = vpop.permute.xlu0 %3134
  %3136 = vrot.lane.b32.xlu0 %v487, 44
  %v3137 = vpop.permute.xlu0 %3136
  %3138 = vrot.lane.b32.xlu0 %v488, 44
  %v3139 = vpop.permute.xlu0 %3138
  %3140 = vrot.lane.b32.xlu0 %v489, 44
  %v3141 = vpop.permute.xlu0 %3140
  %vm3142 = vcmask 359424
  %v3143 = vsel %vm3142, %v3127, %v3129
  %v3144 = vsel %vm3142, %v3129, %v3131
  %v3145 = vsel %vm3142, %v3131, %v3133
  %v3146 = vsel %vm3142, %v3133, %v3135
  %v3147 = vsel %vm3142, %v3135, %v3137
  %v3148 = vsel %vm3142, %v3137, %v3139
  %v3149 = vsel %vm3142, %v3139, %v3141
  %v3151 = vsel %vm525, %v3125, 0
  %v3153 = vsel %vm385, %v3143, 0
  %v3155 = vsel %vm385, %v3144, 0
  %v3157 = vsel %vm385, %v3145, 0
  %v3159 = vsel %vm385, %v3146, 0
  %v3161 = vsel %vm385, %v3147, 0
  %v3163 = vsel %vm385, %v3148, 0
  %v3165 = vsel %vm385, %v3149, 0
  %3167 = vmatprep.subr.mxu0 %v3155
  %3168 = vmatpush1.msra.mxu0 %v3153
  %3169 = vmatprep.subr.mxu0 0.0
  %3170 = vmatpush1.msra.mxu0 0.0
  %3171 = vmatprep.subr.mxu0 0.0
  %3172 = vmatpush1.msra.mxu0 0.0
  %3173 = vmatprep.subr.mxu0 0.0
  %3174 = vmatpush1.msra.mxu0 0.0
  %3175 = vmatprep.subr.mxu0 0.0
  %3176 = vmatpush1.msra.mxu0 0.0
  %3177 = vmatprep.subr.mxu0 0.0
  %3178 = vmatpush1.msra.mxu0 0.0
  %3179 = vmatprep.subr.mxu0 0.0
  %3180 = vmatpush1.msra.mxu0 0.0
  %3181 = vmatprep.subr.mxu0 0.0
  %3182 = vmatpush1.msra.mxu0 0.0
  %3183 = vmatprep.subr.mxu0 0.0
  %3184 = vmatpush1.msra.mxu0 0.0
  %3185 = vmatprep.subr.mxu0 0.0
  %3186 = vmatpush1.msra.mxu0 0.0
  %3187 = vmatprep.subr.mxu0 0.0
  %3188 = vmatpush1.msra.mxu0 0.0
  %3189 = vmatprep.subr.mxu0 0.0
  %3190 = vmatpush1.msra.mxu0 0.0
  %3191 = vmatprep.subr.mxu0 0.0
  %3192 = vmatpush1.msra.mxu0 0.0
  %3193 = vmatprep.subr.mxu0 0.0
  %3194 = vmatpush1.msra.mxu0 0.0
  %3195 = vmatprep.subr.mxu0 0.0
  %3196 = vmatpush1.msra.mxu0 0.0
  %3197 = vmatprep.subr.mxu0 0.0
  %3198 = vmatpush1.msra.mxu0 0.0
  %3199 = vmatprep.subr.mxu0 0.0
  %3200 = vmatpush1.msra.mxu0 0.0
  %3201 = vmatprep.subr.mxu0 0.0
  %3202 = vmatpush1.msra.mxu0 0.0
  %3203 = vmatprep.subr.mxu0 0.0
  %3204 = vmatpush1.msra.mxu0 0.0
  %3205 = vmatprep.subr.mxu0 0.0
  %3206 = vmatpush1.msra.mxu0 0.0
  %3207 = vmatprep.subr.mxu0 0.0
  %3208 = vmatpush1.msra.mxu0 0.0
  %3209 = vmatprep.subr.mxu0 0.0
  %3210 = vmatpush1.msra.mxu0 0.0
  %3211 = vmatprep.subr.mxu0 0.0
  %3212 = vmatpush1.msra.mxu0 0.0
  %3213 = vmatprep.subr.mxu0 0.0
  %3214 = vmatpush1.msra.mxu0 0.0
  %3215 = vmatprep.subr.mxu0 0.0
  %3216 = vmatpush1.msra.mxu0 0.0
  %3217 = vmatprep.subr.mxu0 0.0
  %3218 = vmatpush1.msra.mxu0 0.0
  %3219 = vmatprep.subr.mxu0 0.0
  %3220 = vmatpush1.msra.mxu0 0.0
  %3221 = vmatprep.subr.mxu0 0.0
  %3222 = vmatpush1.msra.mxu0 0.0
  %3223 = vmatprep.subr.mxu0 0.0
  %3224 = vmatpush1.msra.mxu0 0.0
  %3225 = vmatprep.subr.mxu0 0.0
  %3226 = vmatpush1.msra.mxu0 0.0
  %3227 = vmatprep.subr.mxu0 0.0
  %3228 = vmatpush1.msra.mxu0 0.0
  %3229 = vmatprep.subr.mxu0 0.0
  %3230 = vmatpush1.msra.mxu0 0.0
  %3231 = vmatprep.mubr.f32.mxu0 0.0
  %3232 = vmatmul.mubr.f32.gmra.mrb[0].mxu0 %v3151
  %v3233 = vpop.f32.mrb[0].mxu0
  %v3234 = vadd.f32 0.0, %v3233
  %v3235 = vpop.f32.mrb[0].mxu0
  %v3236 = vadd.f32 0.0, %v3235
  %3237 = vdwg.mxu0
  %3238 = vmatprep.subr.mxu0 %v3159
  %3239 = vmatpush1.msra.mxu0 %v3157
  %3240 = vmatprep.subr.mxu0 0.0
  %3241 = vmatpush1.msra.mxu0 0.0
  %3242 = vmatprep.subr.mxu0 0.0
  %3243 = vmatpush1.msra.mxu0 0.0
  %3244 = vmatprep.subr.mxu0 0.0
  %3245 = vmatpush1.msra.mxu0 0.0
  %3246 = vmatprep.subr.mxu0 0.0
  %3247 = vmatpush1.msra.mxu0 0.0
  %3248 = vmatprep.subr.mxu0 0.0
  %3249 = vmatpush1.msra.mxu0 0.0
  %3250 = vmatprep.subr.mxu0 0.0
  %3251 = vmatpush1.msra.mxu0 0.0
  %3252 = vmatprep.subr.mxu0 0.0
  %3253 = vmatpush1.msra.mxu0 0.0
  %3254 = vmatprep.subr.mxu0 0.0
  %3255 = vmatpush1.msra.mxu0 0.0
  %3256 = vmatprep.subr.mxu0 0.0
  %3257 = vmatpush1.msra.mxu0 0.0
  %3258 = vmatprep.subr.mxu0 0.0
  %3259 = vmatpush1.msra.mxu0 0.0
  %3260 = vmatprep.subr.mxu0 0.0
  %3261 = vmatpush1.msra.mxu0 0.0
  %3262 = vmatprep.subr.mxu0 0.0
  %3263 = vmatpush1.msra.mxu0 0.0
  %3264 = vmatprep.subr.mxu0 0.0
  %3265 = vmatpush1.msra.mxu0 0.0
  %3266 = vmatprep.subr.mxu0 0.0
  %3267 = vmatpush1.msra.mxu0 0.0
  %3268 = vmatprep.subr.mxu0 0.0
  %3269 = vmatpush1.msra.mxu0 0.0
  %3270 = vmatprep.subr.mxu0 0.0
  %3271 = vmatpush1.msra.mxu0 0.0
  %3272 = vmatprep.subr.mxu0 0.0
  %3273 = vmatpush1.msra.mxu0 0.0
  %3274 = vmatprep.subr.mxu0 0.0
  %3275 = vmatpush1.msra.mxu0 0.0
  %3276 = vmatprep.subr.mxu0 0.0
  %3277 = vmatpush1.msra.mxu0 0.0
  %3278 = vmatprep.subr.mxu0 0.0
  %3279 = vmatpush1.msra.mxu0 0.0
  %3280 = vmatprep.subr.mxu0 0.0
  %3281 = vmatpush1.msra.mxu0 0.0
  %3282 = vmatprep.subr.mxu0 0.0
  %3283 = vmatpush1.msra.mxu0 0.0
  %3284 = vmatprep.subr.mxu0 0.0
  %3285 = vmatpush1.msra.mxu0 0.0
  %3286 = vmatprep.subr.mxu0 0.0
  %3287 = vmatpush1.msra.mxu0 0.0
  %3288 = vmatprep.subr.mxu0 0.0
  %3289 = vmatpush1.msra.mxu0 0.0
  %3290 = vmatprep.subr.mxu0 0.0
  %3291 = vmatpush1.msra.mxu0 0.0
  %3292 = vmatprep.subr.mxu0 0.0
  %3293 = vmatpush1.msra.mxu0 0.0
  %3294 = vmatprep.subr.mxu0 0.0
  %3295 = vmatpush1.msra.mxu0 0.0
  %3296 = vmatprep.subr.mxu0 0.0
  %3297 = vmatpush1.msra.mxu0 0.0
  %3298 = vmatprep.subr.mxu0 0.0
  %3299 = vmatpush1.msra.mxu0 0.0
  %3300 = vmatprep.subr.mxu0 0.0
  %3301 = vmatpush1.msra.mxu0 0.0
  %3302 = vmatprep.mubr.f32.mxu0 0.0
  %3303 = vmatmul.mubr.f32.gmra.mrb[0].mxu0 %v3151
  %v3304 = vpop.f32.mrb[0].mxu0
  %v3305 = vadd.f32 0.0, %v3304
  %v3306 = vpop.f32.mrb[0].mxu0
  %v3307 = vadd.f32 0.0, %v3306
  %3308 = vdwg.mxu0
  %3309 = vmatprep.subr.mxu0 %v3163
  %3310 = vmatpush1.msra.mxu0 %v3161
  %3311 = vmatprep.subr.mxu0 0.0
  %3312 = vmatpush1.msra.mxu0 0.0
  %3313 = vmatprep.subr.mxu0 0.0
  %3314 = vmatpush1.msra.mxu0 0.0
  %3315 = vmatprep.subr.mxu0 0.0
  %3316 = vmatpush1.msra.mxu0 0.0
  %3317 = vmatprep.subr.mxu0 0.0
  %3318 = vmatpush1.msra.mxu0 0.0
  %3319 = vmatprep.subr.mxu0 0.0
  %3320 = vmatpush1.msra.mxu0 0.0
  %3321 = vmatprep.subr.mxu0 0.0
  %3322 = vmatpush1.msra.mxu0 0.0
  %3323 = vmatprep.subr.mxu0 0.0
  %3324 = vmatpush1.msra.mxu0 0.0
  %3325 = vmatprep.subr.mxu0 0.0
  %3326 = vmatpush1.msra.mxu0 0.0
  %3327 = vmatprep.subr.mxu0 0.0
  %3328 = vmatpush1.msra.mxu0 0.0
  %3329 = vmatprep.subr.mxu0 0.0
  %3330 = vmatpush1.msra.mxu0 0.0
  %3331 = vmatprep.subr.mxu0 0.0
  %3332 = vmatpush1.msra.mxu0 0.0
  %3333 = vmatprep.subr.mxu0 0.0
  %3334 = vmatpush1.msra.mxu0 0.0
  %3335 = vmatprep.subr.mxu0 0.0
  %3336 = vmatpush1.msra.mxu0 0.0
  %3337 = vmatprep.subr.mxu0 0.0
  %3338 = vmatpush1.msra.mxu0 0.0
  %3339 = vmatprep.subr.mxu0 0.0
  %3340 = vmatpush1.msra.mxu0 0.0
  %3341 = vmatprep.subr.mxu0 0.0
  %3342 = vmatpush1.msra.mxu0 0.0
  %3343 = vmatprep.subr.mxu0 0.0
  %3344 = vmatpush1.msra.mxu0 0.0
  %3345 = vmatprep.subr.mxu0 0.0
  %3346 = vmatpush1.msra.mxu0 0.0
  %3347 = vmatprep.subr.mxu0 0.0
  %3348 = vmatpush1.msra.mxu0 0.0
  %3349 = vmatprep.subr.mxu0 0.0
  %3350 = vmatpush1.msra.mxu0 0.0
  %3351 = vmatprep.subr.mxu0 0.0
  %3352 = vmatpush1.msra.mxu0 0.0
  %3353 = vmatprep.subr.mxu0 0.0
  %3354 = vmatpush1.msra.mxu0 0.0
  %3355 = vmatprep.subr.mxu0 0.0
  %3356 = vmatpush1.msra.mxu0 0.0
  %3357 = vmatprep.subr.mxu0 0.0
  %3358 = vmatpush1.msra.mxu0 0.0
  %3359 = vmatprep.subr.mxu0 0.0
  %3360 = vmatpush1.msra.mxu0 0.0
  %3361 = vmatprep.subr.mxu0 0.0
  %3362 = vmatpush1.msra.mxu0 0.0
  %3363 = vmatprep.subr.mxu0 0.0
  %3364 = vmatpush1.msra.mxu0 0.0
  %3365 = vmatprep.subr.mxu0 0.0
  %3366 = vmatpush1.msra.mxu0 0.0
  %3367 = vmatprep.subr.mxu0 0.0
  %3368 = vmatpush1.msra.mxu0 0.0
  %3369 = vmatprep.subr.mxu0 0.0
  %3370 = vmatpush1.msra.mxu0 0.0
  %3371 = vmatprep.subr.mxu0 0.0
  %3372 = vmatpush1.msra.mxu0 0.0
  %3373 = vmatprep.mubr.f32.mxu0 0.0
  %3374 = vmatmul.mubr.f32.gmra.mrb[0].mxu0 %v3151
  %v3375 = vpop.f32.mrb[0].mxu0
  %v3376 = vadd.f32 0.0, %v3375
  %v3377 = vpop.f32.mrb[0].mxu0
  %v3378 = vadd.f32 0.0, %v3377
  %3379 = vdwg.mxu0
  %3380 = vmatprep.subr.mxu0 0.0
  %3381 = vmatpush1.msra.mxu0 %v3165
  %3382 = vmatprep.subr.mxu0 0.0
  %3383 = vmatpush1.msra.mxu0 0.0
  %3384 = vmatprep.subr.mxu0 0.0
  %3385 = vmatpush1.msra.mxu0 0.0
  %3386 = vmatprep.subr.mxu0 0.0
  %3387 = vmatpush1.msra.mxu0 0.0
  %3388 = vmatprep.subr.mxu0 0.0
  %3389 = vmatpush1.msra.mxu0 0.0
  %3390 = vmatprep.subr.mxu0 0.0
  %3391 = vmatpush1.msra.mxu0 0.0
  %3392 = vmatprep.subr.mxu0 0.0
  %3393 = vmatpush1.msra.mxu0 0.0
  %3394 = vmatprep.subr.mxu0 0.0
  %3395 = vmatpush1.msra.mxu0 0.0
  %3396 = vmatprep.subr.mxu0 0.0
  %3397 = vmatpush1.msra.mxu0 0.0
  %3398 = vmatprep.subr.mxu0 0.0
  %3399 = vmatpush1.msra.mxu0 0.0
  %3400 = vmatprep.subr.mxu0 0.0
  %3401 = vmatpush1.msra.mxu0 0.0
  %3402 = vmatprep.subr.mxu0 0.0
  %3403 = vmatpush1.msra.mxu0 0.0
  %3404 = vmatprep.subr.mxu0 0.0
  %3405 = vmatpush1.msra.mxu0 0.0
  %3406 = vmatprep.subr.mxu0 0.0
  %3407 = vmatpush1.msra.mxu0 0.0
  %3408 = vmatprep.subr.mxu0 0.0
  %3409 = vmatpush1.msra.mxu0 0.0
  %3410 = vmatprep.subr.mxu0 0.0
  %3411 = vmatpush1.msra.mxu0 0.0
  %3412 = vmatprep.subr.mxu0 0.0
  %3413 = vmatpush1.msra.mxu0 0.0
  %3414 = vmatprep.subr.mxu0 0.0
  %3415 = vmatpush1.msra.mxu0 0.0
  %3416 = vmatprep.subr.mxu0 0.0
  %3417 = vmatpush1.msra.mxu0 0.0
  %3418 = vmatprep.subr.mxu0 0.0
  %3419 = vmatpush1.msra.mxu0 0.0
  %3420 = vmatprep.subr.mxu0 0.0
  %3421 = vmatpush1.msra.mxu0 0.0
  %3422 = vmatprep.subr.mxu0 0.0
  %3423 = vmatpush1.msra.mxu0 0.0
  %3424 = vmatprep.subr.mxu0 0.0
  %3425 = vmatpush1.msra.mxu0 0.0
  %3426 = vmatprep.subr.mxu0 0.0
  %3427 = vmatpush1.msra.mxu0 0.0
  %3428 = vmatprep.subr.mxu0 0.0
  %3429 = vmatpush1.msra.mxu0 0.0
  %3430 = vmatprep.subr.mxu0 0.0
  %3431 = vmatpush1.msra.mxu0 0.0
  %3432 = vmatprep.subr.mxu0 0.0
  %3433 = vmatpush1.msra.mxu0 0.0
  %3434 = vmatprep.subr.mxu0 0.0
  %3435 = vmatpush1.msra.mxu0 0.0
  %3436 = vmatprep.subr.mxu0 0.0
  %3437 = vmatpush1.msra.mxu0 0.0
  %3438 = vmatprep.subr.mxu0 0.0
  %3439 = vmatpush1.msra.mxu0 0.0
  %3440 = vmatprep.subr.mxu0 0.0
  %3441 = vmatpush1.msra.mxu0 0.0
  %3442 = vmatprep.subr.mxu0 0.0
  %3443 = vmatpush1.msra.mxu0 0.0
  %3444 = vmatprep.mubr.f32.mxu0 0.0
  %3445 = vmatmul.mubr.f32.gmra.mrb[0].mxu0 %v3151
  %v3446 = vpop.f32.mrb[0].mxu0
  %v3447 = vadd.f32 0.0, %v3446
  %v3448 = vpop.f32.mrb[0].mxu0
  %3449 = vdwg.mxu0
  %v3450 = vadd.f32 %v3117, %v3234
  %v3451 = vadd.f32 %v3118, %v3236
  %v3452 = vadd.f32 %v3119, %v3305
  %v3453 = vadd.f32 %v3120, %v3307
  %v3454 = vadd.f32 %v3121, %v3376
  %v3455 = vadd.f32 %v3122, %v3378
  %v3456 = vadd.f32 %v3123, %v3447
  %3457 = vrot.lane.b32.xlu0 %v340, 86
  %v3458 = vpop.permute.xlu0 %3457
  %3459 = vrot.lane.b32.xlu0 %v344, 86
  %v3460 = vpop.permute.xlu0 %3459
  %3461 = vrot.lane.b32.xlu0 %v348, 86
  %v3462 = vpop.permute.xlu0 %3461
  %3463 = vrot.lane.b32.xlu0 %v352, 86
  %v3464 = vpop.permute.xlu0 %3463
  %3465 = vrot.lane.b32.xlu0 %v356, 86
  %v3466 = vpop.permute.xlu0 %3465
  %3467 = vrot.lane.b32.xlu0 %v360, 86
  %v3468 = vpop.permute.xlu0 %3467
  %3469 = vrot.lane.b32.xlu0 %v364, 86
  %v3470 = vpop.permute.xlu0 %3469
  %3471 = vrot.lane.b32.xlu0 %v368, 86
  %v3472 = vpop.permute.xlu0 %3471
  %v3473 = vsel %vm1810, %v3458, %v3460
  %v3474 = vsel %vm1810, %v3460, %v3462
  %v3475 = vsel %vm1810, %v3462, %v3464
  %v3476 = vsel %vm1810, %v3464, %v3466
  %v3477 = vsel %vm1810, %v3466, %v3468
  %v3478 = vsel %vm1810, %v3468, %v3470
  %v3479 = vsel %vm1810, %v3470, %v3472
  %v3487 = vmul.f32 %v3450, %v3473
  %v3488 = vmul.f32 %v3451, %v3474
  %v3489 = vmul.f32 %v3452, %v3475
  %v3490 = vmul.f32 %v3453, %v3476
  %v3491 = vmul.f32 %v3454, %v3477
  %v3492 = vmul.f32 %v3455, %v3478
  %v3493 = vmul.f32 %v3456, %v3479
  %v3494 = vsel %vm385, %v3487, 0.0
  %v3495 = vsel %vm385, %v3488, 0.0
  %v3496 = vadd.f32 %v3494, %v3495
  %v3497 = vsel %vm385, %v3489, 0.0
  %v3498 = vadd.f32 %v3496, %v3497
  %v3499 = vsel %vm385, %v3490, 0.0
  %v3500 = vadd.f32 %v3498, %v3499
  %v3501 = vsel %vm385, %v3491, 0.0
  %v3502 = vadd.f32 %v3500, %v3501
  %v3503 = vsel %vm385, %v3492, 0.0
  %v3504 = vadd.f32 %v3502, %v3503
  %v3505 = vsel %vm385, %v3493, 0.0
  %v3506 = vadd.f32 %v3504, %v3505
  %3507 = vadd.xlane.f32.xlu0 %v3506
  %v3508 = vpop.xlane.xlu0 %3507
  %v3509 = vmul.f32 %v3450, %v3450
  %v3510 = vmul.f32 %v3451, %v3451
  %v3511 = vmul.f32 %v3452, %v3452
  %v3512 = vmul.f32 %v3453, %v3453
  %v3513 = vmul.f32 %v3454, %v3454
  %v3514 = vmul.f32 %v3455, %v3455
  %v3515 = vmul.f32 %v3456, %v3456
  %v3516 = vmul.f32 %v3509, %v3473
  %v3517 = vmul.f32 %v3510, %v3474
  %v3518 = vmul.f32 %v3511, %v3475
  %v3519 = vmul.f32 %v3512, %v3476
  %v3520 = vmul.f32 %v3513, %v3477
  %v3521 = vmul.f32 %v3514, %v3478
  %v3522 = vmul.f32 %v3515, %v3479
  %v3523 = vsel %vm385, %v3516, 0.0
  %v3524 = vsel %vm385, %v3517, 0.0
  %v3525 = vadd.f32 %v3523, %v3524
  %v3526 = vsel %vm385, %v3518, 0.0
  %v3527 = vadd.f32 %v3525, %v3526
  %v3528 = vsel %vm385, %v3519, 0.0
  %v3529 = vadd.f32 %v3527, %v3528
  %v3530 = vsel %vm385, %v3520, 0.0
  %v3531 = vadd.f32 %v3529, %v3530
  %v3532 = vsel %vm385, %v3521, 0.0
  %v3533 = vadd.f32 %v3531, %v3532
  %v3534 = vsel %vm385, %v3522, 0.0
  %v3535 = vadd.f32 %v3533, %v3534
  %3536 = vadd.xlane.f32.xlu0 %v3535
  %v3537 = vpop.xlane.xlu0 %3536
  %v3538 = vmul.f32 %v3508, 0.001953125
  %v3539 = vmul.f32 %v3537, 0.001953125
  %v3540 = vmul.f32 %v3538, %v3538
  %v3541 = vsub.f32 %v3539, %v3540
  %v3542 = vmax.f32 %v3541, 0.0
  %v3543 = vld [vmem:[%s7] sm:$0xf]
  %v3544 = vadd.f32 %v3542, 1e-05
  %v3545 = vrsqrt.pop %v3544
  %v3546 = vmul.f32 %v3543, %v3545
  %v3547 = vld [vmem:[%s8] sm:$0xf]
  %v3548 = vmul.f32 %v3538, %v3546
  %v3549 = vsub.f32 %v3547, %v3548
  %3551 = vset.pattern.permute.xlu0 0
  %3552 = vperm.xlu0 %3551, %v3546
  %v3553 = vpop.permute.xlu0 %3552
  %v3555 = vmul.f32 %v3450, %v3553
  %v3556 = vmul.f32 %v3451, %v3553
  %v3557 = vmul.f32 %v3452, %v3553
  %v3558 = vmul.f32 %v3453, %v3553
  %v3559 = vmul.f32 %v3454, %v3553
  %v3560 = vmul.f32 %v3455, %v3553
  %v3561 = vmul.f32 %v3456, %v3553
  %3563 = vset.pattern.permute.xlu0 0
  %3564 = vperm.xlu0 %3563, %v3549
  %v3565 = vpop.permute.xlu0 %3564
  %v3567 = vadd.f32 %v3555, %v3565
  %v3568 = vadd.f32 %v3556, %v3565
  %v3569 = vadd.f32 %v3557, %v3565
  %v3570 = vadd.f32 %v3558, %v3565
  %v3571 = vadd.f32 %v3559, %v3565
  %v3572 = vadd.f32 %v3560, %v3565
  %v3573 = vadd.f32 %v3561, %v3565
  %v3574 = vmax.f32 %v3567, 0.0
  %v3575 = vmax.f32 %v3568, 0.0
  %v3576 = vmax.f32 %v3569, 0.0
  %v3577 = vmax.f32 %v3570, 0.0
  %v3578 = vmax.f32 %v3571, 0.0
  %v3579 = vmax.f32 %v3572, 0.0
  %v3580 = vmax.f32 %v3573, 0.0
  %v3581 = vmul.f32 %v3574, %v3473
  %v3582 = vmul.f32 %v3575, %v3474
  %v3583 = vmul.f32 %v3576, %v3475
  %v3584 = vmul.f32 %v3577, %v3476
  %v3585 = vmul.f32 %v3578, %v3477
  %v3586 = vmul.f32 %v3579, %v3478
  %v3587 = vmul.f32 %v3580, %v3479
  %v3588 = vld [vmem:[%s4] sm:$0xff]
  %v3590 = vsel %vm525, %v3588, 0
  %v3593 = vsel %vm385, %v3581, 0
  %v3596 = vsel %vm385, %v3582, 0
  %v3599 = vsel %vm385, %v3583, 0
  %v3602 = vsel %vm385, %v3584, 0
  %v3605 = vsel %vm385, %v3585, 0
  %v3608 = vsel %vm385, %v3586, 0
  %v3611 = vsel %vm385, %v3587, 0
  %3613 = vmatprep.subr.mxu0 %v3596
  %3614 = vmatpush1.msra.mxu0 %v3593
  %3615 = vmatprep.subr.mxu0 0.0
  %3616 = vmatpush1.msra.mxu0 0.0
  %3617 = vmatprep.subr.mxu0 0.0
  %3618 = vmatpush1.msra.mxu0 0.0
  %3619 = vmatprep.subr.mxu0 0.0
  %3620 = vmatpush1.msra.mxu0 0.0
  %3621 = vmatprep.subr.mxu0 0.0
  %3622 = vmatpush1.msra.mxu0 0.0
  %3623 = vmatprep.subr.mxu0 0.0
  %3624 = vmatpush1.msra.mxu0 0.0
  %3625 = vmatprep.subr.mxu0 0.0
  %3626 = vmatpush1.msra.mxu0 0.0
  %3627 = vmatprep.subr.mxu0 0.0
  %3628 = vmatpush1.msra.mxu0 0.0
  %3629 = vmatprep.subr.mxu0 0.0
  %3630 = vmatpush1.msra.mxu0 0.0
  %3631 = vmatprep.subr.mxu0 0.0
  %3632 = vmatpush1.msra.mxu0 0.0
  %3633 = vmatprep.subr.mxu0 0.0
  %3634 = vmatpush1.msra.mxu0 0.0
  %3635 = vmatprep.subr.mxu0 0.0
  %3636 = vmatpush1.msra.mxu0 0.0
  %3637 = vmatprep.subr.mxu0 0.0
  %3638 = vmatpush1.msra.mxu0 0.0
  %3639 = vmatprep.subr.mxu0 0.0
  %3640 = vmatpush1.msra.mxu0 0.0
  %3641 = vmatprep.subr.mxu0 0.0
  %3642 = vmatpush1.msra.mxu0 0.0
  %3643 = vmatprep.subr.mxu0 0.0
  %3644 = vmatpush1.msra.mxu0 0.0
  %3645 = vmatprep.subr.mxu0 0.0
  %3646 = vmatpush1.msra.mxu0 0.0
  %3647 = vmatprep.subr.mxu0 0.0
  %3648 = vmatpush1.msra.mxu0 0.0
  %3649 = vmatprep.subr.mxu0 0.0
  %3650 = vmatpush1.msra.mxu0 0.0
  %3651 = vmatprep.subr.mxu0 0.0
  %3652 = vmatpush1.msra.mxu0 0.0
  %3653 = vmatprep.subr.mxu0 0.0
  %3654 = vmatpush1.msra.mxu0 0.0
  %3655 = vmatprep.subr.mxu0 0.0
  %3656 = vmatpush1.msra.mxu0 0.0
  %3657 = vmatprep.subr.mxu0 0.0
  %3658 = vmatpush1.msra.mxu0 0.0
  %3659 = vmatprep.subr.mxu0 0.0
  %3660 = vmatpush1.msra.mxu0 0.0
  %3661 = vmatprep.subr.mxu0 0.0
  %3662 = vmatpush1.msra.mxu0 0.0
  %3663 = vmatprep.subr.mxu0 0.0
  %3664 = vmatpush1.msra.mxu0 0.0
  %3665 = vmatprep.subr.mxu0 0.0
  %3666 = vmatpush1.msra.mxu0 0.0
  %3667 = vmatprep.subr.mxu0 0.0
  %3668 = vmatpush1.msra.mxu0 0.0
  %3669 = vmatprep.subr.mxu0 0.0
  %3670 = vmatpush1.msra.mxu0 0.0
  %3671 = vmatprep.subr.mxu0 0.0
  %3672 = vmatpush1.msra.mxu0 0.0
  %3673 = vmatprep.subr.mxu0 0.0
  %3674 = vmatpush1.msra.mxu0 0.0
  %3675 = vmatprep.subr.mxu0 0.0
  %3676 = vmatpush1.msra.mxu0 0.0
  %3677 = vmatprep.mubr.f32.mxu0 0.0
  %3678 = vmatmul.mubr.f32.gmra.mrb[0].mxu0 %v3590
  %v3679 = vpop.f32.mrb[0].mxu0
  %v3680 = vadd.f32 0.0, %v3679
  %v3681 = vpop.f32.mrb[0].mxu0
  %v3682 = vadd.f32 0.0, %v3681
  %3683 = vdwg.mxu0
  %3684 = vmatprep.subr.mxu0 %v3602
  %3685 = vmatpush1.msra.mxu0 %v3599
  %3686 = vmatprep.subr.mxu0 0.0
  %3687 = vmatpush1.msra.mxu0 0.0
  %3688 = vmatprep.subr.mxu0 0.0
  %3689 = vmatpush1.msra.mxu0 0.0
  %3690 = vmatprep.subr.mxu0 0.0
  %3691 = vmatpush1.msra.mxu0 0.0
  %3692 = vmatprep.subr.mxu0 0.0
  %3693 = vmatpush1.msra.mxu0 0.0
  %3694 = vmatprep.subr.mxu0 0.0
  %3695 = vmatpush1.msra.mxu0 0.0
  %3696 = vmatprep.subr.mxu0 0.0
  %3697 = vmatpush1.msra.mxu0 0.0
  %3698 = vmatprep.subr.mxu0 0.0
  %3699 = vmatpush1.msra.mxu0 0.0
  %3700 = vmatprep.subr.mxu0 0.0
  %3701 = vmatpush1.msra.mxu0 0.0
  %3702 = vmatprep.subr.mxu0 0.0
  %3703 = vmatpush1.msra.mxu0 0.0
  %3704 = vmatprep.subr.mxu0 0.0
  %3705 = vmatpush1.msra.mxu0 0.0
  %3706 = vmatprep.subr.mxu0 0.0
  %3707 = vmatpush1.msra.mxu0 0.0
  %3708 = vmatprep.subr.mxu0 0.0
  %3709 = vmatpush1.msra.mxu0 0.0
  %3710 = vmatprep.subr.mxu0 0.0
  %3711 = vmatpush1.msra.mxu0 0.0
  %3712 = vmatprep.subr.mxu0 0.0
  %3713 = vmatpush1.msra.mxu0 0.0
  %3714 = vmatprep.subr.mxu0 0.0
  %3715 = vmatpush1.msra.mxu0 0.0
  %3716 = vmatprep.subr.mxu0 0.0
  %3717 = vmatpush1.msra.mxu0 0.0
  %3718 = vmatprep.subr.mxu0 0.0
  %3719 = vmatpush1.msra.mxu0 0.0
  %3720 = vmatprep.subr.mxu0 0.0
  %3721 = vmatpush1.msra.mxu0 0.0
  %3722 = vmatprep.subr.mxu0 0.0
  %3723 = vmatpush1.msra.mxu0 0.0
  %3724 = vmatprep.subr.mxu0 0.0
  %3725 = vmatpush1.msra.mxu0 0.0
  %3726 = vmatprep.subr.mxu0 0.0
  %3727 = vmatpush1.msra.mxu0 0.0
  %3728 = vmatprep.subr.mxu0 0.0
  %3729 = vmatpush1.msra.mxu0 0.0
  %3730 = vmatprep.subr.mxu0 0.0
  %3731 = vmatpush1.msra.mxu0 0.0
  %3732 = vmatprep.subr.mxu0 0.0
  %3733 = vmatpush1.msra.mxu0 0.0
  %3734 = vmatprep.subr.mxu0 0.0
  %3735 = vmatpush1.msra.mxu0 0.0
  %3736 = vmatprep.subr.mxu0 0.0
  %3737 = vmatpush1.msra.mxu0 0.0
  %3738 = vmatprep.subr.mxu0 0.0
  %3739 = vmatpush1.msra.mxu0 0.0
  %3740 = vmatprep.subr.mxu0 0.0
  %3741 = vmatpush1.msra.mxu0 0.0
  %3742 = vmatprep.subr.mxu0 0.0
  %3743 = vmatpush1.msra.mxu0 0.0
  %3744 = vmatprep.subr.mxu0 0.0
  %3745 = vmatpush1.msra.mxu0 0.0
  %3746 = vmatprep.subr.mxu0 0.0
  %3747 = vmatpush1.msra.mxu0 0.0
  %3748 = vmatprep.mubr.f32.mxu0 0.0
  %3749 = vmatmul.mubr.f32.gmra.mrb[0].mxu0 %v3590
  %v3750 = vpop.f32.mrb[0].mxu0
  %v3751 = vadd.f32 0.0, %v3750
  %v3752 = vpop.f32.mrb[0].mxu0
  %v3753 = vadd.f32 0.0, %v3752
  %3754 = vdwg.mxu0
  %3755 = vmatprep.subr.mxu0 %v3608
  %3756 = vmatpush1.msra.mxu0 %v3605
  %3757 = vmatprep.subr.mxu0 0.0
  %3758 = vmatpush1.msra.mxu0 0.0
  %3759 = vmatprep.subr.mxu0 0.0
  %3760 = vmatpush1.msra.mxu0 0.0
  %3761 = vmatprep.subr.mxu0 0.0
  %3762 = vmatpush1.msra.mxu0 0.0
  %3763 = vmatprep.subr.mxu0 0.0
  %3764 = vmatpush1.msra.mxu0 0.0
  %3765 = vmatprep.subr.mxu0 0.0
  %3766 = vmatpush1.msra.mxu0 0.0
  %3767 = vmatprep.subr.mxu0 0.0
  %3768 = vmatpush1.msra.mxu0 0.0
  %3769 = vmatprep.subr.mxu0 0.0
  %3770 = vmatpush1.msra.mxu0 0.0
  %3771 = vmatprep.subr.mxu0 0.0
  %3772 = vmatpush1.msra.mxu0 0.0
  %3773 = vmatprep.subr.mxu0 0.0
  %3774 = vmatpush1.msra.mxu0 0.0
  %3775 = vmatprep.subr.mxu0 0.0
  %3776 = vmatpush1.msra.mxu0 0.0
  %3777 = vmatprep.subr.mxu0 0.0
  %3778 = vmatpush1.msra.mxu0 0.0
  %3779 = vmatprep.subr.mxu0 0.0
  %3780 = vmatpush1.msra.mxu0 0.0
  %3781 = vmatprep.subr.mxu0 0.0
  %3782 = vmatpush1.msra.mxu0 0.0
  %3783 = vmatprep.subr.mxu0 0.0
  %3784 = vmatpush1.msra.mxu0 0.0
  %3785 = vmatprep.subr.mxu0 0.0
  %3786 = vmatpush1.msra.mxu0 0.0
  %3787 = vmatprep.subr.mxu0 0.0
  %3788 = vmatpush1.msra.mxu0 0.0
  %3789 = vmatprep.subr.mxu0 0.0
  %3790 = vmatpush1.msra.mxu0 0.0
  %3791 = vmatprep.subr.mxu0 0.0
  %3792 = vmatpush1.msra.mxu0 0.0
  %3793 = vmatprep.subr.mxu0 0.0
  %3794 = vmatpush1.msra.mxu0 0.0
  %3795 = vmatprep.subr.mxu0 0.0
  %3796 = vmatpush1.msra.mxu0 0.0
  %3797 = vmatprep.subr.mxu0 0.0
  %3798 = vmatpush1.msra.mxu0 0.0
  %3799 = vmatprep.subr.mxu0 0.0
  %3800 = vmatpush1.msra.mxu0 0.0
  %3801 = vmatprep.subr.mxu0 0.0
  %3802 = vmatpush1.msra.mxu0 0.0
  %3803 = vmatprep.subr.mxu0 0.0
  %3804 = vmatpush1.msra.mxu0 0.0
  %3805 = vmatprep.subr.mxu0 0.0
  %3806 = vmatpush1.msra.mxu0 0.0
  %3807 = vmatprep.subr.mxu0 0.0
  %3808 = vmatpush1.msra.mxu0 0.0
  %3809 = vmatprep.subr.mxu0 0.0
  %3810 = vmatpush1.msra.mxu0 0.0
  %3811 = vmatprep.subr.mxu0 0.0
  %3812 = vmatpush1.msra.mxu0 0.0
  %3813 = vmatprep.subr.mxu0 0.0
  %3814 = vmatpush1.msra.mxu0 0.0
  %3815 = vmatprep.subr.mxu0 0.0
  %3816 = vmatpush1.msra.mxu0 0.0
  %3817 = vmatprep.subr.mxu0 0.0
  %3818 = vmatpush1.msra.mxu0 0.0
  %3819 = vmatprep.mubr.f32.mxu0 0.0
  %3820 = vmatmul.mubr.f32.gmra.mrb[0].mxu0 %v3590
  %v3821 = vpop.f32.mrb[0].mxu0
  %v3822 = vadd.f32 0.0, %v3821
  %v3823 = vpop.f32.mrb[0].mxu0
  %v3824 = vadd.f32 0.0, %v3823
  %3825 = vdwg.mxu0
  %3826 = vmatprep.subr.mxu0 0.0
  %3827 = vmatpush1.msra.mxu0 %v3611
  %3828 = vmatprep.subr.mxu0 0.0
  %3829 = vmatpush1.msra.mxu0 0.0
  %3830 = vmatprep.subr.mxu0 0.0
  %3831 = vmatpush1.msra.mxu0 0.0
  %3832 = vmatprep.subr.mxu0 0.0
  %3833 = vmatpush1.msra.mxu0 0.0
  %3834 = vmatprep.subr.mxu0 0.0
  %3835 = vmatpush1.msra.mxu0 0.0
  %3836 = vmatprep.subr.mxu0 0.0
  %3837 = vmatpush1.msra.mxu0 0.0
  %3838 = vmatprep.subr.mxu0 0.0
  %3839 = vmatpush1.msra.mxu0 0.0
  %3840 = vmatprep.subr.mxu0 0.0
  %3841 = vmatpush1.msra.mxu0 0.0
  %3842 = vmatprep.subr.mxu0 0.0
  %3843 = vmatpush1.msra.mxu0 0.0
  %3844 = vmatprep.subr.mxu0 0.0
  %3845 = vmatpush1.msra.mxu0 0.0
  %3846 = vmatprep.subr.mxu0 0.0
  %3847 = vmatpush1.msra.mxu0 0.0
  %3848 = vmatprep.subr.mxu0 0.0
  %3849 = vmatpush1.msra.mxu0 0.0
  %3850 = vmatprep.subr.mxu0 0.0
  %3851 = vmatpush1.msra.mxu0 0.0
  %3852 = vmatprep.subr.mxu0 0.0
  %3853 = vmatpush1.msra.mxu0 0.0
  %3854 = vmatprep.subr.mxu0 0.0
  %3855 = vmatpush1.msra.mxu0 0.0
  %3856 = vmatprep.subr.mxu0 0.0
  %3857 = vmatpush1.msra.mxu0 0.0
  %3858 = vmatprep.subr.mxu0 0.0
  %3859 = vmatpush1.msra.mxu0 0.0
  %3860 = vmatprep.subr.mxu0 0.0
  %3861 = vmatpush1.msra.mxu0 0.0
  %3862 = vmatprep.subr.mxu0 0.0
  %3863 = vmatpush1.msra.mxu0 0.0
  %3864 = vmatprep.subr.mxu0 0.0
  %3865 = vmatpush1.msra.mxu0 0.0
  %3866 = vmatprep.subr.mxu0 0.0
  %3867 = vmatpush1.msra.mxu0 0.0
  %3868 = vmatprep.subr.mxu0 0.0
  %3869 = vmatpush1.msra.mxu0 0.0
  %3870 = vmatprep.subr.mxu0 0.0
  %3871 = vmatpush1.msra.mxu0 0.0
  %3872 = vmatprep.subr.mxu0 0.0
  %3873 = vmatpush1.msra.mxu0 0.0
  %3874 = vmatprep.subr.mxu0 0.0
  %3875 = vmatpush1.msra.mxu0 0.0
  %3876 = vmatprep.subr.mxu0 0.0
  %3877 = vmatpush1.msra.mxu0 0.0
  %3878 = vmatprep.subr.mxu0 0.0
  %3879 = vmatpush1.msra.mxu0 0.0
  %3880 = vmatprep.subr.mxu0 0.0
  %3881 = vmatpush1.msra.mxu0 0.0
  %3882 = vmatprep.subr.mxu0 0.0
  %3883 = vmatpush1.msra.mxu0 0.0
  %3884 = vmatprep.subr.mxu0 0.0
  %3885 = vmatpush1.msra.mxu0 0.0
  %3886 = vmatprep.subr.mxu0 0.0
  %3887 = vmatpush1.msra.mxu0 0.0
  %3888 = vmatprep.subr.mxu0 0.0
  %3889 = vmatpush1.msra.mxu0 0.0
  %3890 = vmatprep.mubr.f32.mxu0 0.0
  %3891 = vmatmul.mubr.f32.gmra.mrb[0].mxu0 %v3590
  %v3892 = vpop.f32.mrb[0].mxu0
  %v3893 = vadd.f32 0.0, %v3892
  %v3894 = vpop.f32.mrb[0].mxu0
  %3895 = vdwg.mxu0
  %v3896 = vmul.f32 %v3680, %v3473
  %v3897 = vmul.f32 %v3682, %v3474
  %v3898 = vmul.f32 %v3751, %v3475
  %v3899 = vmul.f32 %v3753, %v3476
  %v3900 = vmul.f32 %v3822, %v3477
  %v3901 = vmul.f32 %v3824, %v3478
  %v3902 = vmul.f32 %v3893, %v3479
  %v3903 = vadd.f32 %v3896, %v3897
  %v3904 = vadd.f32 %v3903, %v3898
  %v3905 = vadd.f32 %v3904, %v3899
  %v3906 = vadd.f32 %v3905, %v3900
  %v3907 = vadd.f32 %v3906, %v3901
  %v3908 = vadd.f32 %v3907, %v3902
  %3909 = vadd.xlane.f32.xlu0 %v3908
  %v3910 = vpop.xlane.xlu0 %3909
  %v3911 = vmul.f32 %v3680, %v3680
  %v3912 = vmul.f32 %v3682, %v3682
  %v3913 = vmul.f32 %v3751, %v3751
  %v3914 = vmul.f32 %v3753, %v3753
  %v3915 = vmul.f32 %v3822, %v3822
  %v3916 = vmul.f32 %v3824, %v3824
  %v3917 = vmul.f32 %v3893, %v3893
  %v3918 = vmul.f32 %v3911, %v3473
  %v3919 = vmul.f32 %v3912, %v3474
  %v3920 = vmul.f32 %v3913, %v3475
  %v3921 = vmul.f32 %v3914, %v3476
  %v3922 = vmul.f32 %v3915, %v3477
  %v3923 = vmul.f32 %v3916, %v3478
  %v3924 = vmul.f32 %v3917, %v3479
  %v3925 = vadd.f32 %v3918, %v3919
  %v3926 = vadd.f32 %v3925, %v3920
  %v3927 = vadd.f32 %v3926, %v3921
  %v3928 = vadd.f32 %v3927, %v3922
  %v3929 = vadd.f32 %v3928, %v3923
  %v3930 = vadd.f32 %v3929, %v3924
  %3931 = vadd.xlane.f32.xlu0 %v3930
  %v3932 = vpop.xlane.xlu0 %3931
  %v3933 = vmul.f32 %v3910, 0.001953125
  %v3934 = vmul.f32 %v3932, 0.001953125
  %v3935 = vmul.f32 %v3933, %v3933
  %v3936 = vsub.f32 %v3934, %v3935
  %v3937 = vmax.f32 %v3936, 0.0
  %v3938 = vld [vmem:[%s9] sm:$0xff]
  %v3939 = vadd.f32 %v3937, 1e-05
  %v3940 = vrsqrt.pop %v3939
  %v3941 = vmul.f32 %v3938, %v3940
  %v3942 = vld [vmem:[%s10] sm:$0xff]
  %v3943 = vmul.f32 %v3933, %v3941
  %v3944 = vsub.f32 %v3942, %v3943
  %3946 = vset.pattern.permute.xlu0 0
  %3947 = vperm.xlu0 %3946, %v3941
  %v3948 = vpop.permute.xlu0 %3947
  %v3950 = vmul.f32 %v3680, %v3948
  %v3951 = vmul.f32 %v3682, %v3948
  %v3952 = vmul.f32 %v3751, %v3948
  %v3953 = vmul.f32 %v3753, %v3948
  %v3954 = vmul.f32 %v3822, %v3948
  %v3955 = vmul.f32 %v3824, %v3948
  %v3956 = vmul.f32 %v3893, %v3948
  %3958 = vset.pattern.permute.xlu0 0
  %3959 = vperm.xlu0 %3958, %v3944
  %v3960 = vpop.permute.xlu0 %3959
  %v3962 = vadd.f32 %v3950, %v3960
  %v3963 = vadd.f32 %v3951, %v3960
  %v3964 = vadd.f32 %v3952, %v3960
  %v3965 = vadd.f32 %v3953, %v3960
  %v3966 = vadd.f32 %v3954, %v3960
  %v3967 = vadd.f32 %v3955, %v3960
  %v3968 = vadd.f32 %v3956, %v3960
  %v3969 = vmax.f32 %v3962, 0.0
  %v3970 = vmax.f32 %v3963, 0.0
  %v3971 = vmax.f32 %v3964, 0.0
  %v3972 = vmax.f32 %v3965, 0.0
  %v3973 = vmax.f32 %v3966, 0.0
  %v3974 = vmax.f32 %v3967, 0.0
  %v3975 = vmax.f32 %v3968, 0.0
  %3984 = vrot.lane.b32.xlu0 %v38, 86
  %v3985 = vpop.permute.xlu0 %3984
  %3986 = vrot.lane.b32.xlu0 %v39, 86
  %v3987 = vpop.permute.xlu0 %3986
  %3988 = vrot.lane.b32.xlu0 %v40, 86
  %v3989 = vpop.permute.xlu0 %3988
  %3990 = vrot.lane.b32.xlu0 %v41, 86
  %v3991 = vpop.permute.xlu0 %3990
  %3992 = vrot.lane.b32.xlu0 %v42, 86
  %v3993 = vpop.permute.xlu0 %3992
  %3994 = vrot.lane.b32.xlu0 %v43, 86
  %v3995 = vpop.permute.xlu0 %3994
  %3996 = vrot.lane.b32.xlu0 %v44, 86
  %v3997 = vpop.permute.xlu0 %3996
  %3998 = vrot.lane.b32.xlu0 %v45, 86
  %v3999 = vpop.permute.xlu0 %3998
  %v4000 = vsel %vm1810, %v3985, %v3987
  %v4001 = vsel %vm1810, %v3987, %v3989
  %v4002 = vsel %vm1810, %v3989, %v3991
  %v4003 = vsel %vm1810, %v3991, %v3993
  %v4004 = vsel %vm1810, %v3993, %v3995
  %v4005 = vsel %vm1810, %v3995, %v3997
  %v4006 = vsel %vm1810, %v3997, %v3999
  %v4014 = vadd.f32 %v3969, %v4000
  %v4015 = vadd.f32 %v3970, %v4001
  %v4016 = vadd.f32 %v3971, %v4002
  %v4017 = vadd.f32 %v3972, %v4003
  %v4018 = vadd.f32 %v3973, %v4004
  %v4019 = vadd.f32 %v3974, %v4005
  %v4020 = vadd.f32 %v3975, %v4006
  %v4021 = vmax.f32 %v4014, 0.0
  %v4022 = vmax.f32 %v4015, 0.0
  %v4023 = vmax.f32 %v4016, 0.0
  %v4024 = vmax.f32 %v4017, 0.0
  %v4025 = vmax.f32 %v4018, 0.0
  %v4026 = vmax.f32 %v4019, 0.0
  %v4027 = vmax.f32 %v4020, 0.0
  %4028 = vst [vmem:[%s11] sm:$0xff] %v4021
  %4029 = vst [vmem:[%s11 + $0x8] sm:$0xff] %v4022
  %4030 = vst [vmem:[%s11 + $0x10] sm:$0xff] %v4023
  %4031 = vst [vmem:[%s11 + $0x18] sm:$0xff] %v4024
  %4032 = vst [vmem:[%s11 + $0x20] sm:$0xff] %v4025
  %4033 = vst [vmem:[%s11 + $0x28] sm:$0xff] %v4026
  %4034 = vst [vmem:[%s11 + $0x30] sm:$0xff] %v4027
  // Predicated region
  $region46: #{bottleneck_forward.1} parent=0 // pred_check
    _
  $region47: #{bottleneck_forward.1} parent=0 // pred_check_branch
    %4036 = sbr.rel (0) target = $region49
  $region48: #{bottleneck_forward.1} parent=0 // pred_region
    _
  $region49: #{bottleneck_forward.1} parent=0 // pred_fallthru
    _
  // Predicated region
  $region50: #{bottleneck_forward.1} parent=0 // pred_check
    _
  $region51: #{bottleneck_forward.1} parent=0 // pred_check_branch
    %4038 = sbr.rel (0) target = $region53
  $region52: #{bottleneck_forward.1} parent=0 // pred_region
    _
  $region53: #{bottleneck_forward.1} parent=0 // pred_fallthru
    _

</llo_original>
